<compile_context>
chip_gen: v7x
topology: tpu7x:2x2x1
jax: 0.10.0
libtpu: 0.0.40
codegen_flags: <defaults>
</compile_context>

<pallas_src>
import functools

import jax
import jax.numpy as jnp
from jax.experimental import pallas as pl
from jax.experimental.pallas import tpu as pltpu


CONV_CFG = [(8, 4), (4, 2), (3, 1), (3, 1)]   # (kernel, stride) per conv layer


def _round_up(x, m):
    return (x + m - 1) // m * m


def _cdiv(a, b):
    return -(-a // b)


def _conv_out(n, k, s):
    return (n - k) // s + 1


def _choose_tm(M, cap=512):
    """Row tile: full M when tiny; otherwise aim for >=2 grid blocks (v7x
    megacore) with a 16-row-aligned tile (bf16 sublane packing), capped."""
    if M < 32:
        return M
    return min(_round_up(_cdiv(M, 2), 16), cap)


def _vmem_limit(block_bytes):
    # double-buffering headroom + 4 MiB slack, clamped to [16 MiB, 32 MiB]
    # (32 MiB is safe on v5e/v6e (128 MiB VMEM) and v7x (64 MiB VMEM)).
    return int(min(max(2 * block_bytes + (4 << 20), 16 << 20), 32 << 20))


def _nbytes(t):
    return t.size * t.dtype.itemsize


# ----------------------------------------------------------------------------
# Pallas kernel 1: fused  out = relu?(x @ w + b)   (bf16 MXU, f32 epilogue)
# ----------------------------------------------------------------------------
def _linear_kernel(x_ref, w_ref, b_ref, o_ref, *, relu):
    acc = jnp.dot(x_ref[...], w_ref[...], preferred_element_type=jnp.float32)
    acc = acc + b_ref[...]                     # f32 bias broadcast over rows
    if relu:
        acc = jnp.maximum(acc, 0.0)
    o_ref[...] = acc.astype(o_ref.dtype)


def pallas_linear(x, w, b2, relu=False, tile_m=512):
    """x: (M, K) bf16, w: (K, N) bf16, b2: (1, N) f32 -> (M, N) bf16."""
    M, K = x.shape
    K2, N = w.shape
    assert K == K2, (K, K2)
    x = x.astype(jnp.bfloat16)                 # no-op when already bf16
    w = w.astype(jnp.bfloat16)
    tm = _choose_tm(M, tile_m)
    grid = (_cdiv(M, tm),)
    block_bytes = 2 * (tm * K + K * N + tm * N) + 4 * N
    return pl.pallas_call(
        functools.partial(_linear_kernel, relu=relu),
        out_shape=jax.ShapeDtypeStruct((M, N), jnp.bfloat16),
        grid=grid,
        in_specs=[
            pl.BlockSpec((tm, K), lambda i: (i, 0)),
            pl.BlockSpec((K, N), lambda i: (0, 0)),
            pl.BlockSpec((1, N), lambda i: (0, 0)),
        ],
        out_specs=pl.BlockSpec((tm, N), lambda i: (i, 0)),
        compiler_params=pltpu.CompilerParams(
            dimension_semantics=("parallel",),
            vmem_limit_bytes=_vmem_limit(block_bytes)),
        cost_estimate=pl.CostEstimate(
            flops=2 * M * K * N, transcendentals=0,
            bytes_accessed=2 * (M * K + K * N + M * N) + 4 * N),
    )(x, w, b2)


# ----------------------------------------------------------------------------
# Pallas kernel 2: fused post-conv3 tail
#   z      = relu(flat @ Wc4 + bc4)               (M, 64)    [conv4, 1x1 spatial]
#   latent = relu(z @ Wfc + bfc)                  (M, 512)
#   z1     = relu(latent @ [a1|e1|i1] + b1)       (M, 768)
#   z2_h   = relu(z1[:, h*256:(h+1)*256] @ W2_h)  (M, 128) x 3   [no zero DMA]
#   out    = [z2_a|z2_e|z2_i] @ blockdiag(a3,e3,i3)_pad128 + b3  (M, 128) slab
# ----------------------------------------------------------------------------
def _tail_kernel(*refs, fold_conv4):
    if fold_conv4:
        (x_ref, c4w, c4b, wfc, bfc, w1, b1, w2, b2, w3, b3, o_ref) = refs
    else:
        (x_ref, wfc, bfc, w1, b1, w2, b2, w3, b3, o_ref) = refs

    def mm(x, w_ref, b_ref, relu):
        acc = jnp.dot(x, w_ref[...], preferred_element_type=jnp.float32)
        acc = acc + b_ref[...]
        if relu:
            acc = jnp.maximum(acc, 0.0)
        return acc.astype(jnp.bfloat16)

    x = x_ref[...]
    if fold_conv4:
        x = mm(x, c4w, c4b, True)              # conv4 as a plain matmul
    latent = mm(x, wfc, bfc, True)             # (tm, 512)
    z1 = mm(latent, w1, b1, True)              # (tm, 768) = [actor|ext|int]
    # level-2: three per-head dots on 256-lane slices (block-diag zeros removed)
    parts = []
    for h in range(3):
        acc = jnp.dot(z1[:, h * 256:(h + 1) * 256],
                      w2[h * 256:(h + 1) * 256, :],
                      preferred_element_type=jnp.float32)
        acc = acc + b2[:, h * 128:(h + 1) * 128]
        parts.append(jnp.maximum(acc, 0.0).astype(jnp.bfloat16))
    z2 = jnp.concatenate(parts, axis=-1)       # (tm, 384) lane concat
    out = jnp.dot(z2, w3[...], preferred_element_type=jnp.float32) + b3[...]
    o_ref[...] = out.astype(o_ref.dtype)       # lane-dense (tm, 128) slab


def pallas_tail(flat, weights, *, fold_conv4, tile_m=512):
    M, Kf = flat.shape
    flat = flat.astype(jnp.bfloat16)
    tm = _choose_tm(M, tile_m)
    grid = (_cdiv(M, tm),)
    n_out = weights[-2].shape[1]               # padded lane-dense output width
    in_specs = [pl.BlockSpec((tm, Kf), lambda i: (i, 0))]
    in_specs += [pl.BlockSpec(t.shape, lambda i: (0, 0)) for t in weights]
    wbytes = sum(_nbytes(t) for t in weights)
    mats = [t for t in weights if t.ndim == 2 and t.dtype == jnp.bfloat16]
    flops = 2 * M * sum(t.shape[0] * t.shape[1] for t in mats)
    block_bytes = 2 * tm * Kf + wbytes + 4 * tm * n_out
    return pl.pallas_call(
        functools.partial(_tail_kernel, fold_conv4=fold_conv4),
        out_shape=jax.ShapeDtypeStruct((M, n_out), jnp.float32),
        grid=grid,
        in_specs=in_specs,
        out_specs=pl.BlockSpec((tm, n_out), lambda i: (i, 0)),
        compiler_params=pltpu.CompilerParams(
            dimension_semantics=("parallel",),
            vmem_limit_bytes=_vmem_limit(block_bytes)),
        cost_estimate=pl.CostEstimate(
            flops=flops, transcendentals=0,
            bytes_accessed=2 * M * Kf + wbytes + 4 * M * n_out),
    )(flat, *weights)


# ----------------------------------------------------------------------------
# Conv2d (valid padding) via NHWC im2col + Pallas fused matmul (no transposes)
# ----------------------------------------------------------------------------
def _im2col_nhwc(x, k, s):
    """x: (B,H,W,C) -> (B*Ho*Wo, k*k*C) with (kh,kw)-major / C-minor ordering."""
    B, H, W, C = x.shape
    Ho = _conv_out(H, k, s)
    Wo = _conv_out(W, k, s)
    cols = []
    for kh in range(k):
        for kw in range(k):
            cols.append(x[:, kh:kh + s * (Ho - 1) + 1:s,
                          kw:kw + s * (Wo - 1) + 1:s, :])        # (B,Ho,Wo,C)
    col = jnp.concatenate(cols, axis=-1)                          # lane concat
    return col.reshape(B * Ho * Wo, k * k * C), Ho, Wo


def pallas_conv2d_nhwc(x, wmat, b2, k, stride):
    """x NHWC bf16; wmat (k*k*Cin, Cout) bf16 rows (kh,kw,Cin); b2 (1,Cout) f32."""
    B = x.shape[0]
    Cout = wmat.shape[1]
    col, Ho, Wo = _im2col_nhwc(x, k, stride)
    y = pallas_linear(col, wmat, b2, relu=True)                   # (B*Ho*Wo, Cout)
    return y.reshape(B, Ho, Wo, Cout)                             # stays NHWC


# ----------------------------------------------------------------------------
# Parameter init (matches init_weights: kaiming_uniform fan_in/relu, bias 0.01)
# and one-time re-layout / bf16 cast into kernel-friendly fused form.
# ----------------------------------------------------------------------------
def _kaiming_uniform(key, shape, fan_in):
    bound = (2.0 ** 0.5) * (3.0 / fan_in) ** 0.5
    return jax.random.uniform(key, shape, jnp.float32, -bound, bound)


def init_acc_params(key, input_shape, num_actions):
    h, w, c = input_shape
    h1, w1 = _conv_out(h, 8, 4), _conv_out(w, 8, 4)
    h2, w2 = _conv_out(h1, 4, 2), _conv_out(w1, 4, 2)
    h3, w3 = _conv_out(h2, 3, 1), _conv_out(w2, 3, 1)
    h4, w4 = _conv_out(h3, 3, 1), _conv_out(w3, 3, 1)
    conv_f = 64 * h4 * w4

    keys = jax.random.split(key, 16)
    ki = iter(range(16))
    p = {}
    conv_ch = [(c, 32, 8), (32, 64, 4), (64, 64, 3), (64, 64, 3)]
    for idx, (cin, cout, k) in enumerate(conv_ch, start=1):
        p[f"c{idx}_w"] = _kaiming_uniform(keys[next(ki)], (cout, cin, k, k),
                                          fan_in=cin * k * k)
        p[f"c{idx}_b"] = jnp.full((cout,), 0.01, jnp.float32)
    p["fc_w"] = _kaiming_uniform(keys[next(ki)], (conv_f, 512), fan_in=conv_f)
    p["fc_b"] = jnp.full((512,), 0.01, jnp.float32)
    for prefix, out_dim in (("a", num_actions), ("e", 1), ("i", 1)):
        for j, (din, dout) in enumerate([(512, 256), (256, 128),
                                         (128, out_dim)], start=1):
            p[f"{prefix}{j}_w"] = _kaiming_uniform(keys[next(ki)], (din, dout),
                                                   fan_in=din)
            p[f"{prefix}{j}_b"] = jnp.full((dout,), 0.01, jnp.float32)
    return p


def _block_diag(blocks):
    rows = sum(b.shape[0] for b in blocks)
    cols = sum(b.shape[1] for b in blocks)
    out = jnp.zeros((rows, cols), jnp.float32)
    r = c = 0
    for blk in blocks:
        out = out.at[r:r + blk.shape[0], c:c + blk.shape[1]].set(blk)
        r += blk.shape[0]
        c += blk.shape[1]
    return out


def prepare_params(p, input_shape, num_actions):
    """One-time weight re-layout + bf16 cast (zero per-forward cost).
    Returns (params, fold_conv4) — conv4 folds into the tail when its output
    is 1x1 spatial."""
    h, w, _ = input_shape
    h1, w1 = _conv_out(h, 8, 4), _conv_out(w, 8, 4)
    h2, w2_ = _conv_out(h1, 4, 2), _conv_out(w1, 4, 2)
    h3, w3_ = _conv_out(h2, 3, 1), _conv_out(w2_, 3, 1)
    h4, w4_ = _conv_out(h3, 3, 1), _conv_out(w3_, 3, 1)

    q = {}
    # conv weights: (Cout,Cin,kh,kw) -> (kh,kw,Cin)-major rows, Cout columns, bf16
    for idx in range(1, 5):
        wt = p[f"c{idx}_w"]
        cout, cin, k, _ = wt.shape
        q[f"c{idx}_w"] = (wt.transpose(2, 3, 1, 0)
                          .reshape(k * k * cin, cout).astype(jnp.bfloat16))
        q[f"c{idx}_b"] = p[f"c{idx}_b"].reshape(1, cout).astype(jnp.float32)
    # fc: permute rows so NHWC flatten (H,W,C) matches torch NCHW flatten (C,H,W)
    q["fc_w"] = (p["fc_w"].reshape(64, h4, w4_, 512)
                 .transpose(1, 2, 0, 3).reshape(64 * h4 * w4_, 512)
                 .astype(jnp.bfloat16))
    q["fc_b"] = p["fc_b"].reshape(1, 512).astype(jnp.float32)
    # fused head level-1: [a1|e1|i1] -> (512, 768)
    q["w1"] = jnp.concatenate([p["a1_w"], p["e1_w"], p["i1_w"]],
                              axis=1).astype(jnp.bfloat16)
    q["b1"] = jnp.concatenate([p["a1_b"], p["e1_b"], p["i1_b"]]
                              ).reshape(1, -1).astype(jnp.float32)
    # head level-2: vertical stack (768, 128), consumed as three 256-row slices
    q["w2"] = jnp.concatenate([p["a2_w"], p["e2_w"], p["i2_w"]],
                              axis=0).astype(jnp.bfloat16)
    q["b2"] = jnp.concatenate([p["a2_b"], p["e2_b"], p["i2_b"]]
                              ).reshape(1, -1).astype(jnp.float32)
    # head level-3: block-diag, lane-padded to 128 output columns (lane-dense)
    n_heads = num_actions + 2
    n_pad = _round_up(n_heads, 128)
    w3b = _block_diag([p["a3_w"], p["e3_w"], p["i3_w"]])          # (384, n_heads)
    q["w3"] = jnp.pad(w3b, ((0, 0), (0, n_pad - n_heads))).astype(jnp.bfloat16)
    b3 = jnp.concatenate([p["a3_b"], p["e3_b"], p["i3_b"]])
    q["b3"] = jnp.pad(b3, (0, n_pad - n_heads)).reshape(1, n_pad).astype(jnp.float32)
    return q, bool(h4 == 1 and w4_ == 1)


# ----------------------------------------------------------------------------
# Forward pass (semantics of ACC.forward): returns (logits, ext_value, int_value)
# ----------------------------------------------------------------------------
@functools.partial(jax.jit, static_argnames=("num_actions", "fold_conv4"))
def acc_forward(params, x_nchw, *, num_actions, fold_conv4):
    x = jnp.transpose(x_nchw, (0, 2, 3, 1)).astype(jnp.bfloat16)  # NCHW->NHWC once
    n_convs = 3 if fold_conv4 else 4
    for idx in range(1, n_convs + 1):
        k, s = CONV_CFG[idx - 1]
        x = pallas_conv2d_nhwc(x, params[f"c{idx}_w"], params[f"c{idx}_b"], k, s)
    B = x.shape[0]
    flat = x.reshape(B, -1)    # NHWC flatten; == conv4 im2col when 1x1 output
    if fold_conv4:
        weights = [params["c4_w"], params["c4_b"]]
    else:
        weights = []
    weights += [params["fc_w"], params["fc_b"], params["w1"], params["b1"],
                params["w2"], params["b2"], params["w3"], params["b3"]]
    out = pallas_tail(flat, weights, fold_conv4=fold_conv4)
    logits = out[:, :num_actions]
    ext_v = out[:, num_actions:num_actions + 1]
    int_v = out[:, num_actions + 1:num_actions + 2]
    return logits, ext_v, int_v


if __name__ == "__main__":
    # Smallest spatial size the conv stack admits is 52 (-> 1x1 feature map).
    B, C, H, W = 2, 4, 52, 52
    NUM_ACTIONS = 6

    key = jax.random.PRNGKey(0)
    k_param, k_input = jax.random.split(key)
    raw_params = init_acc_params(k_param, (H, W, C), NUM_ACTIONS)
    params, fold_conv4 = prepare_params(raw_params, (H, W, C), NUM_ACTIONS)
    x = jax.random.normal(k_input, (B, C, H, W), jnp.float32)     # NCHW like torch

    logits, ext_v, int_v = acc_forward(params, x, num_actions=NUM_ACTIONS,
                                       fold_conv4=fold_conv4)
    jax.block_until_ready((logits, ext_v, int_v))

    assert logits.shape == (B, NUM_ACTIONS), logits.shape
    assert ext_v.shape == (B, 1), ext_v.shape
    assert int_v.shape == (B, 1), int_v.shape
    assert bool(jnp.all(jnp.isfinite(logits)))
    print("KERNEL_OK")
</pallas_src>

<mosaic_0001>
module attributes {stable_mosaic.version = 11 : i64} {
  func.func @_linear_kernel(%arg0: i32, %arg1: memref<144x256xbf16, #tpu.memory_space<vmem>>, %arg2: memref<256x32xbf16, #tpu.memory_space<vmem>>, %arg3: memref<1x32xf32, #tpu.memory_space<vmem>>, %arg4: memref<144x32xbf16, #tpu.memory_space<vmem>>) attributes {dimension_semantics = [#tpu.dimension_semantics<parallel>], iteration_bounds = array<i64: 2>, scalar_prefetch = 0 : i64, scratch_operands = 0 : i64, tpu.core_type = #tpu.core_type<tc>, window_params = [{transform_indices = @transform_0, window_bounds = array<i64: 144, 256>}, {pipeline_mode = #tpu.pipeline_mode<synchronous>, transform_indices = @transform_1, window_bounds = array<i64: 256, 32>}, {pipeline_mode = #tpu.pipeline_mode<synchronous>, transform_indices = @transform_2, window_bounds = array<i64: 1, 32>}, {transform_indices = @transform_3, window_bounds = array<i64: 144, 32>}]} {
    %c0 = arith.constant 0 : index
    %c0_0 = arith.constant 0 : index
    %0 = vector.load %arg1[%c0, %c0_0] : memref<144x256xbf16, #tpu.memory_space<vmem>>, vector<144x256xbf16>
    %c0_1 = arith.constant 0 : index
    %c0_2 = arith.constant 0 : index
    %1 = vector.load %arg2[%c0_1, %c0_2] : memref<256x32xbf16, #tpu.memory_space<vmem>>, vector<256x32xbf16>
    %cst = arith.constant dense<0.000000e+00> : vector<144x32xf32>
    %2 = tpu.matmul %0, %1, %cst {dimension_numbers = #tpu.dot_dimension_numbers<[1], [0], [0], [1], [0, 0, 1, 1], [], []>} : vector<144x256xbf16>, vector<256x32xbf16>, vector<144x32xf32> -> vector<144x32xf32>
    %c0_3 = arith.constant 0 : index
    %c0_4 = arith.constant 0 : index
    %3 = vector.load %arg3[%c0_3, %c0_4] : memref<1x32xf32, #tpu.memory_space<vmem>>, vector<1x32xf32>
    %4 = vector.broadcast %3 : vector<1x32xf32> to vector<144x32xf32>
    %5 = arith.addf %2, %4 : vector<144x32xf32>
    %cst_5 = arith.constant 0.000000e+00 : f32
    %6 = vector.broadcast %cst_5 : f32 to vector<144x32xf32>
    %7 = arith.maximumf %5, %6 : vector<144x32xf32>
    %8 = arith.truncf %7 : vector<144x32xf32> to vector<144x32xbf16>
    %c0_6 = arith.constant 0 : index
    %c0_7 = arith.constant 0 : index
    %9 = vector.load %arg4[%c0_6, %c0_7] : memref<144x32xbf16, #tpu.memory_space<vmem>>, vector<144x32xbf16>
    tpu.vector_store %arg4[%c0_6, %c0_7], %8 {strides = array<i32>} : memref<144x32xbf16, #tpu.memory_space<vmem>>, vector<144x32xbf16>,
    return
  }
  func.func @transform_0(%arg0: i32) -> (i32, i32) {
    %c0_i32 = arith.constant 0 : i32
    %c0_i32_0 = arith.constant 0 : i32
    return %arg0, %c0_i32 : i32, i32
  }
  func.func @transform_1(%arg0: i32) -> (i32, i32) {
    %c0_i32 = arith.constant 0 : i32
    %c0_i32_0 = arith.constant 0 : i32
    %c0_i32_1 = arith.constant 0 : i32
    return %c0_i32, %c0_i32_0 : i32, i32
  }
  func.func @transform_2(%arg0: i32) -> (i32, i32) {
    %c0_i32 = arith.constant 0 : i32
    %c0_i32_0 = arith.constant 0 : i32
    %c0_i32_1 = arith.constant 0 : i32
    return %c0_i32, %c0_i32_0 : i32, i32
  }
  func.func @transform_3(%arg0: i32) -> (i32, i32) {
    %c0_i32 = arith.constant 0 : i32
    %c0_i32_0 = arith.constant 0 : i32
    return %arg0, %c0_i32 : i32, i32
  }
}

module attributes {stable_mosaic.version = 11 : i64} {
  func.func @_linear_kernel(%arg0: i32, %arg1: memref<32x512xbf16, #tpu.memory_space<vmem>>, %arg2: memref<512x64xbf16, #tpu.memory_space<vmem>>, %arg3: memref<1x64xf32, #tpu.memory_space<vmem>>, %arg4: memref<32x64xbf16, #tpu.memory_space<vmem>>) attributes {dimension_semantics = [#tpu.dimension_semantics<parallel>], iteration_bounds = array<i64: 2>, scalar_prefetch = 0 : i64, scratch_operands = 0 : i64, tpu.core_type = #tpu.core_type<tc>, window_params = [{transform_indices = @transform_0, window_bounds = array<i64: 32, 512>}, {pipeline_mode = #tpu.pipeline_mode<synchronous>, transform_indices = @transform_1, window_bounds = array<i64: 512, 64>}, {pipeline_mode = #tpu.pipeline_mode<synchronous>, transform_indices = @transform_2, window_bounds = array<i64: 1, 64>}, {transform_indices = @transform_3, window_bounds = array<i64: 32, 64>}]} {
    %c0 = arith.constant 0 : index
    %c0_0 = arith.constant 0 : index
    %0 = vector.load %arg1[%c0, %c0_0] : memref<32x512xbf16, #tpu.memory_space<vmem>>, vector<32x512xbf16>
    %c0_1 = arith.constant 0 : index
    %c0_2 = arith.constant 0 : index
    %1 = vector.load %arg2[%c0_1, %c0_2] : memref<512x64xbf16, #tpu.memory_space<vmem>>, vector<512x64xbf16>
    %cst = arith.constant dense<0.000000e+00> : vector<32x64xf32>
    %2 = tpu.matmul %0, %1, %cst {dimension_numbers = #tpu.dot_dimension_numbers<[1], [0], [0], [1], [0, 0, 1, 1], [], []>} : vector<32x512xbf16>, vector<512x64xbf16>, vector<32x64xf32> -> vector<32x64xf32>
    %c0_3 = arith.constant 0 : index
    %c0_4 = arith.constant 0 : index
    %3 = vector.load %arg3[%c0_3, %c0_4] : memref<1x64xf32, #tpu.memory_space<vmem>>, vector<1x64xf32>
    %4 = vector.broadcast %3 : vector<1x64xf32> to vector<32x64xf32>
    %5 = arith.addf %2, %4 : vector<32x64xf32>
    %cst_5 = arith.constant 0.000000e+00 : f32
    %6 = vector.broadcast %cst_5 : f32 to vector<32x64xf32>
    %7 = arith.maximumf %5, %6 : vector<32x64xf32>
    %8 = arith.truncf %7 : vector<32x64xf32> to vector<32x64xbf16>
    %c0_6 = arith.constant 0 : index
    %c0_7 = arith.constant 0 : index
    %9 = vector.load %arg4[%c0_6, %c0_7] : memref<32x64xbf16, #tpu.memory_space<vmem>>, vector<32x64xbf16>
    tpu.vector_store %arg4[%c0_6, %c0_7], %8 {strides = array<i32>} : memref<32x64xbf16, #tpu.memory_space<vmem>>, vector<32x64xbf16>,
    return
  }
  func.func @transform_0(%arg0: i32) -> (i32, i32) {
    %c0_i32 = arith.constant 0 : i32
    %c0_i32_0 = arith.constant 0 : i32
    return %arg0, %c0_i32 : i32, i32
  }
  func.func @transform_1(%arg0: i32) -> (i32, i32) {
    %c0_i32 = arith.constant 0 : i32
    %c0_i32_0 = arith.constant 0 : i32
    %c0_i32_1 = arith.constant 0 : i32
    return %c0_i32, %c0_i32_0 : i32, i32
  }
  func.func @transform_2(%arg0: i32) -> (i32, i32) {
    %c0_i32 = arith.constant 0 : i32
    %c0_i32_0 = arith.constant 0 : i32
    %c0_i32_1 = arith.constant 0 : i32
    return %c0_i32, %c0_i32_0 : i32, i32
  }
  func.func @transform_3(%arg0: i32) -> (i32, i32) {
    %c0_i32 = arith.constant 0 : i32
    %c0_i32_0 = arith.constant 0 : i32
    return %arg0, %c0_i32 : i32, i32
  }
}

module attributes {stable_mosaic.version = 11 : i64} {
  func.func @_linear_kernel(%arg0: i32, %arg1: memref<18x576xbf16, #tpu.memory_space<vmem>>, %arg2: memref<576x64xbf16, #tpu.memory_space<vmem>>, %arg3: memref<1x64xf32, #tpu.memory_space<vmem>>, %arg4: memref<18x64xbf16, #tpu.memory_space<vmem>>) attributes {dimension_semantics = [#tpu.dimension_semantics<parallel>], iteration_bounds = array<i64: 1>, scalar_prefetch = 0 : i64, scratch_operands = 0 : i64, tpu.core_type = #tpu.core_type<tc>, window_params = [{transform_indices = @transform_0, window_bounds = array<i64: 18, 576>}, {pipeline_mode = #tpu.pipeline_mode<synchronous>, transform_indices = @transform_1, window_bounds = array<i64: 576, 64>}, {pipeline_mode = #tpu.pipeline_mode<synchronous>, transform_indices = @transform_2, window_bounds = array<i64: 1, 64>}, {transform_indices = @transform_3, window_bounds = array<i64: 18, 64>}]} {
    %c0 = arith.constant 0 : index
    %c0_0 = arith.constant 0 : index
    %0 = vector.load %arg1[%c0, %c0_0] : memref<18x576xbf16, #tpu.memory_space<vmem>>, vector<18x576xbf16>
    %c0_1 = arith.constant 0 : index
    %c0_2 = arith.constant 0 : index
    %1 = vector.load %arg2[%c0_1, %c0_2] : memref<576x64xbf16, #tpu.memory_space<vmem>>, vector<576x64xbf16>
    %cst = arith.constant dense<0.000000e+00> : vector<18x64xf32>
    %2 = tpu.matmul %0, %1, %cst {dimension_numbers = #tpu.dot_dimension_numbers<[1], [0], [0], [1], [0, 0, 1, 1], [], []>} : vector<18x576xbf16>, vector<576x64xbf16>, vector<18x64xf32> -> vector<18x64xf32>
    %c0_3 = arith.constant 0 : index
    %c0_4 = arith.constant 0 : index
    %3 = vector.load %arg3[%c0_3, %c0_4] : memref<1x64xf32, #tpu.memory_space<vmem>>, vector<1x64xf32>
    %4 = vector.broadcast %3 : vector<1x64xf32> to vector<18x64xf32>
    %5 = arith.addf %2, %4 : vector<18x64xf32>
    %cst_5 = arith.constant 0.000000e+00 : f32
    %6 = vector.broadcast %cst_5 : f32 to vector<18x64xf32>
    %7 = arith.maximumf %5, %6 : vector<18x64xf32>
    %8 = arith.truncf %7 : vector<18x64xf32> to vector<18x64xbf16>
    %c0_6 = arith.constant 0 : index
    %c0_7 = arith.constant 0 : index
    %9 = vector.load %arg4[%c0_6, %c0_7] : memref<18x64xbf16, #tpu.memory_space<vmem>>, vector<18x64xbf16>
    tpu.vector_store %arg4[%c0_6, %c0_7], %8 {strides = array<i32>} : memref<18x64xbf16, #tpu.memory_space<vmem>>, vector<18x64xbf16>,
    return
  }
  func.func @transform_0(%arg0: i32) -> (i32, i32) {
    %c0_i32 = arith.constant 0 : i32
    %c0_i32_0 = arith.constant 0 : i32
    return %arg0, %c0_i32 : i32, i32
  }
  func.func @transform_1(%arg0: i32) -> (i32, i32) {
    %c0_i32 = arith.constant 0 : i32
    %c0_i32_0 = arith.constant 0 : i32
    %c0_i32_1 = arith.constant 0 : i32
    return %c0_i32, %c0_i32_0 : i32, i32
  }
  func.func @transform_2(%arg0: i32) -> (i32, i32) {
    %c0_i32 = arith.constant 0 : i32
    %c0_i32_0 = arith.constant 0 : i32
    %c0_i32_1 = arith.constant 0 : i32
    return %c0_i32, %c0_i32_0 : i32, i32
  }
  func.func @transform_3(%arg0: i32) -> (i32, i32) {
    %c0_i32 = arith.constant 0 : i32
    %c0_i32_0 = arith.constant 0 : i32
    return %arg0, %c0_i32 : i32, i32
  }
}

module attributes {stable_mosaic.version = 11 : i64} {
  func.func @_tail_kernel(%arg0: i32, %arg1: memref<2x576xbf16, #tpu.memory_space<vmem>>, %arg2: memref<576x64xbf16, #tpu.memory_space<vmem>>, %arg3: memref<1x64xf32, #tpu.memory_space<vmem>>, %arg4: memref<64x512xbf16, #tpu.memory_space<vmem>>, %arg5: memref<1x512xf32, #tpu.memory_space<vmem>>, %arg6: memref<512x768xbf16, #tpu.memory_space<vmem>>, %arg7: memref<1x768xf32, #tpu.memory_space<vmem>>, %arg8: memref<768x128xbf16, #tpu.memory_space<vmem>>, %arg9: memref<1x384xf32, #tpu.memory_space<vmem>>, %arg10: memref<384x128xbf16, #tpu.memory_space<vmem>>, %arg11: memref<1x128xf32, #tpu.memory_space<vmem>>, %arg12: memref<2x128xf32, #tpu.memory_space<vmem>>) attributes {dimension_semantics = [#tpu.dimension_semantics<parallel>], iteration_bounds = array<i64: 1>, scalar_prefetch = 0 : i64, scratch_operands = 0 : i64, tpu.core_type = #tpu.core_type<tc>, window_params = [{transform_indices = @transform_0, window_bounds = array<i64: 2, 576>}, {pipeline_mode = #tpu.pipeline_mode<synchronous>, transform_indices = @transform_1, window_bounds = array<i64: 576, 64>}, {pipeline_mode = #tpu.pipeline_mode<synchronous>, transform_indices = @transform_2, window_bounds = array<i64: 1, 64>}, {pipeline_mode = #tpu.pipeline_mode<synchronous>, transform_indices = @transform_3, window_bounds = array<i64: 64, 512>}, {pipeline_mode = #tpu.pipeline_mode<synchronous>, transform_indices = @transform_4, window_bounds = array<i64: 1, 512>}, {pipeline_mode = #tpu.pipeline_mode<synchronous>, transform_indices = @transform_5, window_bounds = array<i64: 512, 768>}, {pipeline_mode = #tpu.pipeline_mode<synchronous>, transform_indices = @transform_6, window_bounds = array<i64: 1, 768>}, {pipeline_mode = #tpu.pipeline_mode<synchronous>, transform_indices = @transform_7, window_bounds = array<i64: 768, 128>}, {pipeline_mode = #tpu.pipeline_mode<synchronous>, transform_indices = @transform_8, window_bounds = array<i64: 1, 384>}, {pipeline_mode = #tpu.pipeline_mode<synchronous>, transform_indices = @transform_9, window_bounds = array<i64: 384, 128>}, {pipeline_mode = #tpu.pipeline_mode<synchronous>, transform_indices = @transform_10, window_bounds = array<i64: 1, 128>}, {transform_indices = @transform_11, window_bounds = array<i64: 2, 128>}]} {
    %c0 = arith.constant 0 : index
    %c0_0 = arith.constant 0 : index
    %0 = vector.load %arg1[%c0, %c0_0] : memref<2x576xbf16, #tpu.memory_space<vmem>>, vector<2x576xbf16>
    %c0_1 = arith.constant 0 : index
    %c0_2 = arith.constant 0 : index
    %1 = vector.load %arg2[%c0_1, %c0_2] : memref<576x64xbf16, #tpu.memory_space<vmem>>, vector<576x64xbf16>
    %cst = arith.constant dense<0.000000e+00> : vector<2x64xf32>
    %2 = tpu.matmul %0, %1, %cst {dimension_numbers = #tpu.dot_dimension_numbers<[1], [0], [0], [1], [0, 0, 1, 1], [], []>} : vector<2x576xbf16>, vector<576x64xbf16>, vector<2x64xf32> -> vector<2x64xf32>
    %c0_3 = arith.constant 0 : index
    %c0_4 = arith.constant 0 : index
    %3 = vector.load %arg3[%c0_3, %c0_4] : memref<1x64xf32, #tpu.memory_space<vmem>>, vector<1x64xf32>
    %4 = vector.broadcast %3 : vector<1x64xf32> to vector<2x64xf32>
    %5 = arith.addf %2, %4 : vector<2x64xf32>
    %cst_5 = arith.constant 0.000000e+00 : f32
    %6 = vector.broadcast %cst_5 : f32 to vector<2x64xf32>
    %7 = arith.maximumf %5, %6 : vector<2x64xf32>
    %8 = arith.truncf %7 : vector<2x64xf32> to vector<2x64xbf16>
    %c0_6 = arith.constant 0 : index
    %c0_7 = arith.constant 0 : index
    %9 = vector.load %arg4[%c0_6, %c0_7] : memref<64x512xbf16, #tpu.memory_space<vmem>>, vector<64x512xbf16>
    %cst_8 = arith.constant dense<0.000000e+00> : vector<2x512xf32>
    %10 = tpu.matmul %8, %9, %cst_8 {dimension_numbers = #tpu.dot_dimension_numbers<[1], [0], [0], [1], [0, 0, 1, 1], [], []>} : vector<2x64xbf16>, vector<64x512xbf16>, vector<2x512xf32> -> vector<2x512xf32>
    %c0_9 = arith.constant 0 : index
    %c0_10 = arith.constant 0 : index
    %11 = vector.load %arg5[%c0_9, %c0_10] : memref<1x512xf32, #tpu.memory_space<vmem>>, vector<1x512xf32>
    %12 = vector.broadcast %11 : vector<1x512xf32> to vector<2x512xf32>
    %13 = arith.addf %10, %12 : vector<2x512xf32>
    %cst_11 = arith.constant 0.000000e+00 : f32
    %14 = vector.broadcast %cst_11 : f32 to vector<2x512xf32>
    %15 = arith.maximumf %13, %14 : vector<2x512xf32>
    %16 = arith.truncf %15 : vector<2x512xf32> to vector<2x512xbf16>
    %c0_12 = arith.constant 0 : index
    %c0_13 = arith.constant 0 : index
    %17 = vector.load %arg6[%c0_12, %c0_13] : memref<512x768xbf16, #tpu.memory_space<vmem>>, vector<512x768xbf16>
    %cst_14 = arith.constant dense<0.000000e+00> : vector<2x768xf32>
    %18 = tpu.matmul %16, %17, %cst_14 {dimension_numbers = #tpu.dot_dimension_numbers<[1], [0], [0], [1], [0, 0, 1, 1], [], []>} : vector<2x512xbf16>, vector<512x768xbf16>, vector<2x768xf32> -> vector<2x768xf32>
    %c0_15 = arith.constant 0 : index
    %c0_16 = arith.constant 0 : index
    %19 = vector.load %arg7[%c0_15, %c0_16] : memref<1x768xf32, #tpu.memory_space<vmem>>, vector<1x768xf32>
    %20 = vector.broadcast %19 : vector<1x768xf32> to vector<2x768xf32>
    %21 = arith.addf %18, %20 : vector<2x768xf32>
    %cst_17 = arith.constant 0.000000e+00 : f32
    %22 = vector.broadcast %cst_17 : f32 to vector<2x768xf32>
    %23 = arith.maximumf %21, %22 : vector<2x768xf32>
    %24 = arith.truncf %23 : vector<2x768xf32> to vector<2x768xbf16>
    %25 = vector.extract_strided_slice %24 {offsets = [0, 0], sizes = [2, 256], strides = [1, 1]} : vector<2x768xbf16> to vector<2x256xbf16>
    %c0_18 = arith.constant 0 : index
    %c0_19 = arith.constant 0 : index
    %26 = vector.load %arg8[%c0_18, %c0_19] : memref<768x128xbf16, #tpu.memory_space<vmem>>, vector<256x128xbf16>
    %cst_20 = arith.constant dense<0.000000e+00> : vector<2x128xf32>
    %27 = tpu.matmul %25, %26, %cst_20 {dimension_numbers = #tpu.dot_dimension_numbers<[1], [0], [0], [1], [0, 0, 1, 1], [], []>} : vector<2x256xbf16>, vector<256x128xbf16>, vector<2x128xf32> -> vector<2x128xf32>
    %c0_21 = arith.constant 0 : index
    %c0_22 = arith.constant 0 : index
    %28 = vector.load %arg9[%c0_21, %c0_22] : memref<1x384xf32, #tpu.memory_space<vmem>>, vector<1x128xf32>
    %29 = vector.broadcast %28 : vector<1x128xf32> to vector<2x128xf32>
    %30 = arith.addf %27, %29 : vector<2x128xf32>
    %cst_23 = arith.constant 0.000000e+00 : f32
    %31 = vector.broadcast %cst_23 : f32 to vector<2x128xf32>
    %32 = arith.maximumf %30, %31 : vector<2x128xf32>
    %33 = arith.truncf %32 : vector<2x128xf32> to vector<2x128xbf16>
    %34 = vector.extract_strided_slice %24 {offsets = [0, 256], sizes = [2, 256], strides = [1, 1]} : vector<2x768xbf16> to vector<2x256xbf16>
    %c256 = arith.constant 256 : index
    %c0_24 = arith.constant 0 : index
    %35 = vector.load %arg8[%c256, %c0_24] : memref<768x128xbf16, #tpu.memory_space<vmem>>, vector<256x128xbf16>
    %cst_25 = arith.constant dense<0.000000e+00> : vector<2x128xf32>
    %36 = tpu.matmul %34, %35, %cst_25 {dimension_numbers = #tpu.dot_dimension_numbers<[1], [0], [0], [1], [0, 0, 1, 1], [], []>} : vector<2x256xbf16>, vector<256x128xbf16>, vector<2x128xf32> -> vector<2x128xf32>
    %c0_26 = arith.constant 0 : index
    %c128 = arith.constant 128 : index
    %37 = vector.load %arg9[%c0_26, %c128] : memref<1x384xf32, #tpu.memory_space<vmem>>, vector<1x128xf32>
    %38 = vector.broadcast %37 : vector<1x128xf32> to vector<2x128xf32>
    %39 = arith.addf %36, %38 : vector<2x128xf32>
    %cst_27 = arith.constant 0.000000e+00 : f32
    %40 = vector.broadcast %cst_27 : f32 to vector<2x128xf32>
    %41 = arith.maximumf %39, %40 : vector<2x128xf32>
    %42 = arith.truncf %41 : vector<2x128xf32> to vector<2x128xbf16>
    %43 = vector.extract_strided_slice %24 {offsets = [0, 512], sizes = [2, 256], strides = [1, 1]} : vector<2x768xbf16> to vector<2x256xbf16>
    %c512 = arith.constant 512 : index
    %c0_28 = arith.constant 0 : index
    %44 = vector.load %arg8[%c512, %c0_28] : memref<768x128xbf16, #tpu.memory_space<vmem>>, vector<256x128xbf16>
    %cst_29 = arith.constant dense<0.000000e+00> : vector<2x128xf32>
    %45 = tpu.matmul %43, %44, %cst_29 {dimension_numbers = #tpu.dot_dimension_numbers<[1], [0], [0], [1], [0, 0, 1, 1], [], []>} : vector<2x256xbf16>, vector<256x128xbf16>, vector<2x128xf32> -> vector<2x128xf32>
    %c0_30 = arith.constant 0 : index
    %c256_31 = arith.constant 256 : index
    %46 = vector.load %arg9[%c0_30, %c256_31] : memref<1x384xf32, #tpu.memory_space<vmem>>, vector<1x128xf32>
    %47 = vector.broadcast %46 : vector<1x128xf32> to vector<2x128xf32>
    %48 = arith.addf %45, %47 : vector<2x128xf32>
    %cst_32 = arith.constant 0.000000e+00 : f32
    %49 = vector.broadcast %cst_32 : f32 to vector<2x128xf32>
    %50 = arith.maximumf %48, %49 : vector<2x128xf32>
    %51 = arith.truncf %50 : vector<2x128xf32> to vector<2x128xbf16>
    %52 = tpu.concatenate %33, %42, %51 in 1 : vector<2x128xbf16>, vector<2x128xbf16>, vector<2x128xbf16> -> vector<2x384xbf16>
    %c0_33 = arith.constant 0 : index
    %c0_34 = arith.constant 0 : index
    %53 = vector.load %arg10[%c0_33, %c0_34] : memref<384x128xbf16, #tpu.memory_space<vmem>>, vector<384x128xbf16>
    %cst_35 = arith.constant dense<0.000000e+00> : vector<2x128xf32>
    %54 = tpu.matmul %52, %53, %cst_35 {dimension_numbers = #tpu.dot_dimension_numbers<[1], [0], [0], [1], [0, 0, 1, 1], [], []>} : vector<2x384xbf16>, vector<384x128xbf16>, vector<2x128xf32> -> vector<2x128xf32>
    %c0_36 = arith.constant 0 : index
    %c0_37 = arith.constant 0 : index
    %55 = vector.load %arg11[%c0_36, %c0_37] : memref<1x128xf32, #tpu.memory_space<vmem>>, vector<1x128xf32>
    %56 = vector.broadcast %55 : vector<1x128xf32> to vector<2x128xf32>
    %57 = arith.addf %54, %56 : vector<2x128xf32>
    %c0_38 = arith.constant 0 : index
    %c0_39 = arith.constant 0 : index
    %58 = vector.load %arg12[%c0_38, %c0_39] : memref<2x128xf32, #tpu.memory_space<vmem>>, vector<2x128xf32>
    tpu.vector_store %arg12[%c0_38, %c0_39], %57 {strides = array<i32>} : memref<2x128xf32, #tpu.memory_space<vmem>>, vector<2x128xf32>,
    return
  }
  func.func @transform_0(%arg0: i32) -> (i32, i32) {
    %c0_i32 = arith.constant 0 : i32
    %c0_i32_0 = arith.constant 0 : i32
    return %arg0, %c0_i32 : i32, i32
  }
  func.func @transform_1(%arg0: i32) -> (i32, i32) {
    %c0_i32 = arith.constant 0 : i32
    %c0_i32_0 = arith.constant 0 : i32
    %c0_i32_1 = arith.constant 0 : i32
    return %c0_i32, %c0_i32_0 : i32, i32
  }
  func.func @transform_2(%arg0: i32) -> (i32, i32) {
    %c0_i32 = arith.constant 0 : i32
    %c0_i32_0 = arith.constant 0 : i32
    %c0_i32_1 = arith.constant 0 : i32
    return %c0_i32, %c0_i32_0 : i32, i32
  }
  func.func @transform_3(%arg0: i32) -> (i32, i32) {
    %c0_i32 = arith.constant 0 : i32
    %c0_i32_0 = arith.constant 0 : i32
    %c0_i32_1 = arith.constant 0 : i32
    return %c0_i32, %c0_i32_0 : i32, i32
  }
  func.func @transform_4(%arg0: i32) -> (i32, i32) {
    %c0_i32 = arith.constant 0 : i32
    %c0_i32_0 = arith.constant 0 : i32
    %c0_i32_1 = arith.constant 0 : i32
    return %c0_i32, %c0_i32_0 : i32, i32
  }
  func.func @transform_5(%arg0: i32) -> (i32, i32) {
    %c0_i32 = arith.constant 0 : i32
    %c0_i32_0 = arith.constant 0 : i32
    %c0_i32_1 = arith.constant 0 : i32
    return %c0_i32, %c0_i32_0 : i32, i32
  }
  func.func @transform_6(%arg0: i32) -> (i32, i32) {
    %c0_i32 = arith.constant 0 : i32
    %c0_i32_0 = arith.constant 0 : i32
    %c0_i32_1 = arith.constant 0 : i32
    return %c0_i32, %c0_i32_0 : i32, i32
  }
  func.func @transform_7(%arg0: i32) -> (i32, i32) {
    %c0_i32 = arith.constant 0 : i32
    %c0_i32_0 = arith.constant 0 : i32
    %c0_i32_1 = arith.constant 0 : i32
    return %c0_i32, %c0_i32_0 : i32, i32
  }
  func.func @transform_8(%arg0: i32) -> (i32, i32) {
    %c0_i32 = arith.constant 0 : i32
    %c0_i32_0 = arith.constant 0 : i32
    %c0_i32_1 = arith.constant 0 : i32
    return %c0_i32, %c0_i32_0 : i32, i32
  }
  func.func @transform_9(%arg0: i32) -> (i32, i32) {
    %c0_i32 = arith.constant 0 : i32
    %c0_i32_0 = arith.constant 0 : i32
    %c0_i32_1 = arith.constant 0 : i32
    return %c0_i32, %c0_i32_0 : i32, i32
  }
  func.func @transform_10(%arg0: i32) -> (i32, i32) {
    %c0_i32 = arith.constant 0 : i32
    %c0_i32_0 = arith.constant 0 : i32
    %c0_i32_1 = arith.constant 0 : i32
    return %c0_i32, %c0_i32_0 : i32, i32
  }
  func.func @transform_11(%arg0: i32) -> (i32, i32) {
    %c0_i32 = arith.constant 0 : i32
    %c0_i32_0 = arith.constant 0 : i32
    return %arg0, %c0_i32 : i32, i32
  }
}

</mosaic_0001>

<llo_original>
// kernel: acc_forward.4
$region0: #{acc_forward.4}
  #allocation0 [shape = 'u32[]', space=smem, size = 0x4, offset = 0x4, fixed_abs, tag = 'smem constant byte address 0x4 - core index']
  #allocation1 [shape = 'u32[144,128]{1,0:T(1,128)}', space=vmem, size = 0x12000, scoped, tag = 'internal scratch']
  %s0 = inlined_call_operand.vmem [shape: bf16[288,256], index: 0, kind: input, shape index: {}]
  %s1 = inlined_call_operand.vmem [shape: bf16[256,32], index: 1, kind: input, shape index: {}]
  %s2 = inlined_call_operand.vmem [shape: f32[1,32], index: 2, kind: input, shape index: {}]
  %s3 = inlined_call_operand.vmem [shape: bf16[288,32], index: 3, kind: output, shape index: {}]
  %s4 = sld [smem:[#allocation0]]
  $region45: #{acc_forward.4} parent=0
    _
  %s6 = ssub.s32 1, %s4
  %s7 = scalar_select 0, %s6, %s4
  loop: start=0, step=1, limit=4
  $region2: #{acc_forward.4} parent=0 // loop_pre_header
    _
  $region3: #{acc_forward.4} parent=0 // loop_header
    %s9 = sphi 0, %s13
    %p10 = scmp.ge.s32.totalorder %s9, 4
    %s19 = sphi 0, %s21
    %s22 = sphi 0, %s19
    %s23 = sphi 0, %s22
    %s39 = sphi 0, %s23
    %s43 = sphi 0, %s43
    %s45 = sphi 0, %s43
    %s46 = sphi 0, %s45
    %s60 = sphi 0, %s46
    %s64 = sphi 0, %s64
    %s66 = sphi 0, %s64
    %s67 = sphi 0, %s66
    %s81 = sphi 0, %s67
    %s87 = sphi 0, %s89
    %s90 = sphi 0, %s87
    %s91 = sphi 0, %s90
    %s107 = sphi 0, %s91
  $region4: #{acc_forward.4} parent=0 // loop_header_branch
    %12 = sbr.rel (%p10) target = $region8
  $region5: #{acc_forward.4} parent=0 // loop_body
    %s14 = ssub.s32 %s9, 1
    %s15 = ssub.s32 %s9, 2
    %s16 = sadd.s32 %s9, 1
    %s17 = ssub.s32 %s9, %s16
    %p18 = scmp.eq.s32.totalorder %s17, 0
    %s20 = sadd.s32 %s19, 1
    %s21 = scalar_select %p18, %s19, %s20
    %p24 = pneg %p18
    %p25 = scmp.eq.s32.totalorder %s9, 1
    %p26 = por %p24, %p25
    %p27 = scmp.ne.s32.totalorder %s19, %s22
    %p28 = scmp.eq.s32.totalorder %s9, 0
    %p29 = por %p27, %p28
    %p30 = scmp.ne.s32.totalorder %s19, %s22
    %p31 = scmp.eq.s32.totalorder %s14, 1
    %p32 = por %p30, %p31
    %p33 = scmp.ne.s32.totalorder %s22, %s23
    %p34 = scmp.eq.s32.totalorder %s14, 0
    %p35 = por %p33, %p34
    %p36 = scmp.ne.s32.totalorder %s22, %s23
    %p37 = scmp.eq.s32.totalorder %s15, 1
    %p38 = por %p36, %p37
    %p40 = scmp.ne.s32.totalorder %s23, %s39
    %p41 = scmp.eq.s32.totalorder %s15, 0
    %p42 = por %p40, %p41
    %s44 = sadd.s32 %s43, 1
    %p47 = scmp.eq.s32.totalorder %s9, 1
    %p48 = scmp.ne.s32.totalorder %s43, %s45
    %p49 = scmp.eq.s32.totalorder %s9, 0
    %p50 = por %p48, %p49
    %p51 = scmp.ne.s32.totalorder %s43, %s45
    %p52 = scmp.eq.s32.totalorder %s14, 1
    %p53 = por %p51, %p52
    %p54 = scmp.ne.s32.totalorder %s45, %s46
    %p55 = scmp.eq.s32.totalorder %s14, 0
    %p56 = por %p54, %p55
    %p57 = scmp.ne.s32.totalorder %s45, %s46
    %p58 = scmp.eq.s32.totalorder %s15, 1
    %p59 = por %p57, %p58
    %p61 = scmp.ne.s32.totalorder %s46, %s60
    %p62 = scmp.eq.s32.totalorder %s15, 0
    %p63 = por %p61, %p62
    %s65 = sadd.s32 %s64, 1
    %p68 = scmp.eq.s32.totalorder %s9, 1
    %p69 = scmp.ne.s32.totalorder %s64, %s66
    %p70 = scmp.eq.s32.totalorder %s9, 0
    %p71 = por %p69, %p70
    %p72 = scmp.ne.s32.totalorder %s64, %s66
    %p73 = scmp.eq.s32.totalorder %s14, 1
    %p74 = por %p72, %p73
    %p75 = scmp.ne.s32.totalorder %s66, %s67
    %p76 = scmp.eq.s32.totalorder %s14, 0
    %p77 = por %p75, %p76
    %p78 = scmp.ne.s32.totalorder %s66, %s67
    %p79 = scmp.eq.s32.totalorder %s15, 1
    %p80 = por %p78, %p79
    %p82 = scmp.ne.s32.totalorder %s67, %s81
    %p83 = scmp.eq.s32.totalorder %s15, 0
    %p84 = por %p82, %p83
    %s85 = ssub.s32 %s9, %s16
    %p86 = scmp.eq.s32.totalorder %s85, 0
    %s88 = sadd.s32 %s87, 1
    %s89 = scalar_select %p86, %s87, %s88
    %p92 = pneg %p86
    %p93 = scmp.eq.s32.totalorder %s9, 1
    %p94 = por %p92, %p93
    %p95 = scmp.ne.s32.totalorder %s87, %s90
    %p96 = scmp.eq.s32.totalorder %s9, 0
    %p97 = por %p95, %p96
    %p98 = scmp.ne.s32.totalorder %s87, %s90
    %p99 = scmp.eq.s32.totalorder %s14, 1
    %p100 = por %p98, %p99
    %p101 = scmp.ne.s32.totalorder %s90, %s91
    %p102 = scmp.eq.s32.totalorder %s14, 0
    %p103 = por %p101, %p102
    %p104 = scmp.ne.s32.totalorder %s90, %s91
    %p105 = scmp.eq.s32.totalorder %s15, 1
    %p106 = por %p104, %p105
    %p108 = scmp.ne.s32.totalorder %s91, %s107
    %p109 = scmp.eq.s32.totalorder %s15, 0
    %p110 = por %p108, %p109
    %p111 = scmp.le.s32.totalorder 1, %s9
    %p112 = scmp.lt.s32.totalorder %s9, 3
    %p113 = pnand %p111, %p112
    %p114 = pneg %p113
    // Predicated region
    $region9: #{acc_forward.4} parent=5 // pred_check
      _
    $region10: #{acc_forward.4} parent=5 // pred_check_branch
      %116 = sbr.rel (%p113) target = $region12
    $region11: #{acc_forward.4} parent=5 // pred_region
      %s117 = ssub.s32 %s9, 1
      // Predicated region
      $region13: #{acc_forward.4} parent=11 // pred_check
        %p118 = pneg %p56
      $region14: #{acc_forward.4} parent=11 // pred_check_branch
        %120 = sbr.rel (%p118) target = $region16
      $region15: #{acc_forward.4} parent=11 // pred_region
        _
      $region16: #{acc_forward.4} parent=11 // pred_fallthru
        _
      // Predicated region
      $region17: #{acc_forward.4} parent=11 // pred_check
        %p121 = pneg %p77
      $region18: #{acc_forward.4} parent=11 // pred_check_branch
        %123 = sbr.rel (%p121) target = $region20
      $region19: #{acc_forward.4} parent=11 // pred_region
        _
      $region20: #{acc_forward.4} parent=11 // pred_fallthru
        _
    $region12: #{acc_forward.4} parent=5 // pred_fallthru
      _
    %p124 = scmp.lt.s32.totalorder %s9, 2
    // Predicated region
    $region21: #{acc_forward.4} parent=5 // pred_check
      %p125 = pneg %p124
    $region22: #{acc_forward.4} parent=5 // pred_check_branch
      %127 = sbr.rel (%p125) target = $region24
    $region23: #{acc_forward.4} parent=5 // pred_region
      // Predicated region
      $region25: #{acc_forward.4} parent=23 // pred_check
        %p128 = pneg %p29
      $region26: #{acc_forward.4} parent=23 // pred_check_branch
        %130 = sbr.rel (%p128) target = $region28
      $region27: #{acc_forward.4} parent=23 // pred_region
        %s131 = smul.u32 18, %s9
        %p132 = scmp.lt.s32.totalorder %s131, 35
        %s133 = scalar_select %p132, %s131, 35
        %s134 = smul.addr %s133, 2
        %s135 = smul.addr %s134, 4
        %s136 = scalar_lea.vmem %s0, %s135
        %s137 = smul.u32 18, %s9
      $region28: #{acc_forward.4} parent=23 // pred_fallthru
        _
    $region24: #{acc_forward.4} parent=5 // pred_fallthru
      _
    %p138 = scmp.le.s32.totalorder 1, %s9
    %p139 = scmp.lt.s32.totalorder %s9, 3
    %p140 = pnand %p138, %p139
    %p141 = pneg %p140
    // Predicated region
    $region29: #{acc_forward.4} parent=5 // pred_check
      _
    $region30: #{acc_forward.4} parent=5 // pred_check_branch
      %143 = sbr.rel (%p140) target = $region32
    $region31: #{acc_forward.4} parent=5 // pred_region
      %s144 = ssub.s32 %s9, 1
      %s145 = smul.u32 18, %s14
      %p146 = scmp.lt.s32.totalorder %s145, 35
      %s147 = scalar_select %p146, %s145, 35
      %s148 = smul.addr %s147, 2
      %s149 = smul.addr %s148, 4
      %s150 = scalar_lea.vmem %s0, %s149
      %p151 = pneg %p35
      %p152 = pneg %p32
      %p153 = pneg %p56
      %p154 = pneg %p53
      %p155 = pneg %p77
      %p156 = pneg %p74
      %p157 = pneg %p103
      %p158 = pneg %p100
      %s159 = smul.u32 18, %s14
      %p160 = scmp.lt.s32.totalorder %s159, 35
      %s161 = scalar_select %p160, %s159, 35
      %s162 = smul.addr %s161, 4
      %s163 = scalar_lea.vmem %s3, %s162
      %s164 = smul.u32 18, %s14
      %p165 = scmp.lt.s32.totalorder %s164, 35
      %s166 = scalar_select %p165, %s164, 35
      %s167 = smul.addr %s166, 2
      %s168 = smul.addr %s167, 4
      %s169 = scalar_lea.vmem %s0, %s168
      %s170 = smul.u32 18, %s14
      %s171 = smul.u32 18, %s14
      %p172 = scmp.lt.s32.totalorder %s171, 35
      %s173 = scalar_select %p172, %s171, 35
      %s174 = smul.addr %s173, 4
      %s175 = scalar_lea.vmem %s3, %s174
      %s176 = smul.u32 18, %s14
      %v178 = vld [vmem:[%s169] sm:$0xff]
      %v179 = vld [vmem:[%s169 + $0x8] sm:$0xff]
      %v180 = vld [vmem:[%s169 + $0x10] sm:$0xff]
      %v181 = vld [vmem:[%s169 + $0x18] sm:$0xff]
      %v182 = vld [vmem:[%s169 + $0x20] sm:$0xff]
      %v183 = vld [vmem:[%s169 + $0x28] sm:$0xff]
      %v184 = vld [vmem:[%s169 + $0x30] sm:$0xff]
      %v185 = vld [vmem:[%s169 + $0x38] sm:$0xff]
      %v186 = vld [vmem:[%s169 + $0x40] sm:$0xff]
      %v187 = vld [vmem:[%s169 + $0x48] sm:$0xff]
      %v188 = vld [vmem:[%s169 + $0x50] sm:$0xff]
      %v189 = vld [vmem:[%s169 + $0x58] sm:$0xff]
      %v190 = vld [vmem:[%s169 + $0x60] sm:$0xff]
      %v191 = vld [vmem:[%s169 + $0x68] sm:$0xff]
      %v192 = vld [vmem:[%s169 + $0x70] sm:$0xff]
      %v193 = vld [vmem:[%s169 + $0x78] sm:$0xff]
      %v194 = vld [vmem:[%s169 + $0x80] sm:$0xff]
      %v195 = vld [vmem:[%s169 + $0x88] sm:$0xff]
      %v196 = vld [vmem:[%s1] sm:$0xf]
      %v197 = vld [vmem:[%s1 + $0x4] sm:$0xf]
      %v198 = vld [vmem:[%s1 + $0x8] sm:$0xf]
      %v199 = vld [vmem:[%s1 + $0xc] sm:$0xf]
      %v200 = vld [vmem:[%s1 + $0x10] sm:$0xf]
      %v201 = vld [vmem:[%s1 + $0x14] sm:$0xf]
      %v202 = vld [vmem:[%s1 + $0x18] sm:$0xf]
      %v203 = vld [vmem:[%s1 + $0x1c] sm:$0xf]
      %v204 = vld [vmem:[%s1 + $0x20] sm:$0xf]
      %v205 = vld [vmem:[%s1 + $0x24] sm:$0xf]
      %v206 = vld [vmem:[%s1 + $0x28] sm:$0xf]
      %v207 = vld [vmem:[%s1 + $0x2c] sm:$0xf]
      %v208 = vld [vmem:[%s1 + $0x30] sm:$0xf]
      %v209 = vld [vmem:[%s1 + $0x34] sm:$0xf]
      %v210 = vld [vmem:[%s1 + $0x38] sm:$0xf]
      %v211 = vld [vmem:[%s1 + $0x3c] sm:$0xf]
      %v212 = vld [vmem:[%s1 + $0x40] sm:$0xf]
      %v213 = vld [vmem:[%s1 + $0x44] sm:$0xf]
      %v214 = vld [vmem:[%s1 + $0x48] sm:$0xf]
      %v215 = vld [vmem:[%s1 + $0x4c] sm:$0xf]
      %v216 = vld [vmem:[%s1 + $0x50] sm:$0xf]
      %v217 = vld [vmem:[%s1 + $0x54] sm:$0xf]
      %v218 = vld [vmem:[%s1 + $0x58] sm:$0xf]
      %v219 = vld [vmem:[%s1 + $0x5c] sm:$0xf]
      %v220 = vld [vmem:[%s1 + $0x60] sm:$0xf]
      %v221 = vld [vmem:[%s1 + $0x64] sm:$0xf]
      %v222 = vld [vmem:[%s1 + $0x68] sm:$0xf]
      %v223 = vld [vmem:[%s1 + $0x6c] sm:$0xf]
      %v224 = vld [vmem:[%s1 + $0x70] sm:$0xf]
      %v225 = vld [vmem:[%s1 + $0x74] sm:$0xf]
      %v226 = vld [vmem:[%s1 + $0x78] sm:$0xf]
      %v227 = vld [vmem:[%s1 + $0x7c] sm:$0xf]
      %v228 = vld [vmem:[%s2] sm:$0x1]
      %v230 = vlaneseq
      %v231 = vshrl.u32 %v230, 7
      %v232 = vsub.s32 0, %v231
      %v233 = vrot.slane %v228, %v232
      %v253 = vunpack.c.l.b16 %v178
      %v254 = vunpack.c.h.b16 %v178
      %v255 = vunpack.c.l.b16 %v179
      %v256 = vunpack.c.h.b16 %v179
      %v257 = vunpack.c.l.b16 %v180
      %v258 = vunpack.c.h.b16 %v180
      %v259 = vunpack.c.l.b16 %v181
      %v260 = vunpack.c.h.b16 %v181
      %v261 = vunpack.c.l.b16 %v182
      %v262 = vunpack.c.h.b16 %v182
      %v263 = vunpack.c.l.b16 %v183
      %v264 = vunpack.c.h.b16 %v183
      %v265 = vunpack.c.l.b16 %v184
      %v266 = vunpack.c.h.b16 %v184
      %v267 = vunpack.c.l.b16 %v185
      %v268 = vunpack.c.h.b16 %v185
      %v269 = vunpack.c.l.b16 %v186
      %v270 = vunpack.c.h.b16 %v186
      %v271 = vunpack.c.l.b16 %v187
      %v272 = vunpack.c.h.b16 %v187
      %v273 = vunpack.c.l.b16 %v188
      %v274 = vunpack.c.h.b16 %v188
      %v275 = vunpack.c.l.b16 %v189
      %v276 = vunpack.c.h.b16 %v189
      %v277 = vunpack.c.l.b16 %v190
      %v278 = vunpack.c.h.b16 %v190
      %v279 = vunpack.c.l.b16 %v191
      %v280 = vunpack.c.h.b16 %v191
      %v281 = vunpack.c.l.b16 %v192
      %v282 = vunpack.c.h.b16 %v192
      %v283 = vunpack.c.l.b16 %v193
      %v284 = vunpack.c.h.b16 %v193
      %v285 = vunpack.c.l.b16 %v194
      %v286 = vunpack.c.h.b16 %v194
      %v287 = vunpack.c.l.b16 %v195
      %v288 = vunpack.c.h.b16 %v195
      %v289 = vpack.c.b16 %v255, %v253
      %v290 = vpack.c.b16 %v256, %v254
      %v291 = vpack.c.b16 %v259, %v257
      %v292 = vpack.c.b16 %v260, %v258
      %v293 = vpack.c.b16 %v263, %v261
      %v294 = vpack.c.b16 %v264, %v262
      %v295 = vpack.c.b16 %v267, %v265
      %v296 = vpack.c.b16 %v268, %v266
      %v297 = vpack.c.b16 %v271, %v269
      %v298 = vpack.c.b16 %v272, %v270
      %v299 = vpack.c.b16 %v275, %v273
      %v300 = vpack.c.b16 %v276, %v274
      %v301 = vpack.c.b16 %v279, %v277
      %v302 = vpack.c.b16 %v280, %v278
      %v303 = vpack.c.b16 %v283, %v281
      %v304 = vpack.c.b16 %v284, %v282
      %v305 = vpack.c.b16 %v287, %v285
      %v306 = vpack.c.b16 %v288, %v286
      %v357 = vunpack.c.l.b16 %v196
      %v358 = vunpack.c.l.b16 %v197
      %v359 = vunpack.c.l.b16 %v198
      %v360 = vunpack.c.l.b16 %v199
      %v361 = vunpack.c.l.b16 %v200
      %v362 = vunpack.c.l.b16 %v201
      %v363 = vunpack.c.l.b16 %v202
      %v364 = vunpack.c.l.b16 %v203
      %v365 = vunpack.c.l.b16 %v204
      %v366 = vunpack.c.l.b16 %v205
      %v367 = vunpack.c.l.b16 %v206
      %v368 = vunpack.c.l.b16 %v207
      %v369 = vunpack.c.l.b16 %v208
      %v370 = vunpack.c.l.b16 %v209
      %v371 = vunpack.c.l.b16 %v210
      %v372 = vunpack.c.l.b16 %v211
      %v373 = vunpack.c.l.b16 %v212
      %v374 = vunpack.c.l.b16 %v213
      %v375 = vunpack.c.l.b16 %v214
      %v376 = vunpack.c.l.b16 %v215
      %v377 = vunpack.c.l.b16 %v216
      %v378 = vunpack.c.l.b16 %v217
      %v379 = vunpack.c.l.b16 %v218
      %v380 = vunpack.c.l.b16 %v219
      %v381 = vunpack.c.l.b16 %v220
      %v382 = vunpack.c.l.b16 %v221
      %v383 = vunpack.c.l.b16 %v222
      %v384 = vunpack.c.l.b16 %v223
      %v385 = vunpack.c.l.b16 %v224
      %v386 = vunpack.c.l.b16 %v225
      %v387 = vunpack.c.l.b16 %v226
      %v388 = vunpack.c.l.b16 %v227
      %v389 = vpack.c.b16 %v358, %v357
      %v390 = vpack.c.b16 %v360, %v359
      %v391 = vpack.c.b16 %v362, %v361
      %v392 = vpack.c.b16 %v364, %v363
      %v393 = vpack.c.b16 %v366, %v365
      %v394 = vpack.c.b16 %v368, %v367
      %v395 = vpack.c.b16 %v370, %v369
      %v396 = vpack.c.b16 %v372, %v371
      %v397 = vpack.c.b16 %v374, %v373
      %v398 = vpack.c.b16 %v376, %v375
      %v399 = vpack.c.b16 %v378, %v377
      %v400 = vpack.c.b16 %v380, %v379
      %v401 = vpack.c.b16 %v382, %v381
      %v402 = vpack.c.b16 %v384, %v383
      %v403 = vpack.c.b16 %v386, %v385
      %v404 = vpack.c.b16 %v388, %v387
      %421 = vmatprep.subr.bf16.mxu0 0
      %422 = vmatpush1.bf16.msra.mxu0 %v389
      %423 = vmatprep.subr.bf16.mxu0 0
      %424 = vmatpush1.bf16.msra.mxu0 %v390
      %425 = vmatprep.subr.bf16.mxu0 0
      %426 = vmatpush1.bf16.msra.mxu0 %v391
      %427 = vmatprep.subr.bf16.mxu0 0
      %428 = vmatpush1.bf16.msra.mxu0 %v392
      %429 = vmatprep.subr.bf16.mxu0 0
      %430 = vmatpush1.bf16.msra.mxu0 %v393
      %431 = vmatprep.subr.bf16.mxu0 0
      %432 = vmatpush1.bf16.msra.mxu0 %v394
      %433 = vmatprep.subr.bf16.mxu0 0
      %434 = vmatpush1.bf16.msra.mxu0 %v395
      %435 = vmatprep.subr.bf16.mxu0 0
      %436 = vmatpush1.bf16.msra.mxu0 %v396
      %437 = vmatprep.subr.bf16.mxu0 0
      %438 = vmatpush1.bf16.msra.mxu0 %v397
      %439 = vmatprep.subr.bf16.mxu0 0
      %440 = vmatpush1.bf16.msra.mxu0 %v398
      %441 = vmatprep.subr.bf16.mxu0 0
      %442 = vmatpush1.bf16.msra.mxu0 %v399
      %443 = vmatprep.subr.bf16.mxu0 0
      %444 = vmatpush1.bf16.msra.mxu0 %v400
      %445 = vmatprep.subr.bf16.mxu0 0
      %446 = vmatpush1.bf16.msra.mxu0 %v401
      %447 = vmatprep.subr.bf16.mxu0 0
      %448 = vmatpush1.bf16.msra.mxu0 %v402
      %449 = vmatprep.subr.bf16.mxu0 0
      %450 = vmatpush1.bf16.msra.mxu0 %v403
      %451 = vmatprep.subr.bf16.mxu0 0
      %452 = vmatpush1.bf16.msra.mxu0 %v404
      %453 = vmatprep.mubr.bf16.mxu0 %v290
      %454 = vmatmul.mubr.bf16.gmra.mrb[0].mxu0 %v289
      %v455 = vpop.f32.mrb[0].mxu0
      %v456 = vadd.f32 %v233, %v455
      %v457 = vpop.f32.mrb[0].mxu0
      %v458 = vpop.f32.mrb[0].mxu0
      %v459 = vadd.f32 %v233, %v458
      %v460 = vpop.f32.mrb[0].mxu0
      %461 = vmatprep.mubr.bf16.mxu0 %v292
      %462 = vmatmul.mubr.bf16.gmra.mrb[0].mxu0 %v291
      %v463 = vpop.f32.mrb[0].mxu0
      %v464 = vadd.f32 %v233, %v463
      %v465 = vpop.f32.mrb[0].mxu0
      %v466 = vpop.f32.mrb[0].mxu0
      %v467 = vadd.f32 %v233, %v466
      %v468 = vpop.f32.mrb[0].mxu0
      %469 = vmatprep.mubr.bf16.mxu0 %v294
      %470 = vmatmul.mubr.bf16.gmra.mrb[0].mxu0 %v293
      %v471 = vpop.f32.mrb[0].mxu0
      %v472 = vadd.f32 %v233, %v471
      %v473 = vpop.f32.mrb[0].mxu0
      %v474 = vpop.f32.mrb[0].mxu0
      %v475 = vadd.f32 %v233, %v474
      %v476 = vpop.f32.mrb[0].mxu0
      %477 = vmatprep.mubr.bf16.mxu0 %v296
      %478 = vmatmul.mubr.bf16.gmra.mrb[0].mxu0 %v295
      %v479 = vpop.f32.mrb[0].mxu0
      %v480 = vadd.f32 %v233, %v479
      %v481 = vpop.f32.mrb[0].mxu0
      %v482 = vpop.f32.mrb[0].mxu0
      %v483 = vadd.f32 %v233, %v482
      %v484 = vpop.f32.mrb[0].mxu0
      %485 = vmatprep.mubr.bf16.mxu0 %v298
      %486 = vmatmul.mubr.bf16.gmra.mrb[0].mxu0 %v297
      %v487 = vpop.f32.mrb[0].mxu0
      %v488 = vadd.f32 %v233, %v487
      %v489 = vpop.f32.mrb[0].mxu0
      %v490 = vpop.f32.mrb[0].mxu0
      %v491 = vadd.f32 %v233, %v490
      %v492 = vpop.f32.mrb[0].mxu0
      %493 = vmatprep.mubr.bf16.mxu0 %v300
      %494 = vmatmul.mubr.bf16.gmra.mrb[0].mxu0 %v299
      %v495 = vpop.f32.mrb[0].mxu0
      %v496 = vadd.f32 %v233, %v495
      %v497 = vpop.f32.mrb[0].mxu0
      %v498 = vpop.f32.mrb[0].mxu0
      %v499 = vadd.f32 %v233, %v498
      %v500 = vpop.f32.mrb[0].mxu0
      %501 = vmatprep.mubr.bf16.mxu0 %v302
      %502 = vmatmul.mubr.bf16.gmra.mrb[0].mxu0 %v301
      %v503 = vpop.f32.mrb[0].mxu0
      %v504 = vadd.f32 %v233, %v503
      %v505 = vpop.f32.mrb[0].mxu0
      %v506 = vpop.f32.mrb[0].mxu0
      %v507 = vadd.f32 %v233, %v506
      %v508 = vpop.f32.mrb[0].mxu0
      %509 = vmatprep.mubr.bf16.mxu0 %v304
      %510 = vmatmul.mubr.bf16.gmra.mrb[0].mxu0 %v303
      %v511 = vpop.f32.mrb[0].mxu0
      %v512 = vadd.f32 %v233, %v511
      %v513 = vpop.f32.mrb[0].mxu0
      %v514 = vpop.f32.mrb[0].mxu0
      %v515 = vadd.f32 %v233, %v514
      %v516 = vpop.f32.mrb[0].mxu0
      %517 = vmatprep.mubr.bf16.mxu0 %v306
      %518 = vmatmul.mubr.bf16.gmra.mrb[0].mxu0 %v305
      %v519 = vpop.f32.mrb[0].mxu0
      %v520 = vadd.f32 %v233, %v519
      %v521 = vpop.f32.mrb[0].mxu0
      %v522 = vpop.f32.mrb[0].mxu0
      %v523 = vadd.f32 %v233, %v522
      %v524 = vpop.f32.mrb[0].mxu0
      %525 = vdwg.mxu0
      %v526 = vmax.f32 %v456, 0.0
      %v527 = vmax.f32 %v459, 0.0
      %v528 = vmax.f32 %v464, 0.0
      %v529 = vmax.f32 %v467, 0.0
      %v530 = vmax.f32 %v472, 0.0
      %v531 = vmax.f32 %v475, 0.0
      %v532 = vmax.f32 %v480, 0.0
      %v533 = vmax.f32 %v483, 0.0
      %v534 = vmax.f32 %v488, 0.0
      %v535 = vmax.f32 %v491, 0.0
      %v536 = vmax.f32 %v496, 0.0
      %v537 = vmax.f32 %v499, 0.0
      %v538 = vmax.f32 %v504, 0.0
      %v539 = vmax.f32 %v507, 0.0
      %v540 = vmax.f32 %v512, 0.0
      %v541 = vmax.f32 %v515, 0.0
      %v542 = vmax.f32 %v520, 0.0
      %v543 = vmax.f32 %v523, 0.0
      %v544 = vpack.c.bf16 %v527, %v526
      %v545 = vpack.c.bf16 %v529, %v528
      %v546 = vpack.c.bf16 %v531, %v530
      %v547 = vpack.c.bf16 %v533, %v532
      %v548 = vpack.c.bf16 %v535, %v534
      %v549 = vpack.c.bf16 %v537, %v536
      %v550 = vpack.c.bf16 %v539, %v538
      %v551 = vpack.c.bf16 %v541, %v540
      %v552 = vpack.c.bf16 %v543, %v542
      %v562 = vunpack.c.l.b16 %v544
      %v563 = vunpack.c.h.b16 %v544
      %v564 = vunpack.c.l.b16 %v545
      %v565 = vunpack.c.h.b16 %v545
      %v566 = vunpack.c.l.b16 %v546
      %v567 = vunpack.c.h.b16 %v546
      %v568 = vunpack.c.l.b16 %v547
      %v569 = vunpack.c.h.b16 %v547
      %v570 = vunpack.c.l.b16 %v548
      %v571 = vunpack.c.h.b16 %v548
      %v572 = vunpack.c.l.b16 %v549
      %v573 = vunpack.c.h.b16 %v549
      %v574 = vunpack.c.l.b16 %v550
      %v575 = vunpack.c.h.b16 %v550
      %v576 = vunpack.c.l.b16 %v551
      %v577 = vunpack.c.h.b16 %v551
      %v578 = vunpack.c.l.b16 %v552
      %v579 = vunpack.c.h.b16 %v552
      %v580 = vpack.c.b16 %v562, %v562
      %v581 = vpack.c.b16 %v563, %v563
      %v582 = vpack.c.b16 %v564, %v564
      %v583 = vpack.c.b16 %v565, %v565
      %v584 = vpack.c.b16 %v566, %v566
      %v585 = vpack.c.b16 %v567, %v567
      %v586 = vpack.c.b16 %v568, %v568
      %v587 = vpack.c.b16 %v569, %v569
      %v588 = vpack.c.b16 %v570, %v570
      %v589 = vpack.c.b16 %v571, %v571
      %v590 = vpack.c.b16 %v572, %v572
      %v591 = vpack.c.b16 %v573, %v573
      %v592 = vpack.c.b16 %v574, %v574
      %v593 = vpack.c.b16 %v575, %v575
      %v594 = vpack.c.b16 %v576, %v576
      %v595 = vpack.c.b16 %v577, %v577
      %v596 = vpack.c.b16 %v578, %v578
      %v597 = vpack.c.b16 %v579, %v579
      %vm616 = vcmask 257024
      %617 = vst.msk [vmem:[%s175] sm:$0xf] %vm616, %v580
      %618 = vst.msk [vmem:[%s175 + $0x4] sm:$0xf] %vm616, %v581
      %619 = vst.msk [vmem:[%s175 + $0x8] sm:$0xf] %vm616, %v582
      %620 = vst.msk [vmem:[%s175 + $0xc] sm:$0xf] %vm616, %v583
      %621 = vst.msk [vmem:[%s175 + $0x10] sm:$0xf] %vm616, %v584
      %622 = vst.msk [vmem:[%s175 + $0x14] sm:$0xf] %vm616, %v585
      %623 = vst.msk [vmem:[%s175 + $0x18] sm:$0xf] %vm616, %v586
      %624 = vst.msk [vmem:[%s175 + $0x1c] sm:$0xf] %vm616, %v587
      %625 = vst.msk [vmem:[%s175 + $0x20] sm:$0xf] %vm616, %v588
      %626 = vst.msk [vmem:[%s175 + $0x24] sm:$0xf] %vm616, %v589
      %627 = vst.msk [vmem:[%s175 + $0x28] sm:$0xf] %vm616, %v590
      %628 = vst.msk [vmem:[%s175 + $0x2c] sm:$0xf] %vm616, %v591
      %629 = vst.msk [vmem:[%s175 + $0x30] sm:$0xf] %vm616, %v592
      %630 = vst.msk [vmem:[%s175 + $0x34] sm:$0xf] %vm616, %v593
      %631 = vst.msk [vmem:[%s175 + $0x38] sm:$0xf] %vm616, %v594
      %632 = vst.msk [vmem:[%s175 + $0x3c] sm:$0xf] %vm616, %v595
      %633 = vst.msk [vmem:[%s175 + $0x40] sm:$0xf] %vm616, %v596
      %634 = vst.msk [vmem:[%s175 + $0x44] sm:$0xf] %vm616, %v597
      %s635 = smul.u32 18, %s14
      %p636 = scmp.lt.s32.totalorder %s635, 35
      %s637 = scalar_select %p636, %s635, 35
      %s638 = smul.addr %s637, 4
      %s639 = scalar_lea.vmem %s3, %s638
      // Predicated region
      $region33: #{acc_forward.4} parent=31 // pred_check
        %p640 = pneg %p100
      $region34: #{acc_forward.4} parent=31 // pred_check_branch
        %642 = sbr.rel (%p640) target = $region36
      $region35: #{acc_forward.4} parent=31 // pred_region
        %s643 = smul.u32 18, %s14
      $region36: #{acc_forward.4} parent=31 // pred_fallthru
        _
    $region32: #{acc_forward.4} parent=5 // pred_fallthru
      _
    %p644 = scmp.le.s32.totalorder 2, %s9
    // Predicated region
    $region37: #{acc_forward.4} parent=5 // pred_check
      %p645 = pneg %p644
    $region38: #{acc_forward.4} parent=5 // pred_check_branch
      %647 = sbr.rel (%p645) target = $region40
    $region39: #{acc_forward.4} parent=5 // pred_region
      %s648 = ssub.s32 %s9, 2
      // Predicated region
      $region41: #{acc_forward.4} parent=39 // pred_check
        %p649 = pneg %p106
      $region42: #{acc_forward.4} parent=39 // pred_check_branch
        %651 = sbr.rel (%p649) target = $region44
      $region43: #{acc_forward.4} parent=39 // pred_region
        %s652 = smul.u32 18, %s15
        %p653 = scmp.lt.s32.totalorder %s652, 35
        %s654 = scalar_select %p653, %s652, 35
        %s655 = smul.addr %s654, 4
        %s656 = scalar_lea.vmem %s3, %s655
      $region44: #{acc_forward.4} parent=39 // pred_fallthru
        _
    $region40: #{acc_forward.4} parent=5 // pred_fallthru
      _
  $region6: #{acc_forward.4} parent=0 // loop_footer
    %s13 = sadd.s32 1, %s9
  $region7: #{acc_forward.4} parent=0 // loop_footer_branch
    %8 = sbr.rel target = $region3
  $region8: #{acc_forward.4} parent=0 // loop_exit
    _

// kernel: acc_forward.5
$region0: #{acc_forward.5}
  #allocation0 [shape = 'u32[]', space=smem, size = 0x4, offset = 0x4, fixed_abs, tag = 'smem constant byte address 0x4 - core index']
  #allocation1 [shape = 'u32[144,128]{1,0:T(1,128)}', space=vmem, size = 0x12000, scoped, tag = 'internal scratch']
  %s0 = inlined_call_operand.vmem [shape: bf16[50,512], index: 0, kind: input, shape index: {}]
  %s1 = inlined_call_operand.vmem [shape: bf16[512,64], index: 1, kind: input, shape index: {}]
  %s2 = inlined_call_operand.vmem [shape: f32[1,64], index: 2, kind: input, shape index: {}]
  %s3 = inlined_call_operand.vmem [shape: bf16[50,64], index: 3, kind: output, shape index: {}]
  %s4 = sld [smem:[#allocation0]]
  $region89: #{acc_forward.5} parent=0
    _
  %s6 = ssub.s32 1, %s4
  %s7 = scalar_select 0, %s6, %s4
  $region1: #{acc_forward.5} parent=0
    #allocation2 [shape = 'u8[16384]{0}', space=vmem, size = 0x4000, scoped, tag = 'output window, operand 0']
    loop: start=0, step=1, limit=4
    $region2: #{acc_forward.5} parent=1 // loop_pre_header
      _
    $region3: #{acc_forward.5} parent=1 // loop_header
      %s9 = sphi 0, %s13
      %p10 = scmp.ge.s32.totalorder %s9, 4
      %s19 = sphi 0, %s21
      %s22 = sphi 0, %s19
      %s23 = sphi 0, %s22
      %s39 = sphi 0, %s23
      %s43 = sphi 0, %s43
      %s45 = sphi 0, %s43
      %s46 = sphi 0, %s45
      %s60 = sphi 0, %s46
      %s64 = sphi 0, %s64
      %s66 = sphi 0, %s64
      %s67 = sphi 0, %s66
      %s81 = sphi 0, %s67
      %s87 = sphi 0, %s89
      %s90 = sphi 0, %s87
      %s91 = sphi 0, %s90
      %s107 = sphi 0, %s91
    $region4: #{acc_forward.5} parent=1 // loop_header_branch
      %12 = sbr.rel (%p10) target = $region8
    $region5: #{acc_forward.5} parent=1 // loop_body
      %s14 = ssub.s32 %s9, 1
      %s15 = ssub.s32 %s9, 2
      %s16 = sadd.s32 %s9, 1
      %s17 = ssub.s32 %s9, %s16
      %p18 = scmp.eq.s32.totalorder %s17, 0
      %s20 = sadd.s32 %s19, 1
      %s21 = scalar_select %p18, %s19, %s20
      %p24 = pneg %p18
      %p25 = scmp.eq.s32.totalorder %s9, 1
      %p26 = por %p24, %p25
      %p27 = scmp.ne.s32.totalorder %s19, %s22
      %p28 = scmp.eq.s32.totalorder %s9, 0
      %p29 = por %p27, %p28
      %p30 = scmp.ne.s32.totalorder %s19, %s22
      %p31 = scmp.eq.s32.totalorder %s14, 1
      %p32 = por %p30, %p31
      %p33 = scmp.ne.s32.totalorder %s22, %s23
      %p34 = scmp.eq.s32.totalorder %s14, 0
      %p35 = por %p33, %p34
      %p36 = scmp.ne.s32.totalorder %s22, %s23
      %p37 = scmp.eq.s32.totalorder %s15, 1
      %p38 = por %p36, %p37
      %p40 = scmp.ne.s32.totalorder %s23, %s39
      %p41 = scmp.eq.s32.totalorder %s15, 0
      %p42 = por %p40, %p41
      %s44 = sadd.s32 %s43, 1
      %p47 = scmp.eq.s32.totalorder %s9, 1
      %p48 = scmp.ne.s32.totalorder %s43, %s45
      %p49 = scmp.eq.s32.totalorder %s9, 0
      %p50 = por %p48, %p49
      %p51 = scmp.ne.s32.totalorder %s43, %s45
      %p52 = scmp.eq.s32.totalorder %s14, 1
      %p53 = por %p51, %p52
      %p54 = scmp.ne.s32.totalorder %s45, %s46
      %p55 = scmp.eq.s32.totalorder %s14, 0
      %p56 = por %p54, %p55
      %p57 = scmp.ne.s32.totalorder %s45, %s46
      %p58 = scmp.eq.s32.totalorder %s15, 1
      %p59 = por %p57, %p58
      %p61 = scmp.ne.s32.totalorder %s46, %s60
      %p62 = scmp.eq.s32.totalorder %s15, 0
      %p63 = por %p61, %p62
      %s65 = sadd.s32 %s64, 1
      %p68 = scmp.eq.s32.totalorder %s9, 1
      %p69 = scmp.ne.s32.totalorder %s64, %s66
      %p70 = scmp.eq.s32.totalorder %s9, 0
      %p71 = por %p69, %p70
      %p72 = scmp.ne.s32.totalorder %s64, %s66
      %p73 = scmp.eq.s32.totalorder %s14, 1
      %p74 = por %p72, %p73
      %p75 = scmp.ne.s32.totalorder %s66, %s67
      %p76 = scmp.eq.s32.totalorder %s14, 0
      %p77 = por %p75, %p76
      %p78 = scmp.ne.s32.totalorder %s66, %s67
      %p79 = scmp.eq.s32.totalorder %s15, 1
      %p80 = por %p78, %p79
      %p82 = scmp.ne.s32.totalorder %s67, %s81
      %p83 = scmp.eq.s32.totalorder %s15, 0
      %p84 = por %p82, %p83
      %s85 = ssub.s32 %s9, %s16
      %p86 = scmp.eq.s32.totalorder %s85, 0
      %s88 = sadd.s32 %s87, 1
      %s89 = scalar_select %p86, %s87, %s88
      %p92 = pneg %p86
      %p93 = scmp.eq.s32.totalorder %s9, 1
      %p94 = por %p92, %p93
      %p95 = scmp.ne.s32.totalorder %s87, %s90
      %p96 = scmp.eq.s32.totalorder %s9, 0
      %p97 = por %p95, %p96
      %p98 = scmp.ne.s32.totalorder %s87, %s90
      %p99 = scmp.eq.s32.totalorder %s14, 1
      %p100 = por %p98, %p99
      %p101 = scmp.ne.s32.totalorder %s90, %s91
      %p102 = scmp.eq.s32.totalorder %s14, 0
      %p103 = por %p101, %p102
      %p104 = scmp.ne.s32.totalorder %s90, %s91
      %p105 = scmp.eq.s32.totalorder %s15, 1
      %p106 = por %p104, %p105
      %p108 = scmp.ne.s32.totalorder %s91, %s107
      %p109 = scmp.eq.s32.totalorder %s15, 0
      %p110 = por %p108, %p109
      %p111 = scmp.le.s32.totalorder 1, %s9
      %p112 = scmp.lt.s32.totalorder %s9, 3
      %p113 = pnand %p111, %p112
      %p114 = pneg %p113
      // Predicated region
      $region9: #{acc_forward.5} parent=5 // pred_check
        _
      $region10: #{acc_forward.5} parent=5 // pred_check_branch
        %116 = sbr.rel (%p113) target = $region12
      $region11: #{acc_forward.5} parent=5 // pred_region
        %s117 = ssub.s32 %s9, 1
        // Predicated region
        $region13: #{acc_forward.5} parent=11 // pred_check
          %p118 = pneg %p56
        $region14: #{acc_forward.5} parent=11 // pred_check_branch
          %120 = sbr.rel (%p118) target = $region16
        $region15: #{acc_forward.5} parent=11 // pred_region
          _
        $region16: #{acc_forward.5} parent=11 // pred_fallthru
          _
        // Predicated region
        $region17: #{acc_forward.5} parent=11 // pred_check
          %p121 = pneg %p77
        $region18: #{acc_forward.5} parent=11 // pred_check_branch
          %123 = sbr.rel (%p121) target = $region20
        $region19: #{acc_forward.5} parent=11 // pred_region
          _
        $region20: #{acc_forward.5} parent=11 // pred_fallthru
          _
      $region12: #{acc_forward.5} parent=5 // pred_fallthru
        _
      %p124 = scmp.lt.s32.totalorder %s9, 2
      // Predicated region
      $region21: #{acc_forward.5} parent=5 // pred_check
        %p125 = pneg %p124
      $region22: #{acc_forward.5} parent=5 // pred_check_branch
        %127 = sbr.rel (%p125) target = $region24
      $region23: #{acc_forward.5} parent=5 // pred_region
        // Predicated region
        $region25: #{acc_forward.5} parent=23 // pred_check
          %p128 = pneg %p29
        $region26: #{acc_forward.5} parent=23 // pred_check_branch
          %130 = sbr.rel (%p128) target = $region28
        $region27: #{acc_forward.5} parent=23 // pred_region
          %s131 = smul.u32 4, %s9
          %s132 = ssub.s32 7, %s131
          %p133 = scmp.lt.s32.totalorder %s132, 4
          %s134 = scalar_select %p133, %s132, 4
          %s135 = smul.u32 64, %s134
          %s136 = smul.u32 %s135, 4
          %p137 = scmp.lt.s32.totalorder %s131, 6
          %s138 = scalar_select %p137, %s131, 6
          %s139 = smul.addr %s138, 4
          %s140 = smul.addr %s139, 4
          %s141 = scalar_lea.vmem %s0, %s140
          %s142 = smul.u32 4, %s9
          %s143 = ssub.s32 7, %s142
          %p144 = scmp.lt.s32.totalorder %s143, 4
          %s145 = scalar_select %p144, %s143, 4
          %s146 = smul.u32 64, %s145
          %s147 = smul.u32 %s146, 4
        $region28: #{acc_forward.5} parent=23 // pred_fallthru
          _
      $region24: #{acc_forward.5} parent=5 // pred_fallthru
        _
      %p148 = scmp.le.s32.totalorder 1, %s9
      %p149 = scmp.lt.s32.totalorder %s9, 3
      %p150 = pnand %p148, %p149
      %p151 = pneg %p150
      // Predicated region
      $region29: #{acc_forward.5} parent=5 // pred_check
        _
      $region30: #{acc_forward.5} parent=5 // pred_check_branch
        %153 = sbr.rel (%p150) target = $region32
      $region31: #{acc_forward.5} parent=5 // pred_region
        %s154 = ssub.s32 %s9, 1
        %s155 = smul.u32 4, %s14
        %s156 = ssub.s32 7, %s155
        %p157 = scmp.lt.s32.totalorder %s156, 4
        %s158 = scalar_select %p157, %s156, 4
        %s159 = smul.u32 64, %s158
        %s160 = smul.u32 %s159, 4
        %p161 = scmp.lt.s32.totalorder %s155, 6
        %s162 = scalar_select %p161, %s155, 6
        %s163 = smul.addr %s162, 4
        %s164 = smul.addr %s163, 4
        %s165 = scalar_lea.vmem %s0, %s164
        %p166 = pneg %p35
        %p167 = pneg %p32
        %p168 = pneg %p56
        %p169 = pneg %p53
        %p170 = pneg %p77
        %p171 = pneg %p74
        %p172 = pneg %p103
        %p173 = pneg %p100
        %s174 = sand.u32 %s90, 1
        %s175 = sand.u32 %s90, 1
        %s176 = smul.addr %s175, 16
        %s177 = scalar_lea.vmem [#allocation2], %s176
        %s178 = smul.u32 4, %s14
        %s179 = ssub.s32 7, %s178
        %p180 = scmp.lt.s32.totalorder %s179, 4
        %s181 = scalar_select %p180, %s179, 4
        %s182 = smul.u32 64, %s181
        %s183 = smul.u32 %s182, 4
        %p184 = scmp.lt.s32.totalorder %s178, 6
        %s185 = scalar_select %p184, %s178, 6
        %s186 = smul.addr %s185, 4
        %s187 = smul.addr %s186, 4
        %s188 = scalar_lea.vmem %s0, %s187
        %s189 = smul.u32 4, %s14
        %s190 = ssub.s32 7, %s189
        %p191 = scmp.lt.s32.totalorder %s190, 4
        %s192 = scalar_select %p191, %s190, 4
        %s193 = smul.u32 64, %s192
        %s194 = smul.u32 %s193, 4
        %s195 = smul.u32 4, %s14
        %s196 = ssub.s32 7, %s195
        %p197 = scmp.lt.s32.totalorder %s196, 4
        %s198 = scalar_select %p197, %s196, 4
        %s199 = smul.u32 64, %s198
        %v201 = vld [vmem:[%s188] sm:$0xff]
        %v202 = vld [vmem:[%s188 + $0x8] sm:$0xff]
        %v203 = vld [vmem:[%s188 + $0x10] sm:$0xff]
        %v204 = vld [vmem:[%s188 + $0x18] sm:$0xff]
        %v205 = vld [vmem:[%s188 + $0x20] sm:$0xff]
        %v206 = vld [vmem:[%s188 + $0x28] sm:$0xff]
        %v207 = vld [vmem:[%s188 + $0x30] sm:$0xff]
        %v208 = vld [vmem:[%s188 + $0x38] sm:$0xff]
        %v209 = vld [vmem:[%s1] sm:$0xf]
        %v210 = vld [vmem:[%s1 + $0x4] sm:$0xf]
        %v211 = vld [vmem:[%s1 + $0x8] sm:$0xf]
        %v212 = vld [vmem:[%s1 + $0xc] sm:$0xf]
        %v213 = vld [vmem:[%s1 + $0x10] sm:$0xf]
        %v214 = vld [vmem:[%s1 + $0x14] sm:$0xf]
        %v215 = vld [vmem:[%s1 + $0x18] sm:$0xf]
        %v216 = vld [vmem:[%s1 + $0x1c] sm:$0xf]
        %v217 = vld [vmem:[%s1 + $0x20] sm:$0xf]
        %v218 = vld [vmem:[%s1 + $0x24] sm:$0xf]
        %v219 = vld [vmem:[%s1 + $0x28] sm:$0xf]
        %v220 = vld [vmem:[%s1 + $0x2c] sm:$0xf]
        %v221 = vld [vmem:[%s1 + $0x30] sm:$0xf]
        %v222 = vld [vmem:[%s1 + $0x34] sm:$0xf]
        %v223 = vld [vmem:[%s1 + $0x38] sm:$0xf]
        %v224 = vld [vmem:[%s1 + $0x3c] sm:$0xf]
        %v225 = vld [vmem:[%s1 + $0x40] sm:$0xf]
        %v226 = vld [vmem:[%s1 + $0x44] sm:$0xf]
        %v227 = vld [vmem:[%s1 + $0x48] sm:$0xf]
        %v228 = vld [vmem:[%s1 + $0x4c] sm:$0xf]
        %v229 = vld [vmem:[%s1 + $0x50] sm:$0xf]
        %v230 = vld [vmem:[%s1 + $0x54] sm:$0xf]
        %v231 = vld [vmem:[%s1 + $0x58] sm:$0xf]
        %v232 = vld [vmem:[%s1 + $0x5c] sm:$0xf]
        %v233 = vld [vmem:[%s1 + $0x60] sm:$0xf]
        %v234 = vld [vmem:[%s1 + $0x64] sm:$0xf]
        %v235 = vld [vmem:[%s1 + $0x68] sm:$0xf]
        %v236 = vld [vmem:[%s1 + $0x6c] sm:$0xf]
        %v237 = vld [vmem:[%s1 + $0x70] sm:$0xf]
        %v238 = vld [vmem:[%s1 + $0x74] sm:$0xf]
        %v239 = vld [vmem:[%s1 + $0x78] sm:$0xf]
        %v240 = vld [vmem:[%s1 + $0x7c] sm:$0xf]
        %v241 = vld [vmem:[%s1 + $0x80] sm:$0xf]
        %v242 = vld [vmem:[%s1 + $0x84] sm:$0xf]
        %v243 = vld [vmem:[%s1 + $0x88] sm:$0xf]
        %v244 = vld [vmem:[%s1 + $0x8c] sm:$0xf]
        %v245 = vld [vmem:[%s1 + $0x90] sm:$0xf]
        %v246 = vld [vmem:[%s1 + $0x94] sm:$0xf]
        %v247 = vld [vmem:[%s1 + $0x98] sm:$0xf]
        %v248 = vld [vmem:[%s1 + $0x9c] sm:$0xf]
        %v249 = vld [vmem:[%s1 + $0xa0] sm:$0xf]
        %v250 = vld [vmem:[%s1 + $0xa4] sm:$0xf]
        %v251 = vld [vmem:[%s1 + $0xa8] sm:$0xf]
        %v252 = vld [vmem:[%s1 + $0xac] sm:$0xf]
        %v253 = vld [vmem:[%s1 + $0xb0] sm:$0xf]
        %v254 = vld [vmem:[%s1 + $0xb4] sm:$0xf]
        %v255 = vld [vmem:[%s1 + $0xb8] sm:$0xf]
        %v256 = vld [vmem:[%s1 + $0xbc] sm:$0xf]
        %v257 = vld [vmem:[%s1 + $0xc0] sm:$0xf]
        %v258 = vld [vmem:[%s1 + $0xc4] sm:$0xf]
        %v259 = vld [vmem:[%s1 + $0xc8] sm:$0xf]
        %v260 = vld [vmem:[%s1 + $0xcc] sm:$0xf]
        %v261 = vld [vmem:[%s1 + $0xd0] sm:$0xf]
        %v262 = vld [vmem:[%s1 + $0xd4] sm:$0xf]
        %v263 = vld [vmem:[%s1 + $0xd8] sm:$0xf]
        %v264 = vld [vmem:[%s1 + $0xdc] sm:$0xf]
        %v265 = vld [vmem:[%s1 + $0xe0] sm:$0xf]
        %v266 = vld [vmem:[%s1 + $0xe4] sm:$0xf]
        %v267 = vld [vmem:[%s1 + $0xe8] sm:$0xf]
        %v268 = vld [vmem:[%s1 + $0xec] sm:$0xf]
        %v269 = vld [vmem:[%s1 + $0xf0] sm:$0xf]
        %v270 = vld [vmem:[%s1 + $0xf4] sm:$0xf]
        %v271 = vld [vmem:[%s1 + $0xf8] sm:$0xf]
        %v272 = vld [vmem:[%s1 + $0xfc] sm:$0xf]
        %v273 = vld [vmem:[%s2] sm:$0x1]
        %v275 = vlaneseq
        %v276 = vshrl.u32 %v275, 7
        %v277 = vsub.s32 0, %v276
        %v278 = vrot.slane %v273, %v277
        %v288 = vunpack.c.l.b16 %v201
        %v289 = vunpack.c.h.b16 %v201
        %v290 = vunpack.c.l.b16 %v202
        %v291 = vunpack.c.h.b16 %v202
        %v292 = vunpack.c.l.b16 %v203
        %v293 = vunpack.c.h.b16 %v203
        %v294 = vunpack.c.l.b16 %v204
        %v295 = vunpack.c.h.b16 %v204
        %v296 = vunpack.c.l.b16 %v205
        %v297 = vunpack.c.h.b16 %v205
        %v298 = vunpack.c.l.b16 %v206
        %v299 = vunpack.c.h.b16 %v206
        %v300 = vunpack.c.l.b16 %v207
        %v301 = vunpack.c.h.b16 %v207
        %v302 = vunpack.c.l.b16 %v208
        %v303 = vunpack.c.h.b16 %v208
        %v304 = vpack.c.b16 %v292, %v288
        %v305 = vpack.c.b16 %v293, %v289
        %v306 = vpack.c.b16 %v294, %v290
        %v307 = vpack.c.b16 %v295, %v291
        %v308 = vpack.c.b16 %v300, %v296
        %v309 = vpack.c.b16 %v301, %v297
        %v310 = vpack.c.b16 %v302, %v298
        %v311 = vpack.c.b16 %v303, %v299
        %v384 = vunpack.c.l.b16 %v209
        %v385 = vunpack.c.l.b16 %v210
        %v386 = vunpack.c.l.b16 %v211
        %v387 = vunpack.c.l.b16 %v212
        %v388 = vunpack.c.l.b16 %v213
        %v389 = vunpack.c.l.b16 %v214
        %v390 = vunpack.c.l.b16 %v215
        %v391 = vunpack.c.l.b16 %v216
        %v392 = vunpack.c.l.b16 %v217
        %v393 = vunpack.c.l.b16 %v218
        %v394 = vunpack.c.l.b16 %v219
        %v395 = vunpack.c.l.b16 %v220
        %v396 = vunpack.c.l.b16 %v221
        %v397 = vunpack.c.l.b16 %v222
        %v398 = vunpack.c.l.b16 %v223
        %v399 = vunpack.c.l.b16 %v224
        %v400 = vunpack.c.l.b16 %v225
        %v401 = vunpack.c.l.b16 %v226
        %v402 = vunpack.c.l.b16 %v227
        %v403 = vunpack.c.l.b16 %v228
        %v404 = vunpack.c.l.b16 %v229
        %v405 = vunpack.c.l.b16 %v230
        %v406 = vunpack.c.l.b16 %v231
        %v407 = vunpack.c.l.b16 %v232
        %v408 = vunpack.c.l.b16 %v233
        %v409 = vunpack.c.l.b16 %v234
        %v410 = vunpack.c.l.b16 %v235
        %v411 = vunpack.c.l.b16 %v236
        %v412 = vunpack.c.l.b16 %v237
        %v413 = vunpack.c.l.b16 %v238
        %v414 = vunpack.c.l.b16 %v239
        %v415 = vunpack.c.l.b16 %v240
        %v416 = vunpack.c.l.b16 %v241
        %v417 = vunpack.c.l.b16 %v242
        %v418 = vunpack.c.l.b16 %v243
        %v419 = vunpack.c.l.b16 %v244
        %v420 = vunpack.c.l.b16 %v245
        %v421 = vunpack.c.l.b16 %v246
        %v422 = vunpack.c.l.b16 %v247
        %v423 = vunpack.c.l.b16 %v248
        %v424 = vunpack.c.l.b16 %v249
        %v425 = vunpack.c.l.b16 %v250
        %v426 = vunpack.c.l.b16 %v251
        %v427 = vunpack.c.l.b16 %v252
        %v428 = vunpack.c.l.b16 %v253
        %v429 = vunpack.c.l.b16 %v254
        %v430 = vunpack.c.l.b16 %v255
        %v431 = vunpack.c.l.b16 %v256
        %v432 = vunpack.c.l.b16 %v257
        %v433 = vunpack.c.l.b16 %v258
        %v434 = vunpack.c.l.b16 %v259
        %v435 = vunpack.c.l.b16 %v260
        %v436 = vunpack.c.l.b16 %v261
        %v437 = vunpack.c.l.b16 %v262
        %v438 = vunpack.c.l.b16 %v263
        %v439 = vunpack.c.l.b16 %v264
        %v440 = vunpack.c.l.b16 %v265
        %v441 = vunpack.c.l.b16 %v266
        %v442 = vunpack.c.l.b16 %v267
        %v443 = vunpack.c.l.b16 %v268
        %v444 = vunpack.c.l.b16 %v269
        %v445 = vunpack.c.l.b16 %v270
        %v446 = vunpack.c.l.b16 %v271
        %v447 = vunpack.c.l.b16 %v272
        %v448 = vpack.c.b16 %v385, %v384
        %v449 = vpack.c.b16 %v387, %v386
        %v450 = vpack.c.b16 %v389, %v388
        %v451 = vpack.c.b16 %v391, %v390
        %v452 = vpack.c.b16 %v393, %v392
        %v453 = vpack.c.b16 %v395, %v394
        %v454 = vpack.c.b16 %v397, %v396
        %v455 = vpack.c.b16 %v399, %v398
        %v456 = vpack.c.b16 %v401, %v400
        %v457 = vpack.c.b16 %v403, %v402
        %v458 = vpack.c.b16 %v405, %v404
        %v459 = vpack.c.b16 %v407, %v406
        %v460 = vpack.c.b16 %v409, %v408
        %v461 = vpack.c.b16 %v411, %v410
        %v462 = vpack.c.b16 %v413, %v412
        %v463 = vpack.c.b16 %v415, %v414
        %v464 = vpack.c.b16 %v417, %v416
        %v465 = vpack.c.b16 %v419, %v418
        %v466 = vpack.c.b16 %v421, %v420
        %v467 = vpack.c.b16 %v423, %v422
        %v468 = vpack.c.b16 %v425, %v424
        %v469 = vpack.c.b16 %v427, %v426
        %v470 = vpack.c.b16 %v429, %v428
        %v471 = vpack.c.b16 %v431, %v430
        %v472 = vpack.c.b16 %v433, %v432
        %v473 = vpack.c.b16 %v435, %v434
        %v474 = vpack.c.b16 %v437, %v436
        %v475 = vpack.c.b16 %v439, %v438
        %v476 = vpack.c.b16 %v441, %v440
        %v477 = vpack.c.b16 %v443, %v442
        %v478 = vpack.c.b16 %v445, %v444
        %v479 = vpack.c.b16 %v447, %v446
        %512 = vmatprep.subr.bf16.mxu0 0
        %513 = vmatpush1.bf16.msra.mxu0 %v448
        %514 = vmatprep.subr.bf16.mxu0 0
        %515 = vmatpush1.bf16.msra.mxu0 %v449
        %516 = vmatprep.subr.bf16.mxu0 0
        %517 = vmatpush1.bf16.msra.mxu0 %v450
        %518 = vmatprep.subr.bf16.mxu0 0
        %519 = vmatpush1.bf16.msra.mxu0 %v451
        %520 = vmatprep.subr.bf16.mxu0 0
        %521 = vmatpush1.bf16.msra.mxu0 %v452
        %522 = vmatprep.subr.bf16.mxu0 0
        %523 = vmatpush1.bf16.msra.mxu0 %v453
        %524 = vmatprep.subr.bf16.mxu0 0
        %525 = vmatpush1.bf16.msra.mxu0 %v454
        %526 = vmatprep.subr.bf16.mxu0 0
        %527 = vmatpush1.bf16.msra.mxu0 %v455
        %528 = vmatprep.subr.bf16.mxu0 0
        %529 = vmatpush1.bf16.msra.mxu0 %v456
        %530 = vmatprep.subr.bf16.mxu0 0
        %531 = vmatpush1.bf16.msra.mxu0 %v457
        %532 = vmatprep.subr.bf16.mxu0 0
        %533 = vmatpush1.bf16.msra.mxu0 %v458
        %534 = vmatprep.subr.bf16.mxu0 0
        %535 = vmatpush1.bf16.msra.mxu0 %v459
        %536 = vmatprep.subr.bf16.mxu0 0
        %537 = vmatpush1.bf16.msra.mxu0 %v460
        %538 = vmatprep.subr.bf16.mxu0 0
        %539 = vmatpush1.bf16.msra.mxu0 %v461
        %540 = vmatprep.subr.bf16.mxu0 0
        %541 = vmatpush1.bf16.msra.mxu0 %v462
        %542 = vmatprep.subr.bf16.mxu0 0
        %543 = vmatpush1.bf16.msra.mxu0 %v463
        %544 = vmatprep.mubr.bf16.mxu0 %v305
        %545 = vmatmul.mubr.bf16.gmra.mrb[0].mxu0 %v304
        %v546 = vpop.f32.mrb[0].mxu0
        %v547 = vadd.f32 %v278, %v546
        %v548 = vpop.f32.mrb[0].mxu0
        %v549 = vpop.f32.mrb[0].mxu0
        %v550 = vadd.f32 %v278, %v549
        %v551 = vpop.f32.mrb[0].mxu0
        %552 = vmatprep.mubr.bf16.mxu0 %v309
        %553 = vmatmul.mubr.bf16.gmra.mrb[0].mxu0 %v308
        %v554 = vpop.f32.mrb[0].mxu0
        %v555 = vadd.f32 %v278, %v554
        %v556 = vpop.f32.mrb[0].mxu0
        %v557 = vpop.f32.mrb[0].mxu0
        %v558 = vadd.f32 %v278, %v557
        %v559 = vpop.f32.mrb[0].mxu0
        %560 = vdwg.mxu0
        %561 = vmatprep.subr.bf16.mxu0 0
        %562 = vmatpush1.bf16.msra.mxu0 %v464
        %563 = vmatprep.subr.bf16.mxu0 0
        %564 = vmatpush1.bf16.msra.mxu0 %v465
        %565 = vmatprep.subr.bf16.mxu0 0
        %566 = vmatpush1.bf16.msra.mxu0 %v466
        %567 = vmatprep.subr.bf16.mxu0 0
        %568 = vmatpush1.bf16.msra.mxu0 %v467
        %569 = vmatprep.subr.bf16.mxu0 0
        %570 = vmatpush1.bf16.msra.mxu0 %v468
        %571 = vmatprep.subr.bf16.mxu0 0
        %572 = vmatpush1.bf16.msra.mxu0 %v469
        %573 = vmatprep.subr.bf16.mxu0 0
        %574 = vmatpush1.bf16.msra.mxu0 %v470
        %575 = vmatprep.subr.bf16.mxu0 0
        %576 = vmatpush1.bf16.msra.mxu0 %v471
        %577 = vmatprep.subr.bf16.mxu0 0
        %578 = vmatpush1.bf16.msra.mxu0 %v472
        %579 = vmatprep.subr.bf16.mxu0 0
        %580 = vmatpush1.bf16.msra.mxu0 %v473
        %581 = vmatprep.subr.bf16.mxu0 0
        %582 = vmatpush1.bf16.msra.mxu0 %v474
        %583 = vmatprep.subr.bf16.mxu0 0
        %584 = vmatpush1.bf16.msra.mxu0 %v475
        %585 = vmatprep.subr.bf16.mxu0 0
        %586 = vmatpush1.bf16.msra.mxu0 %v476
        %587 = vmatprep.subr.bf16.mxu0 0
        %588 = vmatpush1.bf16.msra.mxu0 %v477
        %589 = vmatprep.subr.bf16.mxu0 0
        %590 = vmatpush1.bf16.msra.mxu0 %v478
        %591 = vmatprep.subr.bf16.mxu0 0
        %592 = vmatpush1.bf16.msra.mxu0 %v479
        %593 = vmatprep.mubr.bf16.mxu0 %v307
        %594 = vmatmul.mubr.bf16.gmra.mrb[0].mxu0 %v306
        %v595 = vpop.f32.mrb[0].mxu0
        %v596 = vadd.f32 %v547, %v595
        %v597 = vpop.f32.mrb[0].mxu0
        %v598 = vpop.f32.mrb[0].mxu0
        %v599 = vadd.f32 %v550, %v598
        %v600 = vpop.f32.mrb[0].mxu0
        %601 = vmatprep.mubr.bf16.mxu0 %v311
        %602 = vmatmul.mubr.bf16.gmra.mrb[0].mxu0 %v310
        %v603 = vpop.f32.mrb[0].mxu0
        %v604 = vadd.f32 %v555, %v603
        %v605 = vpop.f32.mrb[0].mxu0
        %v606 = vpop.f32.mrb[0].mxu0
        %v607 = vadd.f32 %v558, %v606
        %v608 = vpop.f32.mrb[0].mxu0
        %609 = vdwg.mxu0
        %v610 = vmax.f32 %v596, 0.0
        %v611 = vmax.f32 %v599, 0.0
        %v612 = vmax.f32 %v604, 0.0
        %v613 = vmax.f32 %v607, 0.0
        %v614 = vpack.c.bf16 %v611, %v610
        %v615 = vpack.c.bf16 %v613, %v612
        %v618 = vunpack.c.l.b16 %v614
        %v619 = vunpack.c.h.b16 %v614
        %v620 = vunpack.c.l.b16 %v615
        %v621 = vunpack.c.h.b16 %v615
        %v622 = vpack.c.b16 %v618, %v618
        %v623 = vpack.c.b16 %v619, %v619
        %v624 = vpack.c.b16 %v620, %v620
        %v625 = vpack.c.b16 %v621, %v621
        %vm630 = vcmask 519168
        %631 = vst.msk [vmem:[%s177] sm:$0xf] %vm630, %v622
        %632 = vst.msk [vmem:[%s177 + $0x4] sm:$0xf] %vm630, %v623
        %633 = vst.msk [vmem:[%s177 + $0x8] sm:$0xf] %vm630, %v624
        %634 = vst.msk [vmem:[%s177 + $0xc] sm:$0xf] %vm630, %v625
        %s635 = sand.u32 %s90, 1
        %s636 = sand.u32 %s90, 1
        %s637 = smul.addr %s636, 16
        %s638 = scalar_lea.vmem [#allocation2], %s637
        // Predicated region
        $region33: #{acc_forward.5} parent=31 // pred_check
          %p639 = pneg %p100
        $region34: #{acc_forward.5} parent=31 // pred_check_branch
          %641 = sbr.rel (%p639) target = $region36
        $region35: #{acc_forward.5} parent=31 // pred_region
          %s642 = smul.u32 4, %s14
          %s643 = ssub.s32 7, %s642
          %p644 = scmp.lt.s32.totalorder %s643, 4
          %s645 = scalar_select %p644, %s643, 4
          %s646 = smul.u32 64, %s645
          %p647 = scmp.ne.s32.totalorder 0, %s646
          %s648 = smul.addr %s642, 4
          %s649 = scalar_lea.vmem %s3, %s648
          // Predicated region
          $region37: #{acc_forward.5} parent=35 // pred_check
            %p650 = pneg %p647
          $region38: #{acc_forward.5} parent=35 // pred_check_branch
            %652 = sbr.rel (%p650) target = $region40
          $region39: #{acc_forward.5} parent=35 // pred_region
            // Predicated region
            $region41: #{acc_forward.5} parent=39 // pred_check
              _
            $region42: #{acc_forward.5} parent=39 // pred_check_branch
              %654 = sbr.rel target = $region44
            $region43: #{acc_forward.5} parent=39 // pred_region
              // Predicated region
              $region63: #{acc_forward.5} parent=43 // pred_check
                _
              $region64: #{acc_forward.5} parent=43 // pred_check_branch
                %709 = sbr.rel (0) target = $region66
              $region65: #{acc_forward.5} parent=43 // pred_region
                %s711 = sshrl.u32 %s645, 2
                // While loop
                $region67: #{acc_forward.5} parent=65 // loop_pre_header
                  _
                $region68: #{acc_forward.5} parent=65 // loop_header
                  %s713 = sphi 0, %s715
                  %p714 = scmp.ge.s32.totalorder %s713, %s711
                  %s718 = sphi 0, %s731
                  %s719 = sphi %s638, %s734
                  %s720 = sphi %s649, %s735
                $region69: #{acc_forward.5} parent=65 // loop_header_branch
                  %717 = sbr.rel (%p714) target = $region73
                $region70: #{acc_forward.5} parent=65 // loop_body
                  %v721 = vld [vmem:[%s719] sm:$0xf]
                  %722 = vst [vmem:[%s720] sm:$0xf] %v721
                  %v723 = vld [vmem:[%s719 + $0x4] sm:$0xf]
                  %724 = vst [vmem:[%s720 + $0x4] sm:$0xf] %v723
                  %v725 = vld [vmem:[%s719 + $0x8] sm:$0xf]
                  %726 = vst [vmem:[%s720 + $0x8] sm:$0xf] %v725
                  %v727 = vld [vmem:[%s719 + $0xc] sm:$0xf]
                  %728 = vst [vmem:[%s720 + $0xc] sm:$0xf] %v727
                  %s729 = sadd.s32 1, %s718
                  %p730 = scmp.ge.s32.totalorder %s729, %s711
                  %s731 = scalar_select %p730, 0, %s729
                  %s732 = smul.u32 %s731, 16
                  %s733 = smul.u32 %s731, 16
                  %s734 = scalar_lea.vmem %s638, %s732 [#allocation2]
                  %s735 = scalar_lea.vmem %s649, %s733
                $region71: #{acc_forward.5} parent=65 // loop_footer
                  %s715 = sadd.s32 %s713, 1
                $region72: #{acc_forward.5} parent=65 // loop_footer_branch
                  %712 = sbr.rel target = $region68
                $region73: #{acc_forward.5} parent=65 // loop_exit
                  _
                %s736 = sshrl.u32 %s645, 2
                %s737 = sand.u32 %s645, 3
                %s738 = smul.u32 %s736, 4
                %s739 = smul.u32 4, %s738
                %s740 = scalar_lea.vmem %s638, %s739 [#allocation2]
                %s741 = smul.u32 4, %s738
                %s742 = scalar_lea.vmem %s649, %s741
                // While loop
                $region74: #{acc_forward.5} parent=65 // loop_pre_header
                  _
                $region75: #{acc_forward.5} parent=65 // loop_header
                  %s744 = sphi 0, %s746
                  %p745 = scmp.ge.s32.totalorder %s744, %s737
                  %s749 = sphi 0, %s756
                  %s750 = sphi %s740, %s759
                  %s751 = sphi %s742, %s760
                $region76: #{acc_forward.5} parent=65 // loop_header_branch
                  %748 = sbr.rel (%p745) target = $region80
                $region77: #{acc_forward.5} parent=65 // loop_body
                  %v752 = vld [vmem:[%s750] sm:$0xf]
                  %753 = vst [vmem:[%s751] sm:$0xf] %v752
                  %s754 = sadd.s32 1, %s749
                  %p755 = scmp.ge.s32.totalorder %s754, %s737
                  %s756 = scalar_select %p755, 0, %s754
                  %s757 = smul.u32 %s756, 4
                  %s758 = smul.u32 %s756, 4
                  %s759 = scalar_lea.vmem %s740, %s757 [#allocation2]
                  %s760 = scalar_lea.vmem %s742, %s758
                $region78: #{acc_forward.5} parent=65 // loop_footer
                  %s746 = sadd.s32 %s744, 1
                $region79: #{acc_forward.5} parent=65 // loop_footer_branch
                  %743 = sbr.rel target = $region75
                $region80: #{acc_forward.5} parent=65 // loop_exit
                  _
              $region66: #{acc_forward.5} parent=43 // pred_fallthru
                _
            $region44: #{acc_forward.5} parent=39 // pred_fallthru
              _
            // Predicated region
            $region45: #{acc_forward.5} parent=39 // pred_check
              _
            $region46: #{acc_forward.5} parent=39 // pred_check_branch
              %656 = sbr.rel (0) target = $region48
            $region47: #{acc_forward.5} parent=39 // pred_region
              %s658 = sshrl.u32 %s645, 2
              // While loop
              $region49: #{acc_forward.5} parent=47 // loop_pre_header
                _
              $region50: #{acc_forward.5} parent=47 // loop_header
                %s660 = sphi 0, %s662
                %p661 = scmp.ge.s32.totalorder %s660, %s658
                %s665 = sphi 0, %s678
                %s666 = sphi %s638, %s681
                %s667 = sphi %s649, %s682
              $region51: #{acc_forward.5} parent=47 // loop_header_branch
                %664 = sbr.rel (%p661) target = $region55
              $region52: #{acc_forward.5} parent=47 // loop_body
                %v668 = vld [vmem:[%s666] sm:$0xf]
                %669 = vst [vmem:[%s667] sm:$0xf] %v668
                %v670 = vld [vmem:[%s666 + $0x4] sm:$0xf]
                %671 = vst [vmem:[%s667 + $0x4] sm:$0xf] %v670
                %v672 = vld [vmem:[%s666 + $0x8] sm:$0xf]
                %673 = vst [vmem:[%s667 + $0x8] sm:$0xf] %v672
                %v674 = vld [vmem:[%s666 + $0xc] sm:$0xf]
                %675 = vst [vmem:[%s667 + $0xc] sm:$0xf] %v674
                %s676 = sadd.s32 1, %s665
                %p677 = scmp.ge.s32.totalorder %s676, %s658
                %s678 = scalar_select %p677, 0, %s676
                %s679 = smul.u32 %s678, 16
                %s680 = smul.u32 %s678, 16
                %s681 = scalar_lea.vmem %s638, %s679 [#allocation2]
                %s682 = scalar_lea.vmem %s649, %s680
              $region53: #{acc_forward.5} parent=47 // loop_footer
                %s662 = sadd.s32 %s660, 1
              $region54: #{acc_forward.5} parent=47 // loop_footer_branch
                %659 = sbr.rel target = $region50
              $region55: #{acc_forward.5} parent=47 // loop_exit
                _
              %s683 = sshrl.u32 %s645, 2
              %s684 = sand.u32 %s645, 3
              %s685 = smul.u32 %s683, 4
              %s686 = smul.u32 4, %s685
              %s687 = scalar_lea.vmem %s638, %s686 [#allocation2]
              %s688 = smul.u32 4, %s685
              %s689 = scalar_lea.vmem %s649, %s688
              // While loop
              $region56: #{acc_forward.5} parent=47 // loop_pre_header
                _
              $region57: #{acc_forward.5} parent=47 // loop_header
                %s691 = sphi 0, %s693
                %p692 = scmp.ge.s32.totalorder %s691, %s684
                %s696 = sphi 0, %s703
                %s697 = sphi %s687, %s706
                %s698 = sphi %s689, %s707
              $region58: #{acc_forward.5} parent=47 // loop_header_branch
                %695 = sbr.rel (%p692) target = $region62
              $region59: #{acc_forward.5} parent=47 // loop_body
                %v699 = vld [vmem:[%s697] sm:$0xf]
                %700 = vst [vmem:[%s698] sm:$0xf] %v699
                %s701 = sadd.s32 1, %s696
                %p702 = scmp.ge.s32.totalorder %s701, %s684
                %s703 = scalar_select %p702, 0, %s701
                %s704 = smul.u32 %s703, 4
                %s705 = smul.u32 %s703, 4
                %s706 = scalar_lea.vmem %s687, %s704 [#allocation2]
                %s707 = scalar_lea.vmem %s689, %s705
              $region60: #{acc_forward.5} parent=47 // loop_footer
                %s693 = sadd.s32 %s691, 1
              $region61: #{acc_forward.5} parent=47 // loop_footer_branch
                %690 = sbr.rel target = $region57
              $region62: #{acc_forward.5} parent=47 // loop_exit
                _
            $region48: #{acc_forward.5} parent=39 // pred_fallthru
              _
          $region40: #{acc_forward.5} parent=35 // pred_fallthru
            _
          %761 = vnop
        $region36: #{acc_forward.5} parent=31 // pred_fallthru
          _
      $region32: #{acc_forward.5} parent=5 // pred_fallthru
        _
      %p762 = scmp.le.s32.totalorder 2, %s9
      // Predicated region
      $region81: #{acc_forward.5} parent=5 // pred_check
        %p763 = pneg %p762
      $region82: #{acc_forward.5} parent=5 // pred_check_branch
        %765 = sbr.rel (%p763) target = $region84
      $region83: #{acc_forward.5} parent=5 // pred_region
        %s766 = ssub.s32 %s9, 2
        // Predicated region
        $region85: #{acc_forward.5} parent=83 // pred_check
          %p767 = pneg %p106
        $region86: #{acc_forward.5} parent=83 // pred_check_branch
          %769 = sbr.rel (%p767) target = $region88
        $region87: #{acc_forward.5} parent=83 // pred_region
          %s770 = sand.u32 %s91, 1
          %s771 = sand.u32 %s91, 1
          %s772 = smul.addr %s771, 16
          %s773 = scalar_lea.vmem [#allocation2], %s772
        $region88: #{acc_forward.5} parent=83 // pred_fallthru
          _
      $region84: #{acc_forward.5} parent=5 // pred_fallthru
        _
    $region6: #{acc_forward.5} parent=1 // loop_footer
      %s13 = sadd.s32 1, %s9
    $region7: #{acc_forward.5} parent=1 // loop_footer_branch
      %8 = sbr.rel target = $region3
    $region8: #{acc_forward.5} parent=1 // loop_exit
      _

// kernel: acc_forward.6
$region0: #{acc_forward.6}
  #allocation0 [shape = 'u32[]', space=smem, size = 0x4, offset = 0x4, fixed_abs, tag = 'smem constant byte address 0x4 - core index']
  #allocation1 [shape = 'u32[144,128]{1,0:T(1,128)}', space=vmem, size = 0x12000, scoped, tag = 'internal scratch']
  %s0 = inlined_call_operand.vmem [shape: bf16[18,576], index: 0, kind: input, shape index: {}]
  %s1 = inlined_call_operand.vmem [shape: bf16[576,64], index: 1, kind: input, shape index: {}]
  %s2 = inlined_call_operand.vmem [shape: f32[1,64], index: 2, kind: input, shape index: {}]
  %s3 = inlined_call_operand.vmem [shape: bf16[18,64], index: 3, kind: output, shape index: {}]
  %s4 = sld [smem:[#allocation0]]
  $region22: #{acc_forward.6} parent=0
    _
  %s6 = ssub.s32 1, %s4
  %s7 = scalar_select 0, %s6, %s4
  // Predicated region
  $region2: #{acc_forward.6} parent=0 // pred_check
    _
  $region3: #{acc_forward.6} parent=0 // pred_check_branch
    %9 = sbr.rel (0) target = $region5
  $region4: #{acc_forward.6} parent=0 // pred_region
    _
  $region5: #{acc_forward.6} parent=0 // pred_fallthru
    _
  // Predicated region
  $region6: #{acc_forward.6} parent=0 // pred_check
    _
  $region7: #{acc_forward.6} parent=0 // pred_check_branch
    %11 = sbr.rel (0) target = $region9
  $region8: #{acc_forward.6} parent=0 // pred_region
    _
  $region9: #{acc_forward.6} parent=0 // pred_fallthru
    _
  // Predicated region
  $region10: #{acc_forward.6} parent=0 // pred_check
    _
  $region11: #{acc_forward.6} parent=0 // pred_check_branch
    %13 = sbr.rel (0) target = $region13
  $region12: #{acc_forward.6} parent=0 // pred_region
    _
  $region13: #{acc_forward.6} parent=0 // pred_fallthru
    _
  %v15 = vld [vmem:[%s0] sm:$0xff]
  %v16 = vld [vmem:[%s0 + $0x8] sm:$0xff]
  %v17 = vld [vmem:[%s0 + $0x10] sm:$0xf]
  %v18 = vld [vmem:[%s0 + $0x14] sm:$0xff]
  %v19 = vld [vmem:[%s0 + $0x1c] sm:$0xff]
  %v20 = vld [vmem:[%s0 + $0x24] sm:$0xf]
  %v21 = vld [vmem:[%s0 + $0x28] sm:$0x11]
  %v22 = vld [vmem:[%s0 + $0x30] sm:$0x11]
  %v23 = vld [vmem:[%s0 + $0x38] sm:$0x1]
  %v24 = vld [vmem:[%s1] sm:$0xf]
  %v25 = vld [vmem:[%s1 + $0x4] sm:$0xf]
  %v26 = vld [vmem:[%s1 + $0x8] sm:$0xf]
  %v27 = vld [vmem:[%s1 + $0xc] sm:$0xf]
  %v28 = vld [vmem:[%s1 + $0x10] sm:$0xf]
  %v29 = vld [vmem:[%s1 + $0x14] sm:$0xf]
  %v30 = vld [vmem:[%s1 + $0x18] sm:$0xf]
  %v31 = vld [vmem:[%s1 + $0x1c] sm:$0xf]
  %v32 = vld [vmem:[%s1 + $0x20] sm:$0xf]
  %v33 = vld [vmem:[%s1 + $0x24] sm:$0xf]
  %v34 = vld [vmem:[%s1 + $0x28] sm:$0xf]
  %v35 = vld [vmem:[%s1 + $0x2c] sm:$0xf]
  %v36 = vld [vmem:[%s1 + $0x30] sm:$0xf]
  %v37 = vld [vmem:[%s1 + $0x34] sm:$0xf]
  %v38 = vld [vmem:[%s1 + $0x38] sm:$0xf]
  %v39 = vld [vmem:[%s1 + $0x3c] sm:$0xf]
  %v40 = vld [vmem:[%s1 + $0x40] sm:$0xf]
  %v41 = vld [vmem:[%s1 + $0x44] sm:$0xf]
  %v42 = vld [vmem:[%s1 + $0x48] sm:$0xf]
  %v43 = vld [vmem:[%s1 + $0x4c] sm:$0xf]
  %v44 = vld [vmem:[%s1 + $0x50] sm:$0xf]
  %v45 = vld [vmem:[%s1 + $0x54] sm:$0xf]
  %v46 = vld [vmem:[%s1 + $0x58] sm:$0xf]
  %v47 = vld [vmem:[%s1 + $0x5c] sm:$0xf]
  %v48 = vld [vmem:[%s1 + $0x60] sm:$0xf]
  %v49 = vld [vmem:[%s1 + $0x64] sm:$0xf]
  %v50 = vld [vmem:[%s1 + $0x68] sm:$0xf]
  %v51 = vld [vmem:[%s1 + $0x6c] sm:$0xf]
  %v52 = vld [vmem:[%s1 + $0x70] sm:$0xf]
  %v53 = vld [vmem:[%s1 + $0x74] sm:$0xf]
  %v54 = vld [vmem:[%s1 + $0x78] sm:$0xf]
  %v55 = vld [vmem:[%s1 + $0x7c] sm:$0xf]
  %v56 = vld [vmem:[%s1 + $0x80] sm:$0xf]
  %v57 = vld [vmem:[%s1 + $0x84] sm:$0xf]
  %v58 = vld [vmem:[%s1 + $0x88] sm:$0xf]
  %v59 = vld [vmem:[%s1 + $0x8c] sm:$0xf]
  %v60 = vld [vmem:[%s1 + $0x90] sm:$0xf]
  %v61 = vld [vmem:[%s1 + $0x94] sm:$0xf]
  %v62 = vld [vmem:[%s1 + $0x98] sm:$0xf]
  %v63 = vld [vmem:[%s1 + $0x9c] sm:$0xf]
  %v64 = vld [vmem:[%s1 + $0xa0] sm:$0xf]
  %v65 = vld [vmem:[%s1 + $0xa4] sm:$0xf]
  %v66 = vld [vmem:[%s1 + $0xa8] sm:$0xf]
  %v67 = vld [vmem:[%s1 + $0xac] sm:$0xf]
  %v68 = vld [vmem:[%s1 + $0xb0] sm:$0xf]
  %v69 = vld [vmem:[%s1 + $0xb4] sm:$0xf]
  %v70 = vld [vmem:[%s1 + $0xb8] sm:$0xf]
  %v71 = vld [vmem:[%s1 + $0xbc] sm:$0xf]
  %v72 = vld [vmem:[%s1 + $0xc0] sm:$0xf]
  %v73 = vld [vmem:[%s1 + $0xc4] sm:$0xf]
  %v74 = vld [vmem:[%s1 + $0xc8] sm:$0xf]
  %v75 = vld [vmem:[%s1 + $0xcc] sm:$0xf]
  %v76 = vld [vmem:[%s1 + $0xd0] sm:$0xf]
  %v77 = vld [vmem:[%s1 + $0xd4] sm:$0xf]
  %v78 = vld [vmem:[%s1 + $0xd8] sm:$0xf]
  %v79 = vld [vmem:[%s1 + $0xdc] sm:$0xf]
  %v80 = vld [vmem:[%s1 + $0xe0] sm:$0xf]
  %v81 = vld [vmem:[%s1 + $0xe4] sm:$0xf]
  %v82 = vld [vmem:[%s1 + $0xe8] sm:$0xf]
  %v83 = vld [vmem:[%s1 + $0xec] sm:$0xf]
  %v84 = vld [vmem:[%s1 + $0xf0] sm:$0xf]
  %v85 = vld [vmem:[%s1 + $0xf4] sm:$0xf]
  %v86 = vld [vmem:[%s1 + $0xf8] sm:$0xf]
  %v87 = vld [vmem:[%s1 + $0xfc] sm:$0xf]
  %v88 = vld [vmem:[%s1 + $0x100] sm:$0xf]
  %v89 = vld [vmem:[%s1 + $0x104] sm:$0xf]
  %v90 = vld [vmem:[%s1 + $0x108] sm:$0xf]
  %v91 = vld [vmem:[%s1 + $0x10c] sm:$0xf]
  %v92 = vld [vmem:[%s1 + $0x110] sm:$0xf]
  %v93 = vld [vmem:[%s1 + $0x114] sm:$0xf]
  %v94 = vld [vmem:[%s1 + $0x118] sm:$0xf]
  %v95 = vld [vmem:[%s1 + $0x11c] sm:$0xf]
  %v96 = vld [vmem:[%s2] sm:$0x1]
  %v98 = vlaneseq
  %v99 = vshrl.u32 %v98, 7
  %v100 = vsub.s32 0, %v99
  %v101 = vrot.slane %v96, %v100
  %v112 = vunpack.c.l.b16 %v15
  %v113 = vunpack.c.h.b16 %v15
  %v114 = vunpack.c.l.b16 %v16
  %v115 = vunpack.c.h.b16 %v16
  %v116 = vunpack.c.l.b16 %v17
  %v117 = vunpack.c.l.b16 %v18
  %v118 = vunpack.c.h.b16 %v18
  %v119 = vunpack.c.l.b16 %v19
  %v120 = vunpack.c.h.b16 %v19
  %v121 = vunpack.c.l.b16 %v20
  %v122 = vunpack.c.l.b16 %v21
  %v123 = vunpack.c.h.b16 %v21
  %v124 = vunpack.c.l.b16 %v22
  %v125 = vunpack.c.h.b16 %v22
  %v126 = vunpack.c.l.b16 %v23
  %v127 = vpack.c.b16 %v117, %v112
  %v128 = vpack.c.b16 %v118, %v113
  %v129 = vpack.c.b16 %v119, %v114
  %v130 = vpack.c.b16 %v120, %v115
  %v131 = vpack.c.b16 %v121, %v116
  %v132 = vpack.c.b16 %v122, %v122
  %v133 = vpack.c.b16 %v123, %v123
  %v134 = vpack.c.b16 %v124, %v124
  %v135 = vpack.c.b16 %v125, %v125
  %v136 = vpack.c.b16 %v126, %v126
  %v217 = vunpack.c.l.b16 %v24
  %v218 = vunpack.c.l.b16 %v25
  %v219 = vunpack.c.l.b16 %v26
  %v220 = vunpack.c.l.b16 %v27
  %v221 = vunpack.c.l.b16 %v28
  %v222 = vunpack.c.l.b16 %v29
  %v223 = vunpack.c.l.b16 %v30
  %v224 = vunpack.c.l.b16 %v31
  %v225 = vunpack.c.l.b16 %v32
  %v226 = vunpack.c.l.b16 %v33
  %v227 = vunpack.c.l.b16 %v34
  %v228 = vunpack.c.l.b16 %v35
  %v229 = vunpack.c.l.b16 %v36
  %v230 = vunpack.c.l.b16 %v37
  %v231 = vunpack.c.l.b16 %v38
  %v232 = vunpack.c.l.b16 %v39
  %v233 = vunpack.c.l.b16 %v40
  %v234 = vunpack.c.l.b16 %v41
  %v235 = vunpack.c.l.b16 %v42
  %v236 = vunpack.c.l.b16 %v43
  %v237 = vunpack.c.l.b16 %v44
  %v238 = vunpack.c.l.b16 %v45
  %v239 = vunpack.c.l.b16 %v46
  %v240 = vunpack.c.l.b16 %v47
  %v241 = vunpack.c.l.b16 %v48
  %v242 = vunpack.c.l.b16 %v49
  %v243 = vunpack.c.l.b16 %v50
  %v244 = vunpack.c.l.b16 %v51
  %v245 = vunpack.c.l.b16 %v52
  %v246 = vunpack.c.l.b16 %v53
  %v247 = vunpack.c.l.b16 %v54
  %v248 = vunpack.c.l.b16 %v55
  %v249 = vunpack.c.l.b16 %v56
  %v250 = vunpack.c.l.b16 %v57
  %v251 = vunpack.c.l.b16 %v58
  %v252 = vunpack.c.l.b16 %v59
  %v253 = vunpack.c.l.b16 %v60
  %v254 = vunpack.c.l.b16 %v61
  %v255 = vunpack.c.l.b16 %v62
  %v256 = vunpack.c.l.b16 %v63
  %v257 = vunpack.c.l.b16 %v64
  %v258 = vunpack.c.l.b16 %v65
  %v259 = vunpack.c.l.b16 %v66
  %v260 = vunpack.c.l.b16 %v67
  %v261 = vunpack.c.l.b16 %v68
  %v262 = vunpack.c.l.b16 %v69
  %v263 = vunpack.c.l.b16 %v70
  %v264 = vunpack.c.l.b16 %v71
  %v265 = vunpack.c.l.b16 %v72
  %v266 = vunpack.c.l.b16 %v73
  %v267 = vunpack.c.l.b16 %v74
  %v268 = vunpack.c.l.b16 %v75
  %v269 = vunpack.c.l.b16 %v76
  %v270 = vunpack.c.l.b16 %v77
  %v271 = vunpack.c.l.b16 %v78
  %v272 = vunpack.c.l.b16 %v79
  %v273 = vunpack.c.l.b16 %v80
  %v274 = vunpack.c.l.b16 %v81
  %v275 = vunpack.c.l.b16 %v82
  %v276 = vunpack.c.l.b16 %v83
  %v277 = vunpack.c.l.b16 %v84
  %v278 = vunpack.c.l.b16 %v85
  %v279 = vunpack.c.l.b16 %v86
  %v280 = vunpack.c.l.b16 %v87
  %v281 = vunpack.c.l.b16 %v88
  %v282 = vunpack.c.l.b16 %v89
  %v283 = vunpack.c.l.b16 %v90
  %v284 = vunpack.c.l.b16 %v91
  %v285 = vunpack.c.l.b16 %v92
  %v286 = vunpack.c.l.b16 %v93
  %v287 = vunpack.c.l.b16 %v94
  %v288 = vunpack.c.l.b16 %v95
  %v289 = vpack.c.b16 %v218, %v217
  %v290 = vpack.c.b16 %v220, %v219
  %v291 = vpack.c.b16 %v222, %v221
  %v292 = vpack.c.b16 %v224, %v223
  %v293 = vpack.c.b16 %v226, %v225
  %v294 = vpack.c.b16 %v228, %v227
  %v295 = vpack.c.b16 %v230, %v229
  %v296 = vpack.c.b16 %v232, %v231
  %v297 = vpack.c.b16 %v234, %v233
  %v298 = vpack.c.b16 %v236, %v235
  %v299 = vpack.c.b16 %v238, %v237
  %v300 = vpack.c.b16 %v240, %v239
  %v301 = vpack.c.b16 %v242, %v241
  %v302 = vpack.c.b16 %v244, %v243
  %v303 = vpack.c.b16 %v246, %v245
  %v304 = vpack.c.b16 %v248, %v247
  %v305 = vpack.c.b16 %v250, %v249
  %v306 = vpack.c.b16 %v252, %v251
  %v307 = vpack.c.b16 %v254, %v253
  %v308 = vpack.c.b16 %v256, %v255
  %v309 = vpack.c.b16 %v258, %v257
  %v310 = vpack.c.b16 %v260, %v259
  %v311 = vpack.c.b16 %v262, %v261
  %v312 = vpack.c.b16 %v264, %v263
  %v313 = vpack.c.b16 %v266, %v265
  %v314 = vpack.c.b16 %v268, %v267
  %v315 = vpack.c.b16 %v270, %v269
  %v316 = vpack.c.b16 %v272, %v271
  %v317 = vpack.c.b16 %v274, %v273
  %v318 = vpack.c.b16 %v276, %v275
  %v319 = vpack.c.b16 %v278, %v277
  %v320 = vpack.c.b16 %v280, %v279
  %v321 = vpack.c.b16 %v282, %v281
  %v322 = vpack.c.b16 %v284, %v283
  %v323 = vpack.c.b16 %v286, %v285
  %v324 = vpack.c.b16 %v288, %v287
  %vm361 = vcmask 523264
  %v363 = vsel %vm361, %v131, 0
  %v366 = vsel %vm361, %v136, 0
  %368 = vmatprep.subr.bf16.mxu0 0
  %369 = vmatpush1.bf16.msra.mxu0 %v289
  %370 = vmatprep.subr.bf16.mxu0 0
  %371 = vmatpush1.bf16.msra.mxu0 %v290
  %372 = vmatprep.subr.bf16.mxu0 0
  %373 = vmatpush1.bf16.msra.mxu0 %v291
  %374 = vmatprep.subr.bf16.mxu0 0
  %375 = vmatpush1.bf16.msra.mxu0 %v292
  %376 = vmatprep.subr.bf16.mxu0 0
  %377 = vmatpush1.bf16.msra.mxu0 %v293
  %378 = vmatprep.subr.bf16.mxu0 0
  %379 = vmatpush1.bf16.msra.mxu0 %v294
  %380 = vmatprep.subr.bf16.mxu0 0
  %381 = vmatpush1.bf16.msra.mxu0 %v295
  %382 = vmatprep.subr.bf16.mxu0 0
  %383 = vmatpush1.bf16.msra.mxu0 %v296
  %384 = vmatprep.subr.bf16.mxu0 0
  %385 = vmatpush1.bf16.msra.mxu0 %v297
  %386 = vmatprep.subr.bf16.mxu0 0
  %387 = vmatpush1.bf16.msra.mxu0 %v298
  %388 = vmatprep.subr.bf16.mxu0 0
  %389 = vmatpush1.bf16.msra.mxu0 %v299
  %390 = vmatprep.subr.bf16.mxu0 0
  %391 = vmatpush1.bf16.msra.mxu0 %v300
  %392 = vmatprep.subr.bf16.mxu0 0
  %393 = vmatpush1.bf16.msra.mxu0 %v301
  %394 = vmatprep.subr.bf16.mxu0 0
  %395 = vmatpush1.bf16.msra.mxu0 %v302
  %396 = vmatprep.subr.bf16.mxu0 0
  %397 = vmatpush1.bf16.msra.mxu0 %v303
  %398 = vmatprep.subr.bf16.mxu0 0
  %399 = vmatpush1.bf16.msra.mxu0 %v304
  %400 = vmatprep.mubr.bf16.mxu0 %v128
  %401 = vmatmul.mubr.bf16.gmra.mrb[0].mxu0 %v127
  %v402 = vpop.f32.mrb[0].mxu0
  %v403 = vadd.f32 %v101, %v402
  %v404 = vpop.f32.mrb[0].mxu0
  %v405 = vpop.f32.mrb[0].mxu0
  %v406 = vadd.f32 %v101, %v405
  %v407 = vpop.f32.mrb[0].mxu0
  %408 = vmatprep.mubr.bf16.mxu0 %v133
  %409 = vmatmul.mubr.bf16.gmra.mrb[0].mxu0 %v132
  %v410 = vpop.f32.mrb[0].mxu0
  %v411 = vadd.f32 %v101, %v410
  %v412 = vpop.f32.mrb[0].mxu0
  %v413 = vpop.f32.mrb[0].mxu0
  %v414 = vpop.f32.mrb[0].mxu0
  %415 = vdwg.mxu0
  %416 = vmatprep.subr.bf16.mxu0 0
  %417 = vmatpush1.bf16.msra.mxu0 %v305
  %418 = vmatprep.subr.bf16.mxu0 0
  %419 = vmatpush1.bf16.msra.mxu0 %v306
  %420 = vmatprep.subr.bf16.mxu0 0
  %421 = vmatpush1.bf16.msra.mxu0 %v307
  %422 = vmatprep.subr.bf16.mxu0 0
  %423 = vmatpush1.bf16.msra.mxu0 %v308
  %424 = vmatprep.subr.bf16.mxu0 0
  %425 = vmatpush1.bf16.msra.mxu0 %v309
  %426 = vmatprep.subr.bf16.mxu0 0
  %427 = vmatpush1.bf16.msra.mxu0 %v310
  %428 = vmatprep.subr.bf16.mxu0 0
  %429 = vmatpush1.bf16.msra.mxu0 %v311
  %430 = vmatprep.subr.bf16.mxu0 0
  %431 = vmatpush1.bf16.msra.mxu0 %v312
  %432 = vmatprep.subr.bf16.mxu0 0
  %433 = vmatpush1.bf16.msra.mxu0 %v313
  %434 = vmatprep.subr.bf16.mxu0 0
  %435 = vmatpush1.bf16.msra.mxu0 %v314
  %436 = vmatprep.subr.bf16.mxu0 0
  %437 = vmatpush1.bf16.msra.mxu0 %v315
  %438 = vmatprep.subr.bf16.mxu0 0
  %439 = vmatpush1.bf16.msra.mxu0 %v316
  %440 = vmatprep.subr.bf16.mxu0 0
  %441 = vmatpush1.bf16.msra.mxu0 %v317
  %442 = vmatprep.subr.bf16.mxu0 0
  %443 = vmatpush1.bf16.msra.mxu0 %v318
  %444 = vmatprep.subr.bf16.mxu0 0
  %445 = vmatpush1.bf16.msra.mxu0 %v319
  %446 = vmatprep.subr.bf16.mxu0 0
  %447 = vmatpush1.bf16.msra.mxu0 %v320
  %448 = vmatprep.mubr.bf16.mxu0 %v130
  %449 = vmatmul.mubr.bf16.gmra.mrb[0].mxu0 %v129
  %v450 = vpop.f32.mrb[0].mxu0
  %v451 = vadd.f32 %v403, %v450
  %v452 = vpop.f32.mrb[0].mxu0
  %v453 = vpop.f32.mrb[0].mxu0
  %v454 = vadd.f32 %v406, %v453
  %v455 = vpop.f32.mrb[0].mxu0
  %456 = vmatprep.mubr.bf16.mxu0 %v135
  %457 = vmatmul.mubr.bf16.gmra.mrb[0].mxu0 %v134
  %v458 = vpop.f32.mrb[0].mxu0
  %v459 = vadd.f32 %v411, %v458
  %v460 = vpop.f32.mrb[0].mxu0
  %v461 = vpop.f32.mrb[0].mxu0
  %v462 = vpop.f32.mrb[0].mxu0
  %463 = vdwg.mxu0
  %464 = vmatprep.subr.bf16.mxu0 0
  %465 = vmatpush1.bf16.msra.mxu0 %v321
  %466 = vmatprep.subr.bf16.mxu0 0
  %467 = vmatpush1.bf16.msra.mxu0 %v322
  %468 = vmatprep.subr.bf16.mxu0 0
  %469 = vmatpush1.bf16.msra.mxu0 %v323
  %470 = vmatprep.subr.bf16.mxu0 0
  %471 = vmatpush1.bf16.msra.mxu0 %v324
  %472 = vmatprep.subr.bf16.mxu0 0
  %473 = vmatpush1.bf16.msra.mxu0 0
  %474 = vmatprep.subr.bf16.mxu0 0
  %475 = vmatpush1.bf16.msra.mxu0 0
  %476 = vmatprep.subr.bf16.mxu0 0
  %477 = vmatpush1.bf16.msra.mxu0 0
  %478 = vmatprep.subr.bf16.mxu0 0
  %479 = vmatpush1.bf16.msra.mxu0 0
  %480 = vmatprep.subr.bf16.mxu0 0
  %481 = vmatpush1.bf16.msra.mxu0 0
  %482 = vmatprep.subr.bf16.mxu0 0
  %483 = vmatpush1.bf16.msra.mxu0 0
  %484 = vmatprep.subr.bf16.mxu0 0
  %485 = vmatpush1.bf16.msra.mxu0 0
  %486 = vmatprep.subr.bf16.mxu0 0
  %487 = vmatpush1.bf16.msra.mxu0 0
  %488 = vmatprep.subr.bf16.mxu0 0
  %489 = vmatpush1.bf16.msra.mxu0 0
  %490 = vmatprep.subr.bf16.mxu0 0
  %491 = vmatpush1.bf16.msra.mxu0 0
  %492 = vmatprep.subr.bf16.mxu0 0
  %493 = vmatpush1.bf16.msra.mxu0 0
  %494 = vmatprep.subr.bf16.mxu0 0
  %495 = vmatpush1.bf16.msra.mxu0 0
  %496 = vmatprep.mubr.bf16.mxu0 0
  %497 = vmatmul.mubr.bf16.gmra.mrb[0].mxu0 %v363
  %v498 = vpop.f32.mrb[0].mxu0
  %v499 = vadd.f32 %v451, %v498
  %v500 = vpop.f32.mrb[0].mxu0
  %v501 = vpop.f32.mrb[0].mxu0
  %v502 = vadd.f32 %v454, %v501
  %v503 = vpop.f32.mrb[0].mxu0
  %504 = vmatprep.mubr.bf16.mxu0 0
  %505 = vmatmul.mubr.bf16.gmra.mrb[0].mxu0 %v366
  %v506 = vpop.f32.mrb[0].mxu0
  %v507 = vadd.f32 %v459, %v506
  %v508 = vpop.f32.mrb[0].mxu0
  %v509 = vpop.f32.mrb[0].mxu0
  %v510 = vpop.f32.mrb[0].mxu0
  %511 = vdwg.mxu0
  %v512 = vmax.f32 %v499, 0.0
  %v513 = vmax.f32 %v502, 0.0
  %v514 = vmax.f32 %v507, 0.0
  %v515 = vpack.c.bf16 %v513, %v512
  %v516 = vpack.c.bf16 %v514, %v514
  %v519 = vunpack.c.l.b16 %v515
  %v520 = vunpack.c.h.b16 %v515
  %v521 = vunpack.c.l.b16 %v516
  %v522 = vpack.c.b16 %v519, %v519
  %v523 = vpack.c.b16 %v520, %v520
  %v524 = vpack.c.b16 %v521, %v521
  %vm528 = vcmask 519168
  %529 = vst.msk [vmem:[%s3] sm:$0xf] %vm528, %v522
  %530 = vst.msk [vmem:[%s3 + $0x4] sm:$0xf] %vm528, %v523
  %vm531 = vcmask 516096
  %532 = vst.msk [vmem:[%s3 + $0x8] sm:$0x1] %vm531, %v524
  // Predicated region
  $region14: #{acc_forward.6} parent=0 // pred_check
    _
  $region15: #{acc_forward.6} parent=0 // pred_check_branch
    %534 = sbr.rel (0) target = $region17
  $region16: #{acc_forward.6} parent=0 // pred_region
    _
  $region17: #{acc_forward.6} parent=0 // pred_fallthru
    _
  // Predicated region
  $region18: #{acc_forward.6} parent=0 // pred_check
    _
  $region19: #{acc_forward.6} parent=0 // pred_check_branch
    %536 = sbr.rel (0) target = $region21
  $region20: #{acc_forward.6} parent=0 // pred_region
    _
  $region21: #{acc_forward.6} parent=0 // pred_fallthru
    _

// kernel: acc_forward.7
$region0: #{acc_forward.7}
  #allocation0 [shape = 'u32[]', space=smem, size = 0x4, offset = 0x4, fixed_abs, tag = 'smem constant byte address 0x4 - core index']
  #allocation1 [shape = 'u32[144,128]{1,0:T(1,128)}', space=vmem, size = 0x12000, scoped, tag = 'internal scratch']
  %s0 = inlined_call_operand.vmem [shape: bf16[2,576], index: 0, kind: input, shape index: {}]
  %s1 = inlined_call_operand.vmem [shape: bf16[576,64], index: 1, kind: input, shape index: {}]
  %s2 = inlined_call_operand.vmem [shape: f32[1,64], index: 2, kind: input, shape index: {}]
  %s3 = inlined_call_operand.vmem [shape: bf16[64,512], index: 3, kind: input, shape index: {}]
  %s4 = inlined_call_operand.vmem [shape: f32[1,512], index: 4, kind: input, shape index: {}]
  %s5 = inlined_call_operand.vmem [shape: bf16[512,768], index: 5, kind: input, shape index: {}]
  %s6 = inlined_call_operand.vmem [shape: f32[1,768], index: 6, kind: input, shape index: {}]
  %s7 = inlined_call_operand.vmem [shape: bf16[768,128], index: 7, kind: input, shape index: {}]
  %s8 = inlined_call_operand.vmem [shape: f32[1,384], index: 8, kind: input, shape index: {}]
  %s9 = inlined_call_operand.vmem [shape: bf16[384,128], index: 9, kind: input, shape index: {}]
  %s10 = inlined_call_operand.vmem [shape: f32[1,128], index: 10, kind: input, shape index: {}]
  %s11 = inlined_call_operand.vmem [shape: f32[2,128], index: 11, kind: output, shape index: {}]
  %s12 = sld [smem:[#allocation0]]
  $region54: #{acc_forward.7} parent=0
    _
  %s14 = ssub.s32 1, %s12
  %s15 = scalar_select 0, %s14, %s12
  // Predicated region
  $region2: #{acc_forward.7} parent=0 // pred_check
    _
  $region3: #{acc_forward.7} parent=0 // pred_check_branch
    %17 = sbr.rel (0) target = $region5
  $region4: #{acc_forward.7} parent=0 // pred_region
    _
  $region5: #{acc_forward.7} parent=0 // pred_fallthru
    _
  // Predicated region
  $region6: #{acc_forward.7} parent=0 // pred_check
    _
  $region7: #{acc_forward.7} parent=0 // pred_check_branch
    %19 = sbr.rel (0) target = $region9
  $region8: #{acc_forward.7} parent=0 // pred_region
    _
  $region9: #{acc_forward.7} parent=0 // pred_fallthru
    _
  // Predicated region
  $region10: #{acc_forward.7} parent=0 // pred_check
    _
  $region11: #{acc_forward.7} parent=0 // pred_check_branch
    %21 = sbr.rel (0) target = $region13
  $region12: #{acc_forward.7} parent=0 // pred_region
    _
  $region13: #{acc_forward.7} parent=0 // pred_fallthru
    _
  // Predicated region
  $region14: #{acc_forward.7} parent=0 // pred_check
    _
  $region15: #{acc_forward.7} parent=0 // pred_check_branch
    %23 = sbr.rel (0) target = $region17
  $region16: #{acc_forward.7} parent=0 // pred_region
    _
  $region17: #{acc_forward.7} parent=0 // pred_fallthru
    _
  // Predicated region
  $region18: #{acc_forward.7} parent=0 // pred_check
    _
  $region19: #{acc_forward.7} parent=0 // pred_check_branch
    %25 = sbr.rel (0) target = $region21
  $region20: #{acc_forward.7} parent=0 // pred_region
    _
  $region21: #{acc_forward.7} parent=0 // pred_fallthru
    _
  // Predicated region
  $region22: #{acc_forward.7} parent=0 // pred_check
    _
  $region23: #{acc_forward.7} parent=0 // pred_check_branch
    %27 = sbr.rel (0) target = $region25
  $region24: #{acc_forward.7} parent=0 // pred_region
    _
  $region25: #{acc_forward.7} parent=0 // pred_fallthru
    _
  // Predicated region
  $region26: #{acc_forward.7} parent=0 // pred_check
    _
  $region27: #{acc_forward.7} parent=0 // pred_check_branch
    %29 = sbr.rel (0) target = $region29
  $region28: #{acc_forward.7} parent=0 // pred_region
    _
  $region29: #{acc_forward.7} parent=0 // pred_fallthru
    _
  // Predicated region
  $region30: #{acc_forward.7} parent=0 // pred_check
    _
  $region31: #{acc_forward.7} parent=0 // pred_check_branch
    %31 = sbr.rel (0) target = $region33
  $region32: #{acc_forward.7} parent=0 // pred_region
    _
  $region33: #{acc_forward.7} parent=0 // pred_fallthru
    _
  // Predicated region
  $region34: #{acc_forward.7} parent=0 // pred_check
    _
  $region35: #{acc_forward.7} parent=0 // pred_check_branch
    %33 = sbr.rel (0) target = $region37
  $region36: #{acc_forward.7} parent=0 // pred_region
    _
  $region37: #{acc_forward.7} parent=0 // pred_fallthru
    _
  // Predicated region
  $region38: #{acc_forward.7} parent=0 // pred_check
    _
  $region39: #{acc_forward.7} parent=0 // pred_check_branch
    %35 = sbr.rel (0) target = $region41
  $region40: #{acc_forward.7} parent=0 // pred_region
    _
  $region41: #{acc_forward.7} parent=0 // pred_fallthru
    _
  // Predicated region
  $region42: #{acc_forward.7} parent=0 // pred_check
    _
  $region43: #{acc_forward.7} parent=0 // pred_check_branch
    %37 = sbr.rel (0) target = $region45
  $region44: #{acc_forward.7} parent=0 // pred_region
    _
  $region45: #{acc_forward.7} parent=0 // pred_fallthru
    _
  %v39 = vld [vmem:[%s0] sm:$0x1f]
  %v40 = vld [vmem:[%s1] sm:$0xf]
  %v41 = vld [vmem:[%s1 + $0x4] sm:$0xf]
  %v42 = vld [vmem:[%s1 + $0x8] sm:$0xf]
  %v43 = vld [vmem:[%s1 + $0xc] sm:$0xf]
  %v44 = vld [vmem:[%s1 + $0x10] sm:$0xf]
  %v45 = vld [vmem:[%s1 + $0x14] sm:$0xf]
  %v46 = vld [vmem:[%s1 + $0x18] sm:$0xf]
  %v47 = vld [vmem:[%s1 + $0x1c] sm:$0xf]
  %v48 = vld [vmem:[%s1 + $0x20] sm:$0xf]
  %v49 = vld [vmem:[%s1 + $0x24] sm:$0xf]
  %v50 = vld [vmem:[%s1 + $0x28] sm:$0xf]
  %v51 = vld [vmem:[%s1 + $0x2c] sm:$0xf]
  %v52 = vld [vmem:[%s1 + $0x30] sm:$0xf]
  %v53 = vld [vmem:[%s1 + $0x34] sm:$0xf]
  %v54 = vld [vmem:[%s1 + $0x38] sm:$0xf]
  %v55 = vld [vmem:[%s1 + $0x3c] sm:$0xf]
  %v56 = vld [vmem:[%s1 + $0x40] sm:$0xf]
  %v57 = vld [vmem:[%s1 + $0x44] sm:$0xf]
  %v58 = vld [vmem:[%s1 + $0x48] sm:$0xf]
  %v59 = vld [vmem:[%s1 + $0x4c] sm:$0xf]
  %v60 = vld [vmem:[%s1 + $0x50] sm:$0xf]
  %v61 = vld [vmem:[%s1 + $0x54] sm:$0xf]
  %v62 = vld [vmem:[%s1 + $0x58] sm:$0xf]
  %v63 = vld [vmem:[%s1 + $0x5c] sm:$0xf]
  %v64 = vld [vmem:[%s1 + $0x60] sm:$0xf]
  %v65 = vld [vmem:[%s1 + $0x64] sm:$0xf]
  %v66 = vld [vmem:[%s1 + $0x68] sm:$0xf]
  %v67 = vld [vmem:[%s1 + $0x6c] sm:$0xf]
  %v68 = vld [vmem:[%s1 + $0x70] sm:$0xf]
  %v69 = vld [vmem:[%s1 + $0x74] sm:$0xf]
  %v70 = vld [vmem:[%s1 + $0x78] sm:$0xf]
  %v71 = vld [vmem:[%s1 + $0x7c] sm:$0xf]
  %v72 = vld [vmem:[%s1 + $0x80] sm:$0xf]
  %v73 = vld [vmem:[%s1 + $0x84] sm:$0xf]
  %v74 = vld [vmem:[%s1 + $0x88] sm:$0xf]
  %v75 = vld [vmem:[%s1 + $0x8c] sm:$0xf]
  %v76 = vld [vmem:[%s1 + $0x90] sm:$0xf]
  %v77 = vld [vmem:[%s1 + $0x94] sm:$0xf]
  %v78 = vld [vmem:[%s1 + $0x98] sm:$0xf]
  %v79 = vld [vmem:[%s1 + $0x9c] sm:$0xf]
  %v80 = vld [vmem:[%s1 + $0xa0] sm:$0xf]
  %v81 = vld [vmem:[%s1 + $0xa4] sm:$0xf]
  %v82 = vld [vmem:[%s1 + $0xa8] sm:$0xf]
  %v83 = vld [vmem:[%s1 + $0xac] sm:$0xf]
  %v84 = vld [vmem:[%s1 + $0xb0] sm:$0xf]
  %v85 = vld [vmem:[%s1 + $0xb4] sm:$0xf]
  %v86 = vld [vmem:[%s1 + $0xb8] sm:$0xf]
  %v87 = vld [vmem:[%s1 + $0xbc] sm:$0xf]
  %v88 = vld [vmem:[%s1 + $0xc0] sm:$0xf]
  %v89 = vld [vmem:[%s1 + $0xc4] sm:$0xf]
  %v90 = vld [vmem:[%s1 + $0xc8] sm:$0xf]
  %v91 = vld [vmem:[%s1 + $0xcc] sm:$0xf]
  %v92 = vld [vmem:[%s1 + $0xd0] sm:$0xf]
  %v93 = vld [vmem:[%s1 + $0xd4] sm:$0xf]
  %v94 = vld [vmem:[%s1 + $0xd8] sm:$0xf]
  %v95 = vld [vmem:[%s1 + $0xdc] sm:$0xf]
  %v96 = vld [vmem:[%s1 + $0xe0] sm:$0xf]
  %v97 = vld [vmem:[%s1 + $0xe4] sm:$0xf]
  %v98 = vld [vmem:[%s1 + $0xe8] sm:$0xf]
  %v99 = vld [vmem:[%s1 + $0xec] sm:$0xf]
  %v100 = vld [vmem:[%s1 + $0xf0] sm:$0xf]
  %v101 = vld [vmem:[%s1 + $0xf4] sm:$0xf]
  %v102 = vld [vmem:[%s1 + $0xf8] sm:$0xf]
  %v103 = vld [vmem:[%s1 + $0xfc] sm:$0xf]
  %v104 = vld [vmem:[%s1 + $0x100] sm:$0xf]
  %v105 = vld [vmem:[%s1 + $0x104] sm:$0xf]
  %v106 = vld [vmem:[%s1 + $0x108] sm:$0xf]
  %v107 = vld [vmem:[%s1 + $0x10c] sm:$0xf]
  %v108 = vld [vmem:[%s1 + $0x110] sm:$0xf]
  %v109 = vld [vmem:[%s1 + $0x114] sm:$0xf]
  %v110 = vld [vmem:[%s1 + $0x118] sm:$0xf]
  %v111 = vld [vmem:[%s1 + $0x11c] sm:$0xf]
  %v112 = vld [vmem:[%s2] sm:$0x1]
  %v114 = vlaneseq
  %v115 = vshrl.u32 %v114, 7
  %v116 = vsub.s32 0, %v115
  %v117 = vrot.slane %v112, %v116
  %v120 = vcombine.high %v39, %v39
  %v122 = vunpack.c.l.s4 1966171168
  %v123 = vunpack.c.0.s8 %v122
  %v124 = vlaneseq
  %v125 = vshrl.u32 %v124, 7
  %v126 = vsub.s32 %v123, %v125
  %v127 = vrot.slane %v39, %v126
  %v129 = vunpack.c.l.s4 1966171168
  %v130 = vunpack.c.0.s8 %v129
  %v131 = vlaneseq
  %v132 = vshrl.u32 %v131, 7
  %v133 = vsub.s32 %v130, %v132
  %v134 = vrot.slane %v120, %v133
  %v135 = vcombine.high %v127, %v127
  %v137 = vunpack.c.l.s4 1966171168
  %v138 = vunpack.c.0.s8 %v137
  %v139 = vlaneseq
  %v140 = vshrl.u32 %v139, 7
  %v141 = vsub.s32 %v138, %v140
  %v142 = vrot.slane %v127, %v141
  %v144 = vunpack.c.l.s4 1966171168
  %v145 = vunpack.c.0.s8 %v144
  %v146 = vlaneseq
  %v147 = vshrl.u32 %v146, 7
  %v148 = vsub.s32 %v145, %v147
  %v149 = vrot.slane %v134, %v148
  %v151 = vunpack.c.l.s4 1966171168
  %v152 = vunpack.c.0.s8 %v151
  %v153 = vlaneseq
  %v154 = vshrl.u32 %v153, 7
  %v155 = vsub.s32 %v152, %v154
  %v156 = vrot.slane %v135, %v155
  %v157 = vcombine.high %v142, %v142
  %v158 = vcombine.high %v156, %v156
  %v235 = vunpack.c.l.b16 %v40
  %v236 = vunpack.c.l.b16 %v41
  %v237 = vunpack.c.l.b16 %v42
  %v238 = vunpack.c.l.b16 %v43
  %v239 = vunpack.c.l.b16 %v44
  %v240 = vunpack.c.l.b16 %v45
  %v241 = vunpack.c.l.b16 %v46
  %v242 = vunpack.c.l.b16 %v47
  %v243 = vunpack.c.l.b16 %v48
  %v244 = vunpack.c.l.b16 %v49
  %v245 = vunpack.c.l.b16 %v50
  %v246 = vunpack.c.l.b16 %v51
  %v247 = vunpack.c.l.b16 %v52
  %v248 = vunpack.c.l.b16 %v53
  %v249 = vunpack.c.l.b16 %v54
  %v250 = vunpack.c.l.b16 %v55
  %v251 = vunpack.c.l.b16 %v56
  %v252 = vunpack.c.l.b16 %v57
  %v253 = vunpack.c.l.b16 %v58
  %v254 = vunpack.c.l.b16 %v59
  %v255 = vunpack.c.l.b16 %v60
  %v256 = vunpack.c.l.b16 %v61
  %v257 = vunpack.c.l.b16 %v62
  %v258 = vunpack.c.l.b16 %v63
  %v259 = vunpack.c.l.b16 %v64
  %v260 = vunpack.c.l.b16 %v65
  %v261 = vunpack.c.l.b16 %v66
  %v262 = vunpack.c.l.b16 %v67
  %v263 = vunpack.c.l.b16 %v68
  %v264 = vunpack.c.l.b16 %v69
  %v265 = vunpack.c.l.b16 %v70
  %v266 = vunpack.c.l.b16 %v71
  %v267 = vunpack.c.l.b16 %v72
  %v268 = vunpack.c.l.b16 %v73
  %v269 = vunpack.c.l.b16 %v74
  %v270 = vunpack.c.l.b16 %v75
  %v271 = vunpack.c.l.b16 %v76
  %v272 = vunpack.c.l.b16 %v77
  %v273 = vunpack.c.l.b16 %v78
  %v274 = vunpack.c.l.b16 %v79
  %v275 = vunpack.c.l.b16 %v80
  %v276 = vunpack.c.l.b16 %v81
  %v277 = vunpack.c.l.b16 %v82
  %v278 = vunpack.c.l.b16 %v83
  %v279 = vunpack.c.l.b16 %v84
  %v280 = vunpack.c.l.b16 %v85
  %v281 = vunpack.c.l.b16 %v86
  %v282 = vunpack.c.l.b16 %v87
  %v283 = vunpack.c.l.b16 %v88
  %v284 = vunpack.c.l.b16 %v89
  %v285 = vunpack.c.l.b16 %v90
  %v286 = vunpack.c.l.b16 %v91
  %v287 = vunpack.c.l.b16 %v92
  %v288 = vunpack.c.l.b16 %v93
  %v289 = vunpack.c.l.b16 %v94
  %v290 = vunpack.c.l.b16 %v95
  %v291 = vunpack.c.l.b16 %v96
  %v292 = vunpack.c.l.b16 %v97
  %v293 = vunpack.c.l.b16 %v98
  %v294 = vunpack.c.l.b16 %v99
  %v295 = vunpack.c.l.b16 %v100
  %v296 = vunpack.c.l.b16 %v101
  %v297 = vunpack.c.l.b16 %v102
  %v298 = vunpack.c.l.b16 %v103
  %v299 = vunpack.c.l.b16 %v104
  %v300 = vunpack.c.l.b16 %v105
  %v301 = vunpack.c.l.b16 %v106
  %v302 = vunpack.c.l.b16 %v107
  %v303 = vunpack.c.l.b16 %v108
  %v304 = vunpack.c.l.b16 %v109
  %v305 = vunpack.c.l.b16 %v110
  %v306 = vunpack.c.l.b16 %v111
  %v307 = vpack.c.b16 %v236, %v235
  %v308 = vpack.c.b16 %v238, %v237
  %v309 = vpack.c.b16 %v240, %v239
  %v310 = vpack.c.b16 %v242, %v241
  %v311 = vpack.c.b16 %v244, %v243
  %v312 = vpack.c.b16 %v246, %v245
  %v313 = vpack.c.b16 %v248, %v247
  %v314 = vpack.c.b16 %v250, %v249
  %v315 = vpack.c.b16 %v252, %v251
  %v316 = vpack.c.b16 %v254, %v253
  %v317 = vpack.c.b16 %v256, %v255
  %v318 = vpack.c.b16 %v258, %v257
  %v319 = vpack.c.b16 %v260, %v259
  %v320 = vpack.c.b16 %v262, %v261
  %v321 = vpack.c.b16 %v264, %v263
  %v322 = vpack.c.b16 %v266, %v265
  %v323 = vpack.c.b16 %v268, %v267
  %v324 = vpack.c.b16 %v270, %v269
  %v325 = vpack.c.b16 %v272, %v271
  %v326 = vpack.c.b16 %v274, %v273
  %v327 = vpack.c.b16 %v276, %v275
  %v328 = vpack.c.b16 %v278, %v277
  %v329 = vpack.c.b16 %v280, %v279
  %v330 = vpack.c.b16 %v282, %v281
  %v331 = vpack.c.b16 %v284, %v283
  %v332 = vpack.c.b16 %v286, %v285
  %v333 = vpack.c.b16 %v288, %v287
  %v334 = vpack.c.b16 %v290, %v289
  %v335 = vpack.c.b16 %v292, %v291
  %v336 = vpack.c.b16 %v294, %v293
  %v337 = vpack.c.b16 %v296, %v295
  %v338 = vpack.c.b16 %v298, %v297
  %v339 = vpack.c.b16 %v300, %v299
  %v340 = vpack.c.b16 %v302, %v301
  %v341 = vpack.c.b16 %v304, %v303
  %v342 = vpack.c.b16 %v306, %v305
  %vm379 = vcmask 523264
  %v381 = vsel %vm379, %v149, 0
  %383 = vmatprep.subr.bf16.mxu0 0
  %384 = vmatpush1.bf16.msra.mxu0 %v307
  %385 = vmatprep.subr.bf16.mxu0 0
  %386 = vmatpush1.bf16.msra.mxu0 %v308
  %387 = vmatprep.subr.bf16.mxu0 0
  %388 = vmatpush1.bf16.msra.mxu0 %v309
  %389 = vmatprep.subr.bf16.mxu0 0
  %390 = vmatpush1.bf16.msra.mxu0 %v310
  %391 = vmatprep.subr.bf16.mxu0 0
  %392 = vmatpush1.bf16.msra.mxu0 %v311
  %393 = vmatprep.subr.bf16.mxu0 0
  %394 = vmatpush1.bf16.msra.mxu0 %v312
  %395 = vmatprep.subr.bf16.mxu0 0
  %396 = vmatpush1.bf16.msra.mxu0 %v313
  %397 = vmatprep.subr.bf16.mxu0 0
  %398 = vmatpush1.bf16.msra.mxu0 %v314
  %399 = vmatprep.subr.bf16.mxu0 0
  %400 = vmatpush1.bf16.msra.mxu0 %v315
  %401 = vmatprep.subr.bf16.mxu0 0
  %402 = vmatpush1.bf16.msra.mxu0 %v316
  %403 = vmatprep.subr.bf16.mxu0 0
  %404 = vmatpush1.bf16.msra.mxu0 %v317
  %405 = vmatprep.subr.bf16.mxu0 0
  %406 = vmatpush1.bf16.msra.mxu0 %v318
  %407 = vmatprep.subr.bf16.mxu0 0
  %408 = vmatpush1.bf16.msra.mxu0 %v319
  %409 = vmatprep.subr.bf16.mxu0 0
  %410 = vmatpush1.bf16.msra.mxu0 %v320
  %411 = vmatprep.subr.bf16.mxu0 0
  %412 = vmatpush1.bf16.msra.mxu0 %v321
  %413 = vmatprep.subr.bf16.mxu0 0
  %414 = vmatpush1.bf16.msra.mxu0 %v322
  %415 = vmatprep.mubr.bf16.mxu0 %v156
  %416 = vmatmul.mubr.bf16.gmra.mrb[0].mxu0 %v142
  %v417 = vpop.f32.mrb[0].mxu0
  %v418 = vadd.f32 %v117, %v417
  %v419 = vpop.f32.mrb[0].mxu0
  %v420 = vpop.f32.mrb[0].mxu0
  %v421 = vpop.f32.mrb[0].mxu0
  %422 = vdwg.mxu0
  %423 = vmatprep.subr.bf16.mxu0 0
  %424 = vmatpush1.bf16.msra.mxu0 %v323
  %425 = vmatprep.subr.bf16.mxu0 0
  %426 = vmatpush1.bf16.msra.mxu0 %v324
  %427 = vmatprep.subr.bf16.mxu0 0
  %428 = vmatpush1.bf16.msra.mxu0 %v325
  %429 = vmatprep.subr.bf16.mxu0 0
  %430 = vmatpush1.bf16.msra.mxu0 %v326
  %431 = vmatprep.subr.bf16.mxu0 0
  %432 = vmatpush1.bf16.msra.mxu0 %v327
  %433 = vmatprep.subr.bf16.mxu0 0
  %434 = vmatpush1.bf16.msra.mxu0 %v328
  %435 = vmatprep.subr.bf16.mxu0 0
  %436 = vmatpush1.bf16.msra.mxu0 %v329
  %437 = vmatprep.subr.bf16.mxu0 0
  %438 = vmatpush1.bf16.msra.mxu0 %v330
  %439 = vmatprep.subr.bf16.mxu0 0
  %440 = vmatpush1.bf16.msra.mxu0 %v331
  %441 = vmatprep.subr.bf16.mxu0 0
  %442 = vmatpush1.bf16.msra.mxu0 %v332
  %443 = vmatprep.subr.bf16.mxu0 0
  %444 = vmatpush1.bf16.msra.mxu0 %v333
  %445 = vmatprep.subr.bf16.mxu0 0
  %446 = vmatpush1.bf16.msra.mxu0 %v334
  %447 = vmatprep.subr.bf16.mxu0 0
  %448 = vmatpush1.bf16.msra.mxu0 %v335
  %449 = vmatprep.subr.bf16.mxu0 0
  %450 = vmatpush1.bf16.msra.mxu0 %v336
  %451 = vmatprep.subr.bf16.mxu0 0
  %452 = vmatpush1.bf16.msra.mxu0 %v337
  %453 = vmatprep.subr.bf16.mxu0 0
  %454 = vmatpush1.bf16.msra.mxu0 %v338
  %455 = vmatprep.mubr.bf16.mxu0 %v158
  %456 = vmatmul.mubr.bf16.gmra.mrb[0].mxu0 %v157
  %v457 = vpop.f32.mrb[0].mxu0
  %v458 = vadd.f32 %v418, %v457
  %v459 = vpop.f32.mrb[0].mxu0
  %v460 = vpop.f32.mrb[0].mxu0
  %v461 = vpop.f32.mrb[0].mxu0
  %462 = vdwg.mxu0
  %463 = vmatprep.subr.bf16.mxu0 0
  %464 = vmatpush1.bf16.msra.mxu0 %v339
  %465 = vmatprep.subr.bf16.mxu0 0
  %466 = vmatpush1.bf16.msra.mxu0 %v340
  %467 = vmatprep.subr.bf16.mxu0 0
  %468 = vmatpush1.bf16.msra.mxu0 %v341
  %469 = vmatprep.subr.bf16.mxu0 0
  %470 = vmatpush1.bf16.msra.mxu0 %v342
  %471 = vmatprep.subr.bf16.mxu0 0
  %472 = vmatpush1.bf16.msra.mxu0 0
  %473 = vmatprep.subr.bf16.mxu0 0
  %474 = vmatpush1.bf16.msra.mxu0 0
  %475 = vmatprep.subr.bf16.mxu0 0
  %476 = vmatpush1.bf16.msra.mxu0 0
  %477 = vmatprep.subr.bf16.mxu0 0
  %478 = vmatpush1.bf16.msra.mxu0 0
  %479 = vmatprep.subr.bf16.mxu0 0
  %480 = vmatpush1.bf16.msra.mxu0 0
  %481 = vmatprep.subr.bf16.mxu0 0
  %482 = vmatpush1.bf16.msra.mxu0 0
  %483 = vmatprep.subr.bf16.mxu0 0
  %484 = vmatpush1.bf16.msra.mxu0 0
  %485 = vmatprep.subr.bf16.mxu0 0
  %486 = vmatpush1.bf16.msra.mxu0 0
  %487 = vmatprep.subr.bf16.mxu0 0
  %488 = vmatpush1.bf16.msra.mxu0 0
  %489 = vmatprep.subr.bf16.mxu0 0
  %490 = vmatpush1.bf16.msra.mxu0 0
  %491 = vmatprep.subr.bf16.mxu0 0
  %492 = vmatpush1.bf16.msra.mxu0 0
  %493 = vmatprep.subr.bf16.mxu0 0
  %494 = vmatpush1.bf16.msra.mxu0 0
  %495 = vmatprep.mubr.bf16.mxu0 0
  %496 = vmatmul.mubr.bf16.gmra.mrb[0].mxu0 %v381
  %v497 = vpop.f32.mrb[0].mxu0
  %v498 = vadd.f32 %v458, %v497
  %v499 = vpop.f32.mrb[0].mxu0
  %v500 = vpop.f32.mrb[0].mxu0
  %v501 = vpop.f32.mrb[0].mxu0
  %502 = vdwg.mxu0
  %v503 = vmax.f32 %v498, 0.0
  %v504 = vpack.c.bf16 %v503, %v503
  %v505 = vld [vmem:[%s3] sm:$0xff]
  %v506 = vld [vmem:[%s3 + $0x8] sm:$0xff]
  %v507 = vld [vmem:[%s3 + $0x10] sm:$0xff]
  %v508 = vld [vmem:[%s3 + $0x18] sm:$0xff]
  %v509 = vld [vmem:[%s3 + $0x20] sm:$0xff]
  %v510 = vld [vmem:[%s3 + $0x28] sm:$0xff]
  %v511 = vld [vmem:[%s3 + $0x30] sm:$0xff]
  %v512 = vld [vmem:[%s3 + $0x38] sm:$0xff]
  %v513 = vld [vmem:[%s3 + $0x40] sm:$0xff]
  %v514 = vld [vmem:[%s3 + $0x48] sm:$0xff]
  %v515 = vld [vmem:[%s3 + $0x50] sm:$0xff]
  %v516 = vld [vmem:[%s3 + $0x58] sm:$0xff]
  %v517 = vld [vmem:[%s3 + $0x60] sm:$0xff]
  %v518 = vld [vmem:[%s3 + $0x68] sm:$0xff]
  %v519 = vld [vmem:[%s3 + $0x70] sm:$0xff]
  %v520 = vld [vmem:[%s3 + $0x78] sm:$0xff]
  %v521 = vld [vmem:[%s4] sm:$0xf]
  %v523 = vlaneseq
  %v524 = vshrl.u32 %v523, 7
  %v525 = vsub.s32 0, %v524
  %v526 = vrot.slane %v521, %v525
  %v527 = vlaneseq
  %v528 = vshrl.u32 %v527, 7
  %v529 = vsub.s32 1, %v528
  %v530 = vrot.slane %v521, %v529
  %v531 = vlaneseq
  %v532 = vshrl.u32 %v531, 7
  %v533 = vsub.s32 2, %v532
  %v534 = vrot.slane %v521, %v533
  %v535 = vlaneseq
  %v536 = vshrl.u32 %v535, 7
  %v537 = vsub.s32 3, %v536
  %v538 = vrot.slane %v521, %v537
  %v559 = vunpack.c.l.b16 %v505
  %v560 = vunpack.c.h.b16 %v505
  %v561 = vunpack.c.l.b16 %v506
  %v562 = vunpack.c.h.b16 %v506
  %v563 = vunpack.c.l.b16 %v507
  %v564 = vunpack.c.h.b16 %v507
  %v565 = vunpack.c.l.b16 %v508
  %v566 = vunpack.c.h.b16 %v508
  %v567 = vunpack.c.l.b16 %v509
  %v568 = vunpack.c.h.b16 %v509
  %v569 = vunpack.c.l.b16 %v510
  %v570 = vunpack.c.h.b16 %v510
  %v571 = vunpack.c.l.b16 %v511
  %v572 = vunpack.c.h.b16 %v511
  %v573 = vunpack.c.l.b16 %v512
  %v574 = vunpack.c.h.b16 %v512
  %v575 = vunpack.c.l.b16 %v513
  %v576 = vunpack.c.h.b16 %v513
  %v577 = vunpack.c.l.b16 %v514
  %v578 = vunpack.c.h.b16 %v514
  %v579 = vunpack.c.l.b16 %v515
  %v580 = vunpack.c.h.b16 %v515
  %v581 = vunpack.c.l.b16 %v516
  %v582 = vunpack.c.h.b16 %v516
  %v583 = vunpack.c.l.b16 %v517
  %v584 = vunpack.c.h.b16 %v517
  %v585 = vunpack.c.l.b16 %v518
  %v586 = vunpack.c.h.b16 %v518
  %v587 = vunpack.c.l.b16 %v519
  %v588 = vunpack.c.h.b16 %v519
  %v589 = vunpack.c.l.b16 %v520
  %v590 = vunpack.c.h.b16 %v520
  %v591 = vpack.c.b16 %v563, %v559
  %v592 = vpack.c.b16 %v564, %v560
  %v593 = vpack.c.b16 %v565, %v561
  %v594 = vpack.c.b16 %v566, %v562
  %v595 = vpack.c.b16 %v571, %v567
  %v596 = vpack.c.b16 %v572, %v568
  %v597 = vpack.c.b16 %v573, %v569
  %v598 = vpack.c.b16 %v574, %v570
  %v599 = vpack.c.b16 %v579, %v575
  %v600 = vpack.c.b16 %v580, %v576
  %v601 = vpack.c.b16 %v581, %v577
  %v602 = vpack.c.b16 %v582, %v578
  %v603 = vpack.c.b16 %v587, %v583
  %v604 = vpack.c.b16 %v588, %v584
  %v605 = vpack.c.b16 %v589, %v585
  %v606 = vpack.c.b16 %v590, %v586
  %v624 = vsel %vm379, %v504, 0
  %626 = vmatprep.subr.bf16.mxu0 %v592
  %627 = vmatpush1.bf16.msra.mxu0 %v591
  %628 = vmatprep.subr.bf16.mxu0 %v596
  %629 = vmatpush1.bf16.msra.mxu0 %v595
  %630 = vmatprep.subr.bf16.mxu0 %v600
  %631 = vmatpush1.bf16.msra.mxu0 %v599
  %632 = vmatprep.subr.bf16.mxu0 %v604
  %633 = vmatpush1.bf16.msra.mxu0 %v603
  %634 = vmatprep.subr.bf16.mxu0 0
  %635 = vmatpush1.bf16.msra.mxu0 0
  %636 = vmatprep.subr.bf16.mxu0 0
  %637 = vmatpush1.bf16.msra.mxu0 0
  %638 = vmatprep.subr.bf16.mxu0 0
  %639 = vmatpush1.bf16.msra.mxu0 0
  %640 = vmatprep.subr.bf16.mxu0 0
  %641 = vmatpush1.bf16.msra.mxu0 0
  %642 = vmatprep.subr.bf16.mxu0 0
  %643 = vmatpush1.bf16.msra.mxu0 0
  %644 = vmatprep.subr.bf16.mxu0 0
  %645 = vmatpush1.bf16.msra.mxu0 0
  %646 = vmatprep.subr.bf16.mxu0 0
  %647 = vmatpush1.bf16.msra.mxu0 0
  %648 = vmatprep.subr.bf16.mxu0 0
  %649 = vmatpush1.bf16.msra.mxu0 0
  %650 = vmatprep.subr.bf16.mxu0 0
  %651 = vmatpush1.bf16.msra.mxu0 0
  %652 = vmatprep.subr.bf16.mxu0 0
  %653 = vmatpush1.bf16.msra.mxu0 0
  %654 = vmatprep.subr.bf16.mxu0 0
  %655 = vmatpush1.bf16.msra.mxu0 0
  %656 = vmatprep.subr.bf16.mxu0 0
  %657 = vmatpush1.bf16.msra.mxu0 0
  %658 = vmatprep.mubr.bf16.mxu0 0
  %659 = vmatmul.mubr.bf16.gmra.mrb[0].mxu0 %v624
  %v660 = vpop.f32.mrb[0].mxu0
  %v661 = vadd.f32 %v526, %v660
  %v662 = vpop.f32.mrb[0].mxu0
  %v663 = vadd.f32 %v530, %v662
  %v664 = vpop.f32.mrb[0].mxu0
  %v665 = vpop.f32.mrb[0].mxu0
  %666 = vdwg.mxu0
  %667 = vmatprep.subr.bf16.mxu0 %v594
  %668 = vmatpush1.bf16.msra.mxu0 %v593
  %669 = vmatprep.subr.bf16.mxu0 %v598
  %670 = vmatpush1.bf16.msra.mxu0 %v597
  %671 = vmatprep.subr.bf16.mxu0 %v602
  %672 = vmatpush1.bf16.msra.mxu0 %v601
  %673 = vmatprep.subr.bf16.mxu0 %v606
  %674 = vmatpush1.bf16.msra.mxu0 %v605
  %675 = vmatprep.subr.bf16.mxu0 0
  %676 = vmatpush1.bf16.msra.mxu0 0
  %677 = vmatprep.subr.bf16.mxu0 0
  %678 = vmatpush1.bf16.msra.mxu0 0
  %679 = vmatprep.subr.bf16.mxu0 0
  %680 = vmatpush1.bf16.msra.mxu0 0
  %681 = vmatprep.subr.bf16.mxu0 0
  %682 = vmatpush1.bf16.msra.mxu0 0
  %683 = vmatprep.subr.bf16.mxu0 0
  %684 = vmatpush1.bf16.msra.mxu0 0
  %685 = vmatprep.subr.bf16.mxu0 0
  %686 = vmatpush1.bf16.msra.mxu0 0
  %687 = vmatprep.subr.bf16.mxu0 0
  %688 = vmatpush1.bf16.msra.mxu0 0
  %689 = vmatprep.subr.bf16.mxu0 0
  %690 = vmatpush1.bf16.msra.mxu0 0
  %691 = vmatprep.subr.bf16.mxu0 0
  %692 = vmatpush1.bf16.msra.mxu0 0
  %693 = vmatprep.subr.bf16.mxu0 0
  %694 = vmatpush1.bf16.msra.mxu0 0
  %695 = vmatprep.subr.bf16.mxu0 0
  %696 = vmatpush1.bf16.msra.mxu0 0
  %697 = vmatprep.subr.bf16.mxu0 0
  %698 = vmatpush1.bf16.msra.mxu0 0
  %699 = vmatprep.mubr.bf16.mxu0 0
  %700 = vmatmul.mubr.bf16.gmra.mrb[0].mxu0 %v624
  %v701 = vpop.f32.mrb[0].mxu0
  %v702 = vadd.f32 %v534, %v701
  %v703 = vpop.f32.mrb[0].mxu0
  %v704 = vadd.f32 %v538, %v703
  %v705 = vpop.f32.mrb[0].mxu0
  %v706 = vpop.f32.mrb[0].mxu0
  %707 = vdwg.mxu0
  %v708 = vmax.f32 %v661, 0.0
  %v709 = vmax.f32 %v663, 0.0
  %v710 = vmax.f32 %v702, 0.0
  %v711 = vmax.f32 %v704, 0.0
  %v712 = vpack.c.bf16 %v708, %v708
  %v713 = vpack.c.bf16 %v709, %v709
  %v714 = vpack.c.bf16 %v710, %v710
  %v715 = vpack.c.bf16 %v711, %v711
  %v716 = vld [vmem:[%s5] sm:$0xff]
  %v717 = vld [vmem:[%s5 + $0x8] sm:$0xff]
  %v718 = vld [vmem:[%s5 + $0x10] sm:$0xff]
  %v719 = vld [vmem:[%s5 + $0x18] sm:$0xff]
  %v720 = vld [vmem:[%s5 + $0x20] sm:$0xff]
  %v721 = vld [vmem:[%s5 + $0x28] sm:$0xff]
  %v722 = vld [vmem:[%s5 + $0x30] sm:$0xff]
  %v723 = vld [vmem:[%s5 + $0x38] sm:$0xff]
  %v724 = vld [vmem:[%s5 + $0x40] sm:$0xff]
  %v725 = vld [vmem:[%s5 + $0x48] sm:$0xff]
  %v726 = vld [vmem:[%s5 + $0x50] sm:$0xff]
  %v727 = vld [vmem:[%s5 + $0x58] sm:$0xff]
  %v728 = vld [vmem:[%s5 + $0x60] sm:$0xff]
  %v729 = vld [vmem:[%s5 + $0x68] sm:$0xff]
  %v730 = vld [vmem:[%s5 + $0x70] sm:$0xff]
  %v731 = vld [vmem:[%s5 + $0x78] sm:$0xff]
  %v732 = vld [vmem:[%s5 + $0x80] sm:$0xff]
  %v733 = vld [vmem:[%s5 + $0x88] sm:$0xff]
  %v734 = vld [vmem:[%s5 + $0x90] sm:$0xff]
  %v735 = vld [vmem:[%s5 + $0x98] sm:$0xff]
  %v736 = vld [vmem:[%s5 + $0xa0] sm:$0xff]
  %v737 = vld [vmem:[%s5 + $0xa8] sm:$0xff]
  %v738 = vld [vmem:[%s5 + $0xb0] sm:$0xff]
  %v739 = vld [vmem:[%s5 + $0xb8] sm:$0xff]
  %v740 = vld [vmem:[%s5 + $0xc0] sm:$0xff]
  %v741 = vld [vmem:[%s5 + $0xc8] sm:$0xff]
  %v742 = vld [vmem:[%s5 + $0xd0] sm:$0xff]
  %v743 = vld [vmem:[%s5 + $0xd8] sm:$0xff]
  %v744 = vld [vmem:[%s5 + $0xe0] sm:$0xff]
  %v745 = vld [vmem:[%s5 + $0xe8] sm:$0xff]
  %v746 = vld [vmem:[%s5 + $0xf0] sm:$0xff]
  %v747 = vld [vmem:[%s5 + $0xf8] sm:$0xff]
  %v748 = vld [vmem:[%s5 + $0x100] sm:$0xff]
  %v749 = vld [vmem:[%s5 + $0x108] sm:$0xff]
  %v750 = vld [vmem:[%s5 + $0x110] sm:$0xff]
  %v751 = vld [vmem:[%s5 + $0x118] sm:$0xff]
  %v752 = vld [vmem:[%s5 + $0x120] sm:$0xff]
  %v753 = vld [vmem:[%s5 + $0x128] sm:$0xff]
  %v754 = vld [vmem:[%s5 + $0x130] sm:$0xff]
  %v755 = vld [vmem:[%s5 + $0x138] sm:$0xff]
  %v756 = vld [vmem:[%s5 + $0x140] sm:$0xff]
  %v757 = vld [vmem:[%s5 + $0x148] sm:$0xff]
  %v758 = vld [vmem:[%s5 + $0x150] sm:$0xff]
  %v759 = vld [vmem:[%s5 + $0x158] sm:$0xff]
  %v760 = vld [vmem:[%s5 + $0x160] sm:$0xff]
  %v761 = vld [vmem:[%s5 + $0x168] sm:$0xff]
  %v762 = vld [vmem:[%s5 + $0x170] sm:$0xff]
  %v763 = vld [vmem:[%s5 + $0x178] sm:$0xff]
  %v764 = vld [vmem:[%s5 + $0x180] sm:$0xff]
  %v765 = vld [vmem:[%s5 + $0x188] sm:$0xff]
  %v766 = vld [vmem:[%s5 + $0x190] sm:$0xff]
  %v767 = vld [vmem:[%s5 + $0x198] sm:$0xff]
  %v768 = vld [vmem:[%s5 + $0x1a0] sm:$0xff]
  %v769 = vld [vmem:[%s5 + $0x1a8] sm:$0xff]
  %v770 = vld [vmem:[%s5 + $0x1b0] sm:$0xff]
  %v771 = vld [vmem:[%s5 + $0x1b8] sm:$0xff]
  %v772 = vld [vmem:[%s5 + $0x1c0] sm:$0xff]
  %v773 = vld [vmem:[%s5 + $0x1c8] sm:$0xff]
  %v774 = vld [vmem:[%s5 + $0x1d0] sm:$0xff]
  %v775 = vld [vmem:[%s5 + $0x1d8] sm:$0xff]
  %v776 = vld [vmem:[%s5 + $0x1e0] sm:$0xff]
  %v777 = vld [vmem:[%s5 + $0x1e8] sm:$0xff]
  %v778 = vld [vmem:[%s5 + $0x1f0] sm:$0xff]
  %v779 = vld [vmem:[%s5 + $0x1f8] sm:$0xff]
  %v780 = vld [vmem:[%s5 + $0x200] sm:$0xff]
  %v781 = vld [vmem:[%s5 + $0x208] sm:$0xff]
  %v782 = vld [vmem:[%s5 + $0x210] sm:$0xff]
  %v783 = vld [vmem:[%s5 + $0x218] sm:$0xff]
  %v784 = vld [vmem:[%s5 + $0x220] sm:$0xff]
  %v785 = vld [vmem:[%s5 + $0x228] sm:$0xff]
  %v786 = vld [vmem:[%s5 + $0x230] sm:$0xff]
  %v787 = vld [vmem:[%s5 + $0x238] sm:$0xff]
  %v788 = vld [vmem:[%s5 + $0x240] sm:$0xff]
  %v789 = vld [vmem:[%s5 + $0x248] sm:$0xff]
  %v790 = vld [vmem:[%s5 + $0x250] sm:$0xff]
  %v791 = vld [vmem:[%s5 + $0x258] sm:$0xff]
  %v792 = vld [vmem:[%s5 + $0x260] sm:$0xff]
  %v793 = vld [vmem:[%s5 + $0x268] sm:$0xff]
  %v794 = vld [vmem:[%s5 + $0x270] sm:$0xff]
  %v795 = vld [vmem:[%s5 + $0x278] sm:$0xff]
  %v796 = vld [vmem:[%s5 + $0x280] sm:$0xff]
  %v797 = vld [vmem:[%s5 + $0x288] sm:$0xff]
  %v798 = vld [vmem:[%s5 + $0x290] sm:$0xff]
  %v799 = vld [vmem:[%s5 + $0x298] sm:$0xff]
  %v800 = vld [vmem:[%s5 + $0x2a0] sm:$0xff]
  %v801 = vld [vmem:[%s5 + $0x2a8] sm:$0xff]
  %v802 = vld [vmem:[%s5 + $0x2b0] sm:$0xff]
  %v803 = vld [vmem:[%s5 + $0x2b8] sm:$0xff]
  %v804 = vld [vmem:[%s5 + $0x2c0] sm:$0xff]
  %v805 = vld [vmem:[%s5 + $0x2c8] sm:$0xff]
  %v806 = vld [vmem:[%s5 + $0x2d0] sm:$0xff]
  %v807 = vld [vmem:[%s5 + $0x2d8] sm:$0xff]
  %v808 = vld [vmem:[%s5 + $0x2e0] sm:$0xff]
  %v809 = vld [vmem:[%s5 + $0x2e8] sm:$0xff]
  %v810 = vld [vmem:[%s5 + $0x2f0] sm:$0xff]
  %v811 = vld [vmem:[%s5 + $0x2f8] sm:$0xff]
  %v812 = vld [vmem:[%s5 + $0x300] sm:$0xff]
  %v813 = vld [vmem:[%s5 + $0x308] sm:$0xff]
  %v814 = vld [vmem:[%s5 + $0x310] sm:$0xff]
  %v815 = vld [vmem:[%s5 + $0x318] sm:$0xff]
  %v816 = vld [vmem:[%s5 + $0x320] sm:$0xff]
  %v817 = vld [vmem:[%s5 + $0x328] sm:$0xff]
  %v818 = vld [vmem:[%s5 + $0x330] sm:$0xff]
  %v819 = vld [vmem:[%s5 + $0x338] sm:$0xff]
  %v820 = vld [vmem:[%s5 + $0x340] sm:$0xff]
  %v821 = vld [vmem:[%s5 + $0x348] sm:$0xff]
  %v822 = vld [vmem:[%s5 + $0x350] sm:$0xff]
  %v823 = vld [vmem:[%s5 + $0x358] sm:$0xff]
  %v824 = vld [vmem:[%s5 + $0x360] sm:$0xff]
  %v825 = vld [vmem:[%s5 + $0x368] sm:$0xff]
  %v826 = vld [vmem:[%s5 + $0x370] sm:$0xff]
  %v827 = vld [vmem:[%s5 + $0x378] sm:$0xff]
  %v828 = vld [vmem:[%s5 + $0x380] sm:$0xff]
  %v829 = vld [vmem:[%s5 + $0x388] sm:$0xff]
  %v830 = vld [vmem:[%s5 + $0x390] sm:$0xff]
  %v831 = vld [vmem:[%s5 + $0x398] sm:$0xff]
  %v832 = vld [vmem:[%s5 + $0x3a0] sm:$0xff]
  %v833 = vld [vmem:[%s5 + $0x3a8] sm:$0xff]
  %v834 = vld [vmem:[%s5 + $0x3b0] sm:$0xff]
  %v835 = vld [vmem:[%s5 + $0x3b8] sm:$0xff]
  %v836 = vld [vmem:[%s5 + $0x3c0] sm:$0xff]
  %v837 = vld [vmem:[%s5 + $0x3c8] sm:$0xff]
  %v838 = vld [vmem:[%s5 + $0x3d0] sm:$0xff]
  %v839 = vld [vmem:[%s5 + $0x3d8] sm:$0xff]
  %v840 = vld [vmem:[%s5 + $0x3e0] sm:$0xff]
  %v841 = vld [vmem:[%s5 + $0x3e8] sm:$0xff]
  %v842 = vld [vmem:[%s5 + $0x3f0] sm:$0xff]
  %v843 = vld [vmem:[%s5 + $0x3f8] sm:$0xff]
  %v844 = vld [vmem:[%s5 + $0x400] sm:$0xff]
  %v845 = vld [vmem:[%s5 + $0x408] sm:$0xff]
  %v846 = vld [vmem:[%s5 + $0x410] sm:$0xff]
  %v847 = vld [vmem:[%s5 + $0x418] sm:$0xff]
  %v848 = vld [vmem:[%s5 + $0x420] sm:$0xff]
  %v849 = vld [vmem:[%s5 + $0x428] sm:$0xff]
  %v850 = vld [vmem:[%s5 + $0x430] sm:$0xff]
  %v851 = vld [vmem:[%s5 + $0x438] sm:$0xff]
  %v852 = vld [vmem:[%s5 + $0x440] sm:$0xff]
  %v853 = vld [vmem:[%s5 + $0x448] sm:$0xff]
  %v854 = vld [vmem:[%s5 + $0x450] sm:$0xff]
  %v855 = vld [vmem:[%s5 + $0x458] sm:$0xff]
  %v856 = vld [vmem:[%s5 + $0x460] sm:$0xff]
  %v857 = vld [vmem:[%s5 + $0x468] sm:$0xff]
  %v858 = vld [vmem:[%s5 + $0x470] sm:$0xff]
  %v859 = vld [vmem:[%s5 + $0x478] sm:$0xff]
  %v860 = vld [vmem:[%s5 + $0x480] sm:$0xff]
  %v861 = vld [vmem:[%s5 + $0x488] sm:$0xff]
  %v862 = vld [vmem:[%s5 + $0x490] sm:$0xff]
  %v863 = vld [vmem:[%s5 + $0x498] sm:$0xff]
  %v864 = vld [vmem:[%s5 + $0x4a0] sm:$0xff]
  %v865 = vld [vmem:[%s5 + $0x4a8] sm:$0xff]
  %v866 = vld [vmem:[%s5 + $0x4b0] sm:$0xff]
  %v867 = vld [vmem:[%s5 + $0x4b8] sm:$0xff]
  %v868 = vld [vmem:[%s5 + $0x4c0] sm:$0xff]
  %v869 = vld [vmem:[%s5 + $0x4c8] sm:$0xff]
  %v870 = vld [vmem:[%s5 + $0x4d0] sm:$0xff]
  %v871 = vld [vmem:[%s5 + $0x4d8] sm:$0xff]
  %v872 = vld [vmem:[%s5 + $0x4e0] sm:$0xff]
  %v873 = vld [vmem:[%s5 + $0x4e8] sm:$0xff]
  %v874 = vld [vmem:[%s5 + $0x4f0] sm:$0xff]
  %v875 = vld [vmem:[%s5 + $0x4f8] sm:$0xff]
  %v876 = vld [vmem:[%s5 + $0x500] sm:$0xff]
  %v877 = vld [vmem:[%s5 + $0x508] sm:$0xff]
  %v878 = vld [vmem:[%s5 + $0x510] sm:$0xff]
  %v879 = vld [vmem:[%s5 + $0x518] sm:$0xff]
  %v880 = vld [vmem:[%s5 + $0x520] sm:$0xff]
  %v881 = vld [vmem:[%s5 + $0x528] sm:$0xff]
  %v882 = vld [vmem:[%s5 + $0x530] sm:$0xff]
  %v883 = vld [vmem:[%s5 + $0x538] sm:$0xff]
  %v884 = vld [vmem:[%s5 + $0x540] sm:$0xff]
  %v885 = vld [vmem:[%s5 + $0x548] sm:$0xff]
  %v886 = vld [vmem:[%s5 + $0x550] sm:$0xff]
  %v887 = vld [vmem:[%s5 + $0x558] sm:$0xff]
  %v888 = vld [vmem:[%s5 + $0x560] sm:$0xff]
  %v889 = vld [vmem:[%s5 + $0x568] sm:$0xff]
  %v890 = vld [vmem:[%s5 + $0x570] sm:$0xff]
  %v891 = vld [vmem:[%s5 + $0x578] sm:$0xff]
  %v892 = vld [vmem:[%s5 + $0x580] sm:$0xff]
  %v893 = vld [vmem:[%s5 + $0x588] sm:$0xff]
  %v894 = vld [vmem:[%s5 + $0x590] sm:$0xff]
  %v895 = vld [vmem:[%s5 + $0x598] sm:$0xff]
  %v896 = vld [vmem:[%s5 + $0x5a0] sm:$0xff]
  %v897 = vld [vmem:[%s5 + $0x5a8] sm:$0xff]
  %v898 = vld [vmem:[%s5 + $0x5b0] sm:$0xff]
  %v899 = vld [vmem:[%s5 + $0x5b8] sm:$0xff]
  %v900 = vld [vmem:[%s5 + $0x5c0] sm:$0xff]
  %v901 = vld [vmem:[%s5 + $0x5c8] sm:$0xff]
  %v902 = vld [vmem:[%s5 + $0x5d0] sm:$0xff]
  %v903 = vld [vmem:[%s5 + $0x5d8] sm:$0xff]
  %v904 = vld [vmem:[%s5 + $0x5e0] sm:$0xff]
  %v905 = vld [vmem:[%s5 + $0x5e8] sm:$0xff]
  %v906 = vld [vmem:[%s5 + $0x5f0] sm:$0xff]
  %v907 = vld [vmem:[%s5 + $0x5f8] sm:$0xff]
  %v908 = vld [vmem:[%s6] sm:$0x3f]
  %v910 = vlaneseq
  %v911 = vshrl.u32 %v910, 7
  %v912 = vsub.s32 0, %v911
  %v913 = vrot.slane %v908, %v912
  %v914 = vlaneseq
  %v915 = vshrl.u32 %v914, 7
  %v916 = vsub.s32 1, %v915
  %v917 = vrot.slane %v908, %v916
  %v918 = vlaneseq
  %v919 = vshrl.u32 %v918, 7
  %v920 = vsub.s32 2, %v919
  %v921 = vrot.slane %v908, %v920
  %v922 = vlaneseq
  %v923 = vshrl.u32 %v922, 7
  %v924 = vsub.s32 3, %v923
  %v925 = vrot.slane %v908, %v924
  %v926 = vlaneseq
  %v927 = vshrl.u32 %v926, 7
  %v928 = vsub.s32 4, %v927
  %v929 = vrot.slane %v908, %v928
  %v930 = vlaneseq
  %v931 = vshrl.u32 %v930, 7
  %v932 = vsub.s32 5, %v931
  %v933 = vrot.slane %v908, %v932
  %v1132 = vunpack.c.l.b16 %v716
  %v1133 = vunpack.c.h.b16 %v716
  %v1134 = vunpack.c.l.b16 %v717
  %v1135 = vunpack.c.h.b16 %v717
  %v1136 = vunpack.c.l.b16 %v718
  %v1137 = vunpack.c.h.b16 %v718
  %v1138 = vunpack.c.l.b16 %v719
  %v1139 = vunpack.c.h.b16 %v719
  %v1140 = vunpack.c.l.b16 %v720
  %v1141 = vunpack.c.h.b16 %v720
  %v1142 = vunpack.c.l.b16 %v721
  %v1143 = vunpack.c.h.b16 %v721
  %v1144 = vunpack.c.l.b16 %v722
  %v1145 = vunpack.c.h.b16 %v722
  %v1146 = vunpack.c.l.b16 %v723
  %v1147 = vunpack.c.h.b16 %v723
  %v1148 = vunpack.c.l.b16 %v724
  %v1149 = vunpack.c.h.b16 %v724
  %v1150 = vunpack.c.l.b16 %v725
  %v1151 = vunpack.c.h.b16 %v725
  %v1152 = vunpack.c.l.b16 %v726
  %v1153 = vunpack.c.h.b16 %v726
  %v1154 = vunpack.c.l.b16 %v727
  %v1155 = vunpack.c.h.b16 %v727
  %v1156 = vunpack.c.l.b16 %v728
  %v1157 = vunpack.c.h.b16 %v728
  %v1158 = vunpack.c.l.b16 %v729
  %v1159 = vunpack.c.h.b16 %v729
  %v1160 = vunpack.c.l.b16 %v730
  %v1161 = vunpack.c.h.b16 %v730
  %v1162 = vunpack.c.l.b16 %v731
  %v1163 = vunpack.c.h.b16 %v731
  %v1164 = vunpack.c.l.b16 %v732
  %v1165 = vunpack.c.h.b16 %v732
  %v1166 = vunpack.c.l.b16 %v733
  %v1167 = vunpack.c.h.b16 %v733
  %v1168 = vunpack.c.l.b16 %v734
  %v1169 = vunpack.c.h.b16 %v734
  %v1170 = vunpack.c.l.b16 %v735
  %v1171 = vunpack.c.h.b16 %v735
  %v1172 = vunpack.c.l.b16 %v736
  %v1173 = vunpack.c.h.b16 %v736
  %v1174 = vunpack.c.l.b16 %v737
  %v1175 = vunpack.c.h.b16 %v737
  %v1176 = vunpack.c.l.b16 %v738
  %v1177 = vunpack.c.h.b16 %v738
  %v1178 = vunpack.c.l.b16 %v739
  %v1179 = vunpack.c.h.b16 %v739
  %v1180 = vunpack.c.l.b16 %v740
  %v1181 = vunpack.c.h.b16 %v740
  %v1182 = vunpack.c.l.b16 %v741
  %v1183 = vunpack.c.h.b16 %v741
  %v1184 = vunpack.c.l.b16 %v742
  %v1185 = vunpack.c.h.b16 %v742
  %v1186 = vunpack.c.l.b16 %v743
  %v1187 = vunpack.c.h.b16 %v743
  %v1188 = vunpack.c.l.b16 %v744
  %v1189 = vunpack.c.h.b16 %v744
  %v1190 = vunpack.c.l.b16 %v745
  %v1191 = vunpack.c.h.b16 %v745
  %v1192 = vunpack.c.l.b16 %v746
  %v1193 = vunpack.c.h.b16 %v746
  %v1194 = vunpack.c.l.b16 %v747
  %v1195 = vunpack.c.h.b16 %v747
  %v1196 = vunpack.c.l.b16 %v748
  %v1197 = vunpack.c.h.b16 %v748
  %v1198 = vunpack.c.l.b16 %v749
  %v1199 = vunpack.c.h.b16 %v749
  %v1200 = vunpack.c.l.b16 %v750
  %v1201 = vunpack.c.h.b16 %v750
  %v1202 = vunpack.c.l.b16 %v751
  %v1203 = vunpack.c.h.b16 %v751
  %v1204 = vunpack.c.l.b16 %v752
  %v1205 = vunpack.c.h.b16 %v752
  %v1206 = vunpack.c.l.b16 %v753
  %v1207 = vunpack.c.h.b16 %v753
  %v1208 = vunpack.c.l.b16 %v754
  %v1209 = vunpack.c.h.b16 %v754
  %v1210 = vunpack.c.l.b16 %v755
  %v1211 = vunpack.c.h.b16 %v755
  %v1212 = vunpack.c.l.b16 %v756
  %v1213 = vunpack.c.h.b16 %v756
  %v1214 = vunpack.c.l.b16 %v757
  %v1215 = vunpack.c.h.b16 %v757
  %v1216 = vunpack.c.l.b16 %v758
  %v1217 = vunpack.c.h.b16 %v758
  %v1218 = vunpack.c.l.b16 %v759
  %v1219 = vunpack.c.h.b16 %v759
  %v1220 = vunpack.c.l.b16 %v760
  %v1221 = vunpack.c.h.b16 %v760
  %v1222 = vunpack.c.l.b16 %v761
  %v1223 = vunpack.c.h.b16 %v761
  %v1224 = vunpack.c.l.b16 %v762
  %v1225 = vunpack.c.h.b16 %v762
  %v1226 = vunpack.c.l.b16 %v763
  %v1227 = vunpack.c.h.b16 %v763
  %v1228 = vunpack.c.l.b16 %v764
  %v1229 = vunpack.c.h.b16 %v764
  %v1230 = vunpack.c.l.b16 %v765
  %v1231 = vunpack.c.h.b16 %v765
  %v1232 = vunpack.c.l.b16 %v766
  %v1233 = vunpack.c.h.b16 %v766
  %v1234 = vunpack.c.l.b16 %v767
  %v1235 = vunpack.c.h.b16 %v767
  %v1236 = vunpack.c.l.b16 %v768
  %v1237 = vunpack.c.h.b16 %v768
  %v1238 = vunpack.c.l.b16 %v769
  %v1239 = vunpack.c.h.b16 %v769
  %v1240 = vunpack.c.l.b16 %v770
  %v1241 = vunpack.c.h.b16 %v770
  %v1242 = vunpack.c.l.b16 %v771
  %v1243 = vunpack.c.h.b16 %v771
  %v1244 = vunpack.c.l.b16 %v772
  %v1245 = vunpack.c.h.b16 %v772
  %v1246 = vunpack.c.l.b16 %v773
  %v1247 = vunpack.c.h.b16 %v773
  %v1248 = vunpack.c.l.b16 %v774
  %v1249 = vunpack.c.h.b16 %v774
  %v1250 = vunpack.c.l.b16 %v775
  %v1251 = vunpack.c.h.b16 %v775
  %v1252 = vunpack.c.l.b16 %v776
  %v1253 = vunpack.c.h.b16 %v776
  %v1254 = vunpack.c.l.b16 %v777
  %v1255 = vunpack.c.h.b16 %v777
  %v1256 = vunpack.c.l.b16 %v778
  %v1257 = vunpack.c.h.b16 %v778
  %v1258 = vunpack.c.l.b16 %v779
  %v1259 = vunpack.c.h.b16 %v779
  %v1260 = vunpack.c.l.b16 %v780
  %v1261 = vunpack.c.h.b16 %v780
  %v1262 = vunpack.c.l.b16 %v781
  %v1263 = vunpack.c.h.b16 %v781
  %v1264 = vunpack.c.l.b16 %v782
  %v1265 = vunpack.c.h.b16 %v782
  %v1266 = vunpack.c.l.b16 %v783
  %v1267 = vunpack.c.h.b16 %v783
  %v1268 = vunpack.c.l.b16 %v784
  %v1269 = vunpack.c.h.b16 %v784
  %v1270 = vunpack.c.l.b16 %v785
  %v1271 = vunpack.c.h.b16 %v785
  %v1272 = vunpack.c.l.b16 %v786
  %v1273 = vunpack.c.h.b16 %v786
  %v1274 = vunpack.c.l.b16 %v787
  %v1275 = vunpack.c.h.b16 %v787
  %v1276 = vunpack.c.l.b16 %v788
  %v1277 = vunpack.c.h.b16 %v788
  %v1278 = vunpack.c.l.b16 %v789
  %v1279 = vunpack.c.h.b16 %v789
  %v1280 = vunpack.c.l.b16 %v790
  %v1281 = vunpack.c.h.b16 %v790
  %v1282 = vunpack.c.l.b16 %v791
  %v1283 = vunpack.c.h.b16 %v791
  %v1284 = vunpack.c.l.b16 %v792
  %v1285 = vunpack.c.h.b16 %v792
  %v1286 = vunpack.c.l.b16 %v793
  %v1287 = vunpack.c.h.b16 %v793
  %v1288 = vunpack.c.l.b16 %v794
  %v1289 = vunpack.c.h.b16 %v794
  %v1290 = vunpack.c.l.b16 %v795
  %v1291 = vunpack.c.h.b16 %v795
  %v1292 = vunpack.c.l.b16 %v796
  %v1293 = vunpack.c.h.b16 %v796
  %v1294 = vunpack.c.l.b16 %v797
  %v1295 = vunpack.c.h.b16 %v797
  %v1296 = vunpack.c.l.b16 %v798
  %v1297 = vunpack.c.h.b16 %v798
  %v1298 = vunpack.c.l.b16 %v799
  %v1299 = vunpack.c.h.b16 %v799
  %v1300 = vunpack.c.l.b16 %v800
  %v1301 = vunpack.c.h.b16 %v800
  %v1302 = vunpack.c.l.b16 %v801
  %v1303 = vunpack.c.h.b16 %v801
  %v1304 = vunpack.c.l.b16 %v802
  %v1305 = vunpack.c.h.b16 %v802
  %v1306 = vunpack.c.l.b16 %v803
  %v1307 = vunpack.c.h.b16 %v803
  %v1308 = vunpack.c.l.b16 %v804
  %v1309 = vunpack.c.h.b16 %v804
  %v1310 = vunpack.c.l.b16 %v805
  %v1311 = vunpack.c.h.b16 %v805
  %v1312 = vunpack.c.l.b16 %v806
  %v1313 = vunpack.c.h.b16 %v806
  %v1314 = vunpack.c.l.b16 %v807
  %v1315 = vunpack.c.h.b16 %v807
  %v1316 = vunpack.c.l.b16 %v808
  %v1317 = vunpack.c.h.b16 %v808
  %v1318 = vunpack.c.l.b16 %v809
  %v1319 = vunpack.c.h.b16 %v809
  %v1320 = vunpack.c.l.b16 %v810
  %v1321 = vunpack.c.h.b16 %v810
  %v1322 = vunpack.c.l.b16 %v811
  %v1323 = vunpack.c.h.b16 %v811
  %v1324 = vunpack.c.l.b16 %v812
  %v1325 = vunpack.c.h.b16 %v812
  %v1326 = vunpack.c.l.b16 %v813
  %v1327 = vunpack.c.h.b16 %v813
  %v1328 = vunpack.c.l.b16 %v814
  %v1329 = vunpack.c.h.b16 %v814
  %v1330 = vunpack.c.l.b16 %v815
  %v1331 = vunpack.c.h.b16 %v815
  %v1332 = vunpack.c.l.b16 %v816
  %v1333 = vunpack.c.h.b16 %v816
  %v1334 = vunpack.c.l.b16 %v817
  %v1335 = vunpack.c.h.b16 %v817
  %v1336 = vunpack.c.l.b16 %v818
  %v1337 = vunpack.c.h.b16 %v818
  %v1338 = vunpack.c.l.b16 %v819
  %v1339 = vunpack.c.h.b16 %v819
  %v1340 = vunpack.c.l.b16 %v820
  %v1341 = vunpack.c.h.b16 %v820
  %v1342 = vunpack.c.l.b16 %v821
  %v1343 = vunpack.c.h.b16 %v821
  %v1344 = vunpack.c.l.b16 %v822
  %v1345 = vunpack.c.h.b16 %v822
  %v1346 = vunpack.c.l.b16 %v823
  %v1347 = vunpack.c.h.b16 %v823
  %v1348 = vunpack.c.l.b16 %v824
  %v1349 = vunpack.c.h.b16 %v824
  %v1350 = vunpack.c.l.b16 %v825
  %v1351 = vunpack.c.h.b16 %v825
  %v1352 = vunpack.c.l.b16 %v826
  %v1353 = vunpack.c.h.b16 %v826
  %v1354 = vunpack.c.l.b16 %v827
  %v1355 = vunpack.c.h.b16 %v827
  %v1356 = vunpack.c.l.b16 %v828
  %v1357 = vunpack.c.h.b16 %v828
  %v1358 = vunpack.c.l.b16 %v829
  %v1359 = vunpack.c.h.b16 %v829
  %v1360 = vunpack.c.l.b16 %v830
  %v1361 = vunpack.c.h.b16 %v830
  %v1362 = vunpack.c.l.b16 %v831
  %v1363 = vunpack.c.h.b16 %v831
  %v1364 = vunpack.c.l.b16 %v832
  %v1365 = vunpack.c.h.b16 %v832
  %v1366 = vunpack.c.l.b16 %v833
  %v1367 = vunpack.c.h.b16 %v833
  %v1368 = vunpack.c.l.b16 %v834
  %v1369 = vunpack.c.h.b16 %v834
  %v1370 = vunpack.c.l.b16 %v835
  %v1371 = vunpack.c.h.b16 %v835
  %v1372 = vunpack.c.l.b16 %v836
  %v1373 = vunpack.c.h.b16 %v836
  %v1374 = vunpack.c.l.b16 %v837
  %v1375 = vunpack.c.h.b16 %v837
  %v1376 = vunpack.c.l.b16 %v838
  %v1377 = vunpack.c.h.b16 %v838
  %v1378 = vunpack.c.l.b16 %v839
  %v1379 = vunpack.c.h.b16 %v839
  %v1380 = vunpack.c.l.b16 %v840
  %v1381 = vunpack.c.h.b16 %v840
  %v1382 = vunpack.c.l.b16 %v841
  %v1383 = vunpack.c.h.b16 %v841
  %v1384 = vunpack.c.l.b16 %v842
  %v1385 = vunpack.c.h.b16 %v842
  %v1386 = vunpack.c.l.b16 %v843
  %v1387 = vunpack.c.h.b16 %v843
  %v1388 = vunpack.c.l.b16 %v844
  %v1389 = vunpack.c.h.b16 %v844
  %v1390 = vunpack.c.l.b16 %v845
  %v1391 = vunpack.c.h.b16 %v845
  %v1392 = vunpack.c.l.b16 %v846
  %v1393 = vunpack.c.h.b16 %v846
  %v1394 = vunpack.c.l.b16 %v847
  %v1395 = vunpack.c.h.b16 %v847
  %v1396 = vunpack.c.l.b16 %v848
  %v1397 = vunpack.c.h.b16 %v848
  %v1398 = vunpack.c.l.b16 %v849
  %v1399 = vunpack.c.h.b16 %v849
  %v1400 = vunpack.c.l.b16 %v850
  %v1401 = vunpack.c.h.b16 %v850
  %v1402 = vunpack.c.l.b16 %v851
  %v1403 = vunpack.c.h.b16 %v851
  %v1404 = vunpack.c.l.b16 %v852
  %v1405 = vunpack.c.h.b16 %v852
  %v1406 = vunpack.c.l.b16 %v853
  %v1407 = vunpack.c.h.b16 %v853
  %v1408 = vunpack.c.l.b16 %v854
  %v1409 = vunpack.c.h.b16 %v854
  %v1410 = vunpack.c.l.b16 %v855
  %v1411 = vunpack.c.h.b16 %v855
  %v1412 = vunpack.c.l.b16 %v856
  %v1413 = vunpack.c.h.b16 %v856
  %v1414 = vunpack.c.l.b16 %v857
  %v1415 = vunpack.c.h.b16 %v857
  %v1416 = vunpack.c.l.b16 %v858
  %v1417 = vunpack.c.h.b16 %v858
  %v1418 = vunpack.c.l.b16 %v859
  %v1419 = vunpack.c.h.b16 %v859
  %v1420 = vunpack.c.l.b16 %v860
  %v1421 = vunpack.c.h.b16 %v860
  %v1422 = vunpack.c.l.b16 %v861
  %v1423 = vunpack.c.h.b16 %v861
  %v1424 = vunpack.c.l.b16 %v862
  %v1425 = vunpack.c.h.b16 %v862
  %v1426 = vunpack.c.l.b16 %v863
  %v1427 = vunpack.c.h.b16 %v863
  %v1428 = vunpack.c.l.b16 %v864
  %v1429 = vunpack.c.h.b16 %v864
  %v1430 = vunpack.c.l.b16 %v865
  %v1431 = vunpack.c.h.b16 %v865
  %v1432 = vunpack.c.l.b16 %v866
  %v1433 = vunpack.c.h.b16 %v866
  %v1434 = vunpack.c.l.b16 %v867
  %v1435 = vunpack.c.h.b16 %v867
  %v1436 = vunpack.c.l.b16 %v868
  %v1437 = vunpack.c.h.b16 %v868
  %v1438 = vunpack.c.l.b16 %v869
  %v1439 = vunpack.c.h.b16 %v869
  %v1440 = vunpack.c.l.b16 %v870
  %v1441 = vunpack.c.h.b16 %v870
  %v1442 = vunpack.c.l.b16 %v871
  %v1443 = vunpack.c.h.b16 %v871
  %v1444 = vunpack.c.l.b16 %v872
  %v1445 = vunpack.c.h.b16 %v872
  %v1446 = vunpack.c.l.b16 %v873
  %v1447 = vunpack.c.h.b16 %v873
  %v1448 = vunpack.c.l.b16 %v874
  %v1449 = vunpack.c.h.b16 %v874
  %v1450 = vunpack.c.l.b16 %v875
  %v1451 = vunpack.c.h.b16 %v875
  %v1452 = vunpack.c.l.b16 %v876
  %v1453 = vunpack.c.h.b16 %v876
  %v1454 = vunpack.c.l.b16 %v877
  %v1455 = vunpack.c.h.b16 %v877
  %v1456 = vunpack.c.l.b16 %v878
  %v1457 = vunpack.c.h.b16 %v878
  %v1458 = vunpack.c.l.b16 %v879
  %v1459 = vunpack.c.h.b16 %v879
  %v1460 = vunpack.c.l.b16 %v880
  %v1461 = vunpack.c.h.b16 %v880
  %v1462 = vunpack.c.l.b16 %v881
  %v1463 = vunpack.c.h.b16 %v881
  %v1464 = vunpack.c.l.b16 %v882
  %v1465 = vunpack.c.h.b16 %v882
  %v1466 = vunpack.c.l.b16 %v883
  %v1467 = vunpack.c.h.b16 %v883
  %v1468 = vunpack.c.l.b16 %v884
  %v1469 = vunpack.c.h.b16 %v884
  %v1470 = vunpack.c.l.b16 %v885
  %v1471 = vunpack.c.h.b16 %v885
  %v1472 = vunpack.c.l.b16 %v886
  %v1473 = vunpack.c.h.b16 %v886
  %v1474 = vunpack.c.l.b16 %v887
  %v1475 = vunpack.c.h.b16 %v887
  %v1476 = vunpack.c.l.b16 %v888
  %v1477 = vunpack.c.h.b16 %v888
  %v1478 = vunpack.c.l.b16 %v889
  %v1479 = vunpack.c.h.b16 %v889
  %v1480 = vunpack.c.l.b16 %v890
  %v1481 = vunpack.c.h.b16 %v890
  %v1482 = vunpack.c.l.b16 %v891
  %v1483 = vunpack.c.h.b16 %v891
  %v1484 = vunpack.c.l.b16 %v892
  %v1485 = vunpack.c.h.b16 %v892
  %v1486 = vunpack.c.l.b16 %v893
  %v1487 = vunpack.c.h.b16 %v893
  %v1488 = vunpack.c.l.b16 %v894
  %v1489 = vunpack.c.h.b16 %v894
  %v1490 = vunpack.c.l.b16 %v895
  %v1491 = vunpack.c.h.b16 %v895
  %v1492 = vunpack.c.l.b16 %v896
  %v1493 = vunpack.c.h.b16 %v896
  %v1494 = vunpack.c.l.b16 %v897
  %v1495 = vunpack.c.h.b16 %v897
  %v1496 = vunpack.c.l.b16 %v898
  %v1497 = vunpack.c.h.b16 %v898
  %v1498 = vunpack.c.l.b16 %v899
  %v1499 = vunpack.c.h.b16 %v899
  %v1500 = vunpack.c.l.b16 %v900
  %v1501 = vunpack.c.h.b16 %v900
  %v1502 = vunpack.c.l.b16 %v901
  %v1503 = vunpack.c.h.b16 %v901
  %v1504 = vunpack.c.l.b16 %v902
  %v1505 = vunpack.c.h.b16 %v902
  %v1506 = vunpack.c.l.b16 %v903
  %v1507 = vunpack.c.h.b16 %v903
  %v1508 = vunpack.c.l.b16 %v904
  %v1509 = vunpack.c.h.b16 %v904
  %v1510 = vunpack.c.l.b16 %v905
  %v1511 = vunpack.c.h.b16 %v905
  %v1512 = vunpack.c.l.b16 %v906
  %v1513 = vunpack.c.h.b16 %v906
  %v1514 = vunpack.c.l.b16 %v907
  %v1515 = vunpack.c.h.b16 %v907
  %v1516 = vpack.c.b16 %v1138, %v1132
  %v1517 = vpack.c.b16 %v1139, %v1133
  %v1518 = vpack.c.b16 %v1140, %v1134
  %v1519 = vpack.c.b16 %v1141, %v1135
  %v1520 = vpack.c.b16 %v1142, %v1136
  %v1521 = vpack.c.b16 %v1143, %v1137
  %v1522 = vpack.c.b16 %v1150, %v1144
  %v1523 = vpack.c.b16 %v1151, %v1145
  %v1524 = vpack.c.b16 %v1152, %v1146
  %v1525 = vpack.c.b16 %v1153, %v1147
  %v1526 = vpack.c.b16 %v1154, %v1148
  %v1527 = vpack.c.b16 %v1155, %v1149
  %v1528 = vpack.c.b16 %v1162, %v1156
  %v1529 = vpack.c.b16 %v1163, %v1157
  %v1530 = vpack.c.b16 %v1164, %v1158
  %v1531 = vpack.c.b16 %v1165, %v1159
  %v1532 = vpack.c.b16 %v1166, %v1160
  %v1533 = vpack.c.b16 %v1167, %v1161
  %v1534 = vpack.c.b16 %v1174, %v1168
  %v1535 = vpack.c.b16 %v1175, %v1169
  %v1536 = vpack.c.b16 %v1176, %v1170
  %v1537 = vpack.c.b16 %v1177, %v1171
  %v1538 = vpack.c.b16 %v1178, %v1172
  %v1539 = vpack.c.b16 %v1179, %v1173
  %v1540 = vpack.c.b16 %v1186, %v1180
  %v1541 = vpack.c.b16 %v1187, %v1181
  %v1542 = vpack.c.b16 %v1188, %v1182
  %v1543 = vpack.c.b16 %v1189, %v1183
  %v1544 = vpack.c.b16 %v1190, %v1184
  %v1545 = vpack.c.b16 %v1191, %v1185
  %v1546 = vpack.c.b16 %v1198, %v1192
  %v1547 = vpack.c.b16 %v1199, %v1193
  %v1548 = vpack.c.b16 %v1200, %v1194
  %v1549 = vpack.c.b16 %v1201, %v1195
  %v1550 = vpack.c.b16 %v1202, %v1196
  %v1551 = vpack.c.b16 %v1203, %v1197
  %v1552 = vpack.c.b16 %v1210, %v1204
  %v1553 = vpack.c.b16 %v1211, %v1205
  %v1554 = vpack.c.b16 %v1212, %v1206
  %v1555 = vpack.c.b16 %v1213, %v1207
  %v1556 = vpack.c.b16 %v1214, %v1208
  %v1557 = vpack.c.b16 %v1215, %v1209
  %v1558 = vpack.c.b16 %v1222, %v1216
  %v1559 = vpack.c.b16 %v1223, %v1217
  %v1560 = vpack.c.b16 %v1224, %v1218
  %v1561 = vpack.c.b16 %v1225, %v1219
  %v1562 = vpack.c.b16 %v1226, %v1220
  %v1563 = vpack.c.b16 %v1227, %v1221
  %v1564 = vpack.c.b16 %v1234, %v1228
  %v1565 = vpack.c.b16 %v1235, %v1229
  %v1566 = vpack.c.b16 %v1236, %v1230
  %v1567 = vpack.c.b16 %v1237, %v1231
  %v1568 = vpack.c.b16 %v1238, %v1232
  %v1569 = vpack.c.b16 %v1239, %v1233
  %v1570 = vpack.c.b16 %v1246, %v1240
  %v1571 = vpack.c.b16 %v1247, %v1241
  %v1572 = vpack.c.b16 %v1248, %v1242
  %v1573 = vpack.c.b16 %v1249, %v1243
  %v1574 = vpack.c.b16 %v1250, %v1244
  %v1575 = vpack.c.b16 %v1251, %v1245
  %v1576 = vpack.c.b16 %v1258, %v1252
  %v1577 = vpack.c.b16 %v1259, %v1253
  %v1578 = vpack.c.b16 %v1260, %v1254
  %v1579 = vpack.c.b16 %v1261, %v1255
  %v1580 = vpack.c.b16 %v1262, %v1256
  %v1581 = vpack.c.b16 %v1263, %v1257
  %v1582 = vpack.c.b16 %v1270, %v1264
  %v1583 = vpack.c.b16 %v1271, %v1265
  %v1584 = vpack.c.b16 %v1272, %v1266
  %v1585 = vpack.c.b16 %v1273, %v1267
  %v1586 = vpack.c.b16 %v1274, %v1268
  %v1587 = vpack.c.b16 %v1275, %v1269
  %v1588 = vpack.c.b16 %v1282, %v1276
  %v1589 = vpack.c.b16 %v1283, %v1277
  %v1590 = vpack.c.b16 %v1284, %v1278
  %v1591 = vpack.c.b16 %v1285, %v1279
  %v1592 = vpack.c.b16 %v1286, %v1280
  %v1593 = vpack.c.b16 %v1287, %v1281
  %v1594 = vpack.c.b16 %v1294, %v1288
  %v1595 = vpack.c.b16 %v1295, %v1289
  %v1596 = vpack.c.b16 %v1296, %v1290
  %v1597 = vpack.c.b16 %v1297, %v1291
  %v1598 = vpack.c.b16 %v1298, %v1292
  %v1599 = vpack.c.b16 %v1299, %v1293
  %v1600 = vpack.c.b16 %v1306, %v1300
  %v1601 = vpack.c.b16 %v1307, %v1301
  %v1602 = vpack.c.b16 %v1308, %v1302
  %v1603 = vpack.c.b16 %v1309, %v1303
  %v1604 = vpack.c.b16 %v1310, %v1304
  %v1605 = vpack.c.b16 %v1311, %v1305
  %v1606 = vpack.c.b16 %v1318, %v1312
  %v1607 = vpack.c.b16 %v1319, %v1313
  %v1608 = vpack.c.b16 %v1320, %v1314
  %v1609 = vpack.c.b16 %v1321, %v1315
  %v1610 = vpack.c.b16 %v1322, %v1316
  %v1611 = vpack.c.b16 %v1323, %v1317
  %v1612 = vpack.c.b16 %v1330, %v1324
  %v1613 = vpack.c.b16 %v1331, %v1325
  %v1614 = vpack.c.b16 %v1332, %v1326
  %v1615 = vpack.c.b16 %v1333, %v1327
  %v1616 = vpack.c.b16 %v1334, %v1328
  %v1617 = vpack.c.b16 %v1335, %v1329
  %v1618 = vpack.c.b16 %v1342, %v1336
  %v1619 = vpack.c.b16 %v1343, %v1337
  %v1620 = vpack.c.b16 %v1344, %v1338
  %v1621 = vpack.c.b16 %v1345, %v1339
  %v1622 = vpack.c.b16 %v1346, %v1340
  %v1623 = vpack.c.b16 %v1347, %v1341
  %v1624 = vpack.c.b16 %v1354, %v1348
  %v1625 = vpack.c.b16 %v1355, %v1349
  %v1626 = vpack.c.b16 %v1356, %v1350
  %v1627 = vpack.c.b16 %v1357, %v1351
  %v1628 = vpack.c.b16 %v1358, %v1352
  %v1629 = vpack.c.b16 %v1359, %v1353
  %v1630 = vpack.c.b16 %v1366, %v1360
  %v1631 = vpack.c.b16 %v1367, %v1361
  %v1632 = vpack.c.b16 %v1368, %v1362
  %v1633 = vpack.c.b16 %v1369, %v1363
  %v1634 = vpack.c.b16 %v1370, %v1364
  %v1635 = vpack.c.b16 %v1371, %v1365
  %v1636 = vpack.c.b16 %v1378, %v1372
  %v1637 = vpack.c.b16 %v1379, %v1373
  %v1638 = vpack.c.b16 %v1380, %v1374
  %v1639 = vpack.c.b16 %v1381, %v1375
  %v1640 = vpack.c.b16 %v1382, %v1376
  %v1641 = vpack.c.b16 %v1383, %v1377
  %v1642 = vpack.c.b16 %v1390, %v1384
  %v1643 = vpack.c.b16 %v1391, %v1385
  %v1644 = vpack.c.b16 %v1392, %v1386
  %v1645 = vpack.c.b16 %v1393, %v1387
  %v1646 = vpack.c.b16 %v1394, %v1388
  %v1647 = vpack.c.b16 %v1395, %v1389
  %v1648 = vpack.c.b16 %v1402, %v1396
  %v1649 = vpack.c.b16 %v1403, %v1397
  %v1650 = vpack.c.b16 %v1404, %v1398
  %v1651 = vpack.c.b16 %v1405, %v1399
  %v1652 = vpack.c.b16 %v1406, %v1400
  %v1653 = vpack.c.b16 %v1407, %v1401
  %v1654 = vpack.c.b16 %v1414, %v1408
  %v1655 = vpack.c.b16 %v1415, %v1409
  %v1656 = vpack.c.b16 %v1416, %v1410
  %v1657 = vpack.c.b16 %v1417, %v1411
  %v1658 = vpack.c.b16 %v1418, %v1412
  %v1659 = vpack.c.b16 %v1419, %v1413
  %v1660 = vpack.c.b16 %v1426, %v1420
  %v1661 = vpack.c.b16 %v1427, %v1421
  %v1662 = vpack.c.b16 %v1428, %v1422
  %v1663 = vpack.c.b16 %v1429, %v1423
  %v1664 = vpack.c.b16 %v1430, %v1424
  %v1665 = vpack.c.b16 %v1431, %v1425
  %v1666 = vpack.c.b16 %v1438, %v1432
  %v1667 = vpack.c.b16 %v1439, %v1433
  %v1668 = vpack.c.b16 %v1440, %v1434
  %v1669 = vpack.c.b16 %v1441, %v1435
  %v1670 = vpack.c.b16 %v1442, %v1436
  %v1671 = vpack.c.b16 %v1443, %v1437
  %v1672 = vpack.c.b16 %v1450, %v1444
  %v1673 = vpack.c.b16 %v1451, %v1445
  %v1674 = vpack.c.b16 %v1452, %v1446
  %v1675 = vpack.c.b16 %v1453, %v1447
  %v1676 = vpack.c.b16 %v1454, %v1448
  %v1677 = vpack.c.b16 %v1455, %v1449
  %v1678 = vpack.c.b16 %v1462, %v1456
  %v1679 = vpack.c.b16 %v1463, %v1457
  %v1680 = vpack.c.b16 %v1464, %v1458
  %v1681 = vpack.c.b16 %v1465, %v1459
  %v1682 = vpack.c.b16 %v1466, %v1460
  %v1683 = vpack.c.b16 %v1467, %v1461
  %v1684 = vpack.c.b16 %v1474, %v1468
  %v1685 = vpack.c.b16 %v1475, %v1469
  %v1686 = vpack.c.b16 %v1476, %v1470
  %v1687 = vpack.c.b16 %v1477, %v1471
  %v1688 = vpack.c.b16 %v1478, %v1472
  %v1689 = vpack.c.b16 %v1479, %v1473
  %v1690 = vpack.c.b16 %v1486, %v1480
  %v1691 = vpack.c.b16 %v1487, %v1481
  %v1692 = vpack.c.b16 %v1488, %v1482
  %v1693 = vpack.c.b16 %v1489, %v1483
  %v1694 = vpack.c.b16 %v1490, %v1484
  %v1695 = vpack.c.b16 %v1491, %v1485
  %v1696 = vpack.c.b16 %v1498, %v1492
  %v1697 = vpack.c.b16 %v1499, %v1493
  %v1698 = vpack.c.b16 %v1500, %v1494
  %v1699 = vpack.c.b16 %v1501, %v1495
  %v1700 = vpack.c.b16 %v1502, %v1496
  %v1701 = vpack.c.b16 %v1503, %v1497
  %v1702 = vpack.c.b16 %v1510, %v1504
  %v1703 = vpack.c.b16 %v1511, %v1505
  %v1704 = vpack.c.b16 %v1512, %v1506
  %v1705 = vpack.c.b16 %v1513, %v1507
  %v1706 = vpack.c.b16 %v1514, %v1508
  %v1707 = vpack.c.b16 %v1515, %v1509
  %1900 = vmatprep.subr.bf16.mxu0 %v1517
  %1901 = vmatpush1.bf16.msra.mxu0 %v1516
  %1902 = vmatprep.subr.bf16.mxu0 %v1523
  %1903 = vmatpush1.bf16.msra.mxu0 %v1522
  %1904 = vmatprep.subr.bf16.mxu0 %v1529
  %1905 = vmatpush1.bf16.msra.mxu0 %v1528
  %1906 = vmatprep.subr.bf16.mxu0 %v1535
  %1907 = vmatpush1.bf16.msra.mxu0 %v1534
  %1908 = vmatprep.subr.bf16.mxu0 %v1541
  %1909 = vmatpush1.bf16.msra.mxu0 %v1540
  %1910 = vmatprep.subr.bf16.mxu0 %v1547
  %1911 = vmatpush1.bf16.msra.mxu0 %v1546
  %1912 = vmatprep.subr.bf16.mxu0 %v1553
  %1913 = vmatpush1.bf16.msra.mxu0 %v1552
  %1914 = vmatprep.subr.bf16.mxu0 %v1559
  %1915 = vmatpush1.bf16.msra.mxu0 %v1558
  %1916 = vmatprep.subr.bf16.mxu0 %v1565
  %1917 = vmatpush1.bf16.msra.mxu0 %v1564
  %1918 = vmatprep.subr.bf16.mxu0 %v1571
  %1919 = vmatpush1.bf16.msra.mxu0 %v1570
  %1920 = vmatprep.subr.bf16.mxu0 %v1577
  %1921 = vmatpush1.bf16.msra.mxu0 %v1576
  %1922 = vmatprep.subr.bf16.mxu0 %v1583
  %1923 = vmatpush1.bf16.msra.mxu0 %v1582
  %1924 = vmatprep.subr.bf16.mxu0 %v1589
  %1925 = vmatpush1.bf16.msra.mxu0 %v1588
  %1926 = vmatprep.subr.bf16.mxu0 %v1595
  %1927 = vmatpush1.bf16.msra.mxu0 %v1594
  %1928 = vmatprep.subr.bf16.mxu0 %v1601
  %1929 = vmatpush1.bf16.msra.mxu0 %v1600
  %1930 = vmatprep.subr.bf16.mxu0 %v1607
  %1931 = vmatpush1.bf16.msra.mxu0 %v1606
  %1932 = vmatprep.mubr.bf16.mxu0 %v713
  %1933 = vmatmul.mubr.bf16.gmra.mrb[0].mxu0 %v712
  %v1934 = vpop.f32.mrb[0].mxu0
  %v1935 = vadd.f32 %v913, %v1934
  %v1936 = vpop.f32.mrb[0].mxu0
  %v1937 = vadd.f32 %v917, %v1936
  %v1938 = vpop.f32.mrb[0].mxu0
  %v1939 = vpop.f32.mrb[0].mxu0
  %1940 = vdwg.mxu0
  %1941 = vmatprep.subr.bf16.mxu0 %v1613
  %1942 = vmatpush1.bf16.msra.mxu0 %v1612
  %1943 = vmatprep.subr.bf16.mxu0 %v1619
  %1944 = vmatpush1.bf16.msra.mxu0 %v1618
  %1945 = vmatprep.subr.bf16.mxu0 %v1625
  %1946 = vmatpush1.bf16.msra.mxu0 %v1624
  %1947 = vmatprep.subr.bf16.mxu0 %v1631
  %1948 = vmatpush1.bf16.msra.mxu0 %v1630
  %1949 = vmatprep.subr.bf16.mxu0 %v1637
  %1950 = vmatpush1.bf16.msra.mxu0 %v1636
  %1951 = vmatprep.subr.bf16.mxu0 %v1643
  %1952 = vmatpush1.bf16.msra.mxu0 %v1642
  %1953 = vmatprep.subr.bf16.mxu0 %v1649
  %1954 = vmatpush1.bf16.msra.mxu0 %v1648
  %1955 = vmatprep.subr.bf16.mxu0 %v1655
  %1956 = vmatpush1.bf16.msra.mxu0 %v1654
  %1957 = vmatprep.subr.bf16.mxu0 %v1661
  %1958 = vmatpush1.bf16.msra.mxu0 %v1660
  %1959 = vmatprep.subr.bf16.mxu0 %v1667
  %1960 = vmatpush1.bf16.msra.mxu0 %v1666
  %1961 = vmatprep.subr.bf16.mxu0 %v1673
  %1962 = vmatpush1.bf16.msra.mxu0 %v1672
  %1963 = vmatprep.subr.bf16.mxu0 %v1679
  %1964 = vmatpush1.bf16.msra.mxu0 %v1678
  %1965 = vmatprep.subr.bf16.mxu0 %v1685
  %1966 = vmatpush1.bf16.msra.mxu0 %v1684
  %1967 = vmatprep.subr.bf16.mxu0 %v1691
  %1968 = vmatpush1.bf16.msra.mxu0 %v1690
  %1969 = vmatprep.subr.bf16.mxu0 %v1697
  %1970 = vmatpush1.bf16.msra.mxu0 %v1696
  %1971 = vmatprep.subr.bf16.mxu0 %v1703
  %1972 = vmatpush1.bf16.msra.mxu0 %v1702
  %1973 = vmatprep.mubr.bf16.mxu0 %v715
  %1974 = vmatmul.mubr.bf16.gmra.mrb[0].mxu0 %v714
  %v1975 = vpop.f32.mrb[0].mxu0
  %v1976 = vadd.f32 %v1935, %v1975
  %v1977 = vpop.f32.mrb[0].mxu0
  %v1978 = vadd.f32 %v1937, %v1977
  %v1979 = vpop.f32.mrb[0].mxu0
  %v1980 = vpop.f32.mrb[0].mxu0
  %1981 = vdwg.mxu0
  %1982 = vmatprep.subr.bf16.mxu0 %v1519
  %1983 = vmatpush1.bf16.msra.mxu0 %v1518
  %1984 = vmatprep.subr.bf16.mxu0 %v1525
  %1985 = vmatpush1.bf16.msra.mxu0 %v1524
  %1986 = vmatprep.subr.bf16.mxu0 %v1531
  %1987 = vmatpush1.bf16.msra.mxu0 %v1530
  %1988 = vmatprep.subr.bf16.mxu0 %v1537
  %1989 = vmatpush1.bf16.msra.mxu0 %v1536
  %1990 = vmatprep.subr.bf16.mxu0 %v1543
  %1991 = vmatpush1.bf16.msra.mxu0 %v1542
  %1992 = vmatprep.subr.bf16.mxu0 %v1549
  %1993 = vmatpush1.bf16.msra.mxu0 %v1548
  %1994 = vmatprep.subr.bf16.mxu0 %v1555
  %1995 = vmatpush1.bf16.msra.mxu0 %v1554
  %1996 = vmatprep.subr.bf16.mxu0 %v1561
  %1997 = vmatpush1.bf16.msra.mxu0 %v1560
  %1998 = vmatprep.subr.bf16.mxu0 %v1567
  %1999 = vmatpush1.bf16.msra.mxu0 %v1566
  %2000 = vmatprep.subr.bf16.mxu0 %v1573
  %2001 = vmatpush1.bf16.msra.mxu0 %v1572
  %2002 = vmatprep.subr.bf16.mxu0 %v1579
  %2003 = vmatpush1.bf16.msra.mxu0 %v1578
  %2004 = vmatprep.subr.bf16.mxu0 %v1585
  %2005 = vmatpush1.bf16.msra.mxu0 %v1584
  %2006 = vmatprep.subr.bf16.mxu0 %v1591
  %2007 = vmatpush1.bf16.msra.mxu0 %v1590
  %2008 = vmatprep.subr.bf16.mxu0 %v1597
  %2009 = vmatpush1.bf16.msra.mxu0 %v1596
  %2010 = vmatprep.subr.bf16.mxu0 %v1603
  %2011 = vmatpush1.bf16.msra.mxu0 %v1602
  %2012 = vmatprep.subr.bf16.mxu0 %v1609
  %2013 = vmatpush1.bf16.msra.mxu0 %v1608
  %2014 = vmatprep.mubr.bf16.mxu0 %v713
  %2015 = vmatmul.mubr.bf16.gmra.mrb[0].mxu0 %v712
  %v2016 = vpop.f32.mrb[0].mxu0
  %v2017 = vadd.f32 %v921, %v2016
  %v2018 = vpop.f32.mrb[0].mxu0
  %v2019 = vadd.f32 %v925, %v2018
  %v2020 = vpop.f32.mrb[0].mxu0
  %v2021 = vpop.f32.mrb[0].mxu0
  %2022 = vdwg.mxu0
  %2023 = vmatprep.subr.bf16.mxu0 %v1615
  %2024 = vmatpush1.bf16.msra.mxu0 %v1614
  %2025 = vmatprep.subr.bf16.mxu0 %v1621
  %2026 = vmatpush1.bf16.msra.mxu0 %v1620
  %2027 = vmatprep.subr.bf16.mxu0 %v1627
  %2028 = vmatpush1.bf16.msra.mxu0 %v1626
  %2029 = vmatprep.subr.bf16.mxu0 %v1633
  %2030 = vmatpush1.bf16.msra.mxu0 %v1632
  %2031 = vmatprep.subr.bf16.mxu0 %v1639
  %2032 = vmatpush1.bf16.msra.mxu0 %v1638
  %2033 = vmatprep.subr.bf16.mxu0 %v1645
  %2034 = vmatpush1.bf16.msra.mxu0 %v1644
  %2035 = vmatprep.subr.bf16.mxu0 %v1651
  %2036 = vmatpush1.bf16.msra.mxu0 %v1650
  %2037 = vmatprep.subr.bf16.mxu0 %v1657
  %2038 = vmatpush1.bf16.msra.mxu0 %v1656
  %2039 = vmatprep.subr.bf16.mxu0 %v1663
  %2040 = vmatpush1.bf16.msra.mxu0 %v1662
  %2041 = vmatprep.subr.bf16.mxu0 %v1669
  %2042 = vmatpush1.bf16.msra.mxu0 %v1668
  %2043 = vmatprep.subr.bf16.mxu0 %v1675
  %2044 = vmatpush1.bf16.msra.mxu0 %v1674
  %2045 = vmatprep.subr.bf16.mxu0 %v1681
  %2046 = vmatpush1.bf16.msra.mxu0 %v1680
  %2047 = vmatprep.subr.bf16.mxu0 %v1687
  %2048 = vmatpush1.bf16.msra.mxu0 %v1686
  %2049 = vmatprep.subr.bf16.mxu0 %v1693
  %2050 = vmatpush1.bf16.msra.mxu0 %v1692
  %2051 = vmatprep.subr.bf16.mxu0 %v1699
  %2052 = vmatpush1.bf16.msra.mxu0 %v1698
  %2053 = vmatprep.subr.bf16.mxu0 %v1705
  %2054 = vmatpush1.bf16.msra.mxu0 %v1704
  %2055 = vmatprep.mubr.bf16.mxu0 %v715
  %2056 = vmatmul.mubr.bf16.gmra.mrb[0].mxu0 %v714
  %v2057 = vpop.f32.mrb[0].mxu0
  %v2058 = vadd.f32 %v2017, %v2057
  %v2059 = vpop.f32.mrb[0].mxu0
  %v2060 = vadd.f32 %v2019, %v2059
  %v2061 = vpop.f32.mrb[0].mxu0
  %v2062 = vpop.f32.mrb[0].mxu0
  %2063 = vdwg.mxu0
  %2064 = vmatprep.subr.bf16.mxu0 %v1521
  %2065 = vmatpush1.bf16.msra.mxu0 %v1520
  %2066 = vmatprep.subr.bf16.mxu0 %v1527
  %2067 = vmatpush1.bf16.msra.mxu0 %v1526
  %2068 = vmatprep.subr.bf16.mxu0 %v1533
  %2069 = vmatpush1.bf16.msra.mxu0 %v1532
  %2070 = vmatprep.subr.bf16.mxu0 %v1539
  %2071 = vmatpush1.bf16.msra.mxu0 %v1538
  %2072 = vmatprep.subr.bf16.mxu0 %v1545
  %2073 = vmatpush1.bf16.msra.mxu0 %v1544
  %2074 = vmatprep.subr.bf16.mxu0 %v1551
  %2075 = vmatpush1.bf16.msra.mxu0 %v1550
  %2076 = vmatprep.subr.bf16.mxu0 %v1557
  %2077 = vmatpush1.bf16.msra.mxu0 %v1556
  %2078 = vmatprep.subr.bf16.mxu0 %v1563
  %2079 = vmatpush1.bf16.msra.mxu0 %v1562
  %2080 = vmatprep.subr.bf16.mxu0 %v1569
  %2081 = vmatpush1.bf16.msra.mxu0 %v1568
  %2082 = vmatprep.subr.bf16.mxu0 %v1575
  %2083 = vmatpush1.bf16.msra.mxu0 %v1574
  %2084 = vmatprep.subr.bf16.mxu0 %v1581
  %2085 = vmatpush1.bf16.msra.mxu0 %v1580
  %2086 = vmatprep.subr.bf16.mxu0 %v1587
  %2087 = vmatpush1.bf16.msra.mxu0 %v1586
  %2088 = vmatprep.subr.bf16.mxu0 %v1593
  %2089 = vmatpush1.bf16.msra.mxu0 %v1592
  %2090 = vmatprep.subr.bf16.mxu0 %v1599
  %2091 = vmatpush1.bf16.msra.mxu0 %v1598
  %2092 = vmatprep.subr.bf16.mxu0 %v1605
  %2093 = vmatpush1.bf16.msra.mxu0 %v1604
  %2094 = vmatprep.subr.bf16.mxu0 %v1611
  %2095 = vmatpush1.bf16.msra.mxu0 %v1610
  %2096 = vmatprep.mubr.bf16.mxu0 %v713
  %2097 = vmatmul.mubr.bf16.gmra.mrb[0].mxu0 %v712
  %v2098 = vpop.f32.mrb[0].mxu0
  %v2099 = vadd.f32 %v929, %v2098
  %v2100 = vpop.f32.mrb[0].mxu0
  %v2101 = vadd.f32 %v933, %v2100
  %v2102 = vpop.f32.mrb[0].mxu0
  %v2103 = vpop.f32.mrb[0].mxu0
  %2104 = vdwg.mxu0
  %2105 = vmatprep.subr.bf16.mxu0 %v1617
  %2106 = vmatpush1.bf16.msra.mxu0 %v1616
  %2107 = vmatprep.subr.bf16.mxu0 %v1623
  %2108 = vmatpush1.bf16.msra.mxu0 %v1622
  %2109 = vmatprep.subr.bf16.mxu0 %v1629
  %2110 = vmatpush1.bf16.msra.mxu0 %v1628
  %2111 = vmatprep.subr.bf16.mxu0 %v1635
  %2112 = vmatpush1.bf16.msra.mxu0 %v1634
  %2113 = vmatprep.subr.bf16.mxu0 %v1641
  %2114 = vmatpush1.bf16.msra.mxu0 %v1640
  %2115 = vmatprep.subr.bf16.mxu0 %v1647
  %2116 = vmatpush1.bf16.msra.mxu0 %v1646
  %2117 = vmatprep.subr.bf16.mxu0 %v1653
  %2118 = vmatpush1.bf16.msra.mxu0 %v1652
  %2119 = vmatprep.subr.bf16.mxu0 %v1659
  %2120 = vmatpush1.bf16.msra.mxu0 %v1658
  %2121 = vmatprep.subr.bf16.mxu0 %v1665
  %2122 = vmatpush1.bf16.msra.mxu0 %v1664
  %2123 = vmatprep.subr.bf16.mxu0 %v1671
  %2124 = vmatpush1.bf16.msra.mxu0 %v1670
  %2125 = vmatprep.subr.bf16.mxu0 %v1677
  %2126 = vmatpush1.bf16.msra.mxu0 %v1676
  %2127 = vmatprep.subr.bf16.mxu0 %v1683
  %2128 = vmatpush1.bf16.msra.mxu0 %v1682
  %2129 = vmatprep.subr.bf16.mxu0 %v1689
  %2130 = vmatpush1.bf16.msra.mxu0 %v1688
  %2131 = vmatprep.subr.bf16.mxu0 %v1695
  %2132 = vmatpush1.bf16.msra.mxu0 %v1694
  %2133 = vmatprep.subr.bf16.mxu0 %v1701
  %2134 = vmatpush1.bf16.msra.mxu0 %v1700
  %2135 = vmatprep.subr.bf16.mxu0 %v1707
  %2136 = vmatpush1.bf16.msra.mxu0 %v1706
  %2137 = vmatprep.mubr.bf16.mxu0 %v715
  %2138 = vmatmul.mubr.bf16.gmra.mrb[0].mxu0 %v714
  %v2139 = vpop.f32.mrb[0].mxu0
  %v2140 = vadd.f32 %v2099, %v2139
  %v2141 = vpop.f32.mrb[0].mxu0
  %v2142 = vadd.f32 %v2101, %v2141
  %v2143 = vpop.f32.mrb[0].mxu0
  %v2144 = vpop.f32.mrb[0].mxu0
  %2145 = vdwg.mxu0
  %v2146 = vmax.f32 %v1976, 0.0
  %v2147 = vmax.f32 %v1978, 0.0
  %v2148 = vmax.f32 %v2058, 0.0
  %v2149 = vmax.f32 %v2060, 0.0
  %v2150 = vmax.f32 %v2140, 0.0
  %v2151 = vmax.f32 %v2142, 0.0
  %v2152 = vpack.c.bf16 %v2146, %v2146
  %v2153 = vpack.c.bf16 %v2147, %v2147
  %v2154 = vpack.c.bf16 %v2148, %v2148
  %v2155 = vpack.c.bf16 %v2149, %v2149
  %v2156 = vpack.c.bf16 %v2150, %v2150
  %v2157 = vpack.c.bf16 %v2151, %v2151
  %v2158 = vld [vmem:[%s7] sm:$0xf]
  %v2159 = vld [vmem:[%s7 + $0x4] sm:$0xf]
  %v2160 = vld [vmem:[%s7 + $0x8] sm:$0xf]
  %v2161 = vld [vmem:[%s7 + $0xc] sm:$0xf]
  %v2162 = vld [vmem:[%s7 + $0x10] sm:$0xf]
  %v2163 = vld [vmem:[%s7 + $0x14] sm:$0xf]
  %v2164 = vld [vmem:[%s7 + $0x18] sm:$0xf]
  %v2165 = vld [vmem:[%s7 + $0x1c] sm:$0xf]
  %v2166 = vld [vmem:[%s7 + $0x20] sm:$0xf]
  %v2167 = vld [vmem:[%s7 + $0x24] sm:$0xf]
  %v2168 = vld [vmem:[%s7 + $0x28] sm:$0xf]
  %v2169 = vld [vmem:[%s7 + $0x2c] sm:$0xf]
  %v2170 = vld [vmem:[%s7 + $0x30] sm:$0xf]
  %v2171 = vld [vmem:[%s7 + $0x34] sm:$0xf]
  %v2172 = vld [vmem:[%s7 + $0x38] sm:$0xf]
  %v2173 = vld [vmem:[%s7 + $0x3c] sm:$0xf]
  %v2174 = vld [vmem:[%s7 + $0x40] sm:$0xf]
  %v2175 = vld [vmem:[%s7 + $0x44] sm:$0xf]
  %v2176 = vld [vmem:[%s7 + $0x48] sm:$0xf]
  %v2177 = vld [vmem:[%s7 + $0x4c] sm:$0xf]
  %v2178 = vld [vmem:[%s7 + $0x50] sm:$0xf]
  %v2179 = vld [vmem:[%s7 + $0x54] sm:$0xf]
  %v2180 = vld [vmem:[%s7 + $0x58] sm:$0xf]
  %v2181 = vld [vmem:[%s7 + $0x5c] sm:$0xf]
  %v2182 = vld [vmem:[%s7 + $0x60] sm:$0xf]
  %v2183 = vld [vmem:[%s7 + $0x64] sm:$0xf]
  %v2184 = vld [vmem:[%s7 + $0x68] sm:$0xf]
  %v2185 = vld [vmem:[%s7 + $0x6c] sm:$0xf]
  %v2186 = vld [vmem:[%s7 + $0x70] sm:$0xf]
  %v2187 = vld [vmem:[%s7 + $0x74] sm:$0xf]
  %v2188 = vld [vmem:[%s7 + $0x78] sm:$0xf]
  %v2189 = vld [vmem:[%s7 + $0x7c] sm:$0xf]
  %v2190 = vld [vmem:[%s8] sm:$0x1]
  %v2192 = vlaneseq
  %v2193 = vshrl.u32 %v2192, 7
  %v2194 = vsub.s32 0, %v2193
  %v2195 = vrot.slane %v2190, %v2194
  %v2229 = vunpack.c.l.b16 %v2158
  %v2230 = vunpack.c.l.b16 %v2159
  %v2231 = vunpack.c.l.b16 %v2160
  %v2232 = vunpack.c.l.b16 %v2161
  %v2233 = vunpack.c.l.b16 %v2162
  %v2234 = vunpack.c.l.b16 %v2163
  %v2235 = vunpack.c.l.b16 %v2164
  %v2236 = vunpack.c.l.b16 %v2165
  %v2237 = vunpack.c.l.b16 %v2166
  %v2238 = vunpack.c.l.b16 %v2167
  %v2239 = vunpack.c.l.b16 %v2168
  %v2240 = vunpack.c.l.b16 %v2169
  %v2241 = vunpack.c.l.b16 %v2170
  %v2242 = vunpack.c.l.b16 %v2171
  %v2243 = vunpack.c.l.b16 %v2172
  %v2244 = vunpack.c.l.b16 %v2173
  %v2245 = vunpack.c.l.b16 %v2174
  %v2246 = vunpack.c.l.b16 %v2175
  %v2247 = vunpack.c.l.b16 %v2176
  %v2248 = vunpack.c.l.b16 %v2177
  %v2249 = vunpack.c.l.b16 %v2178
  %v2250 = vunpack.c.l.b16 %v2179
  %v2251 = vunpack.c.l.b16 %v2180
  %v2252 = vunpack.c.l.b16 %v2181
  %v2253 = vunpack.c.l.b16 %v2182
  %v2254 = vunpack.c.l.b16 %v2183
  %v2255 = vunpack.c.l.b16 %v2184
  %v2256 = vunpack.c.l.b16 %v2185
  %v2257 = vunpack.c.l.b16 %v2186
  %v2258 = vunpack.c.l.b16 %v2187
  %v2259 = vunpack.c.l.b16 %v2188
  %v2260 = vunpack.c.l.b16 %v2189
  %v2261 = vpack.c.b16 %v2230, %v2229
  %v2262 = vpack.c.b16 %v2232, %v2231
  %v2263 = vpack.c.b16 %v2234, %v2233
  %v2264 = vpack.c.b16 %v2236, %v2235
  %v2265 = vpack.c.b16 %v2238, %v2237
  %v2266 = vpack.c.b16 %v2240, %v2239
  %v2267 = vpack.c.b16 %v2242, %v2241
  %v2268 = vpack.c.b16 %v2244, %v2243
  %v2269 = vpack.c.b16 %v2246, %v2245
  %v2270 = vpack.c.b16 %v2248, %v2247
  %v2271 = vpack.c.b16 %v2250, %v2249
  %v2272 = vpack.c.b16 %v2252, %v2251
  %v2273 = vpack.c.b16 %v2254, %v2253
  %v2274 = vpack.c.b16 %v2256, %v2255
  %v2275 = vpack.c.b16 %v2258, %v2257
  %v2276 = vpack.c.b16 %v2260, %v2259
  %2293 = vmatprep.subr.bf16.mxu0 0
  %2294 = vmatpush1.bf16.msra.mxu0 %v2261
  %2295 = vmatprep.subr.bf16.mxu0 0
  %2296 = vmatpush1.bf16.msra.mxu0 %v2262
  %2297 = vmatprep.subr.bf16.mxu0 0
  %2298 = vmatpush1.bf16.msra.mxu0 %v2263
  %2299 = vmatprep.subr.bf16.mxu0 0
  %2300 = vmatpush1.bf16.msra.mxu0 %v2264
  %2301 = vmatprep.subr.bf16.mxu0 0
  %2302 = vmatpush1.bf16.msra.mxu0 %v2265
  %2303 = vmatprep.subr.bf16.mxu0 0
  %2304 = vmatpush1.bf16.msra.mxu0 %v2266
  %2305 = vmatprep.subr.bf16.mxu0 0
  %2306 = vmatpush1.bf16.msra.mxu0 %v2267
  %2307 = vmatprep.subr.bf16.mxu0 0
  %2308 = vmatpush1.bf16.msra.mxu0 %v2268
  %2309 = vmatprep.subr.bf16.mxu0 0
  %2310 = vmatpush1.bf16.msra.mxu0 %v2269
  %2311 = vmatprep.subr.bf16.mxu0 0
  %2312 = vmatpush1.bf16.msra.mxu0 %v2270
  %2313 = vmatprep.subr.bf16.mxu0 0
  %2314 = vmatpush1.bf16.msra.mxu0 %v2271
  %2315 = vmatprep.subr.bf16.mxu0 0
  %2316 = vmatpush1.bf16.msra.mxu0 %v2272
  %2317 = vmatprep.subr.bf16.mxu0 0
  %2318 = vmatpush1.bf16.msra.mxu0 %v2273
  %2319 = vmatprep.subr.bf16.mxu0 0
  %2320 = vmatpush1.bf16.msra.mxu0 %v2274
  %2321 = vmatprep.subr.bf16.mxu0 0
  %2322 = vmatpush1.bf16.msra.mxu0 %v2275
  %2323 = vmatprep.subr.bf16.mxu0 0
  %2324 = vmatpush1.bf16.msra.mxu0 %v2276
  %2325 = vmatprep.mubr.bf16.mxu0 %v2153
  %2326 = vmatmul.mubr.bf16.gmra.mrb[0].mxu0 %v2152
  %v2327 = vpop.f32.mrb[0].mxu0
  %v2328 = vadd.f32 %v2195, %v2327
  %v2329 = vpop.f32.mrb[0].mxu0
  %v2330 = vpop.f32.mrb[0].mxu0
  %v2331 = vpop.f32.mrb[0].mxu0
  %2332 = vdwg.mxu0
  %v2333 = vmax.f32 %v2328, 0.0
  %v2334 = vpack.c.bf16 %v2333, %v2333
  %v2335 = vld [vmem:[%s7 + $0x80] sm:$0xf]
  %v2336 = vld [vmem:[%s7 + $0x84] sm:$0xf]
  %v2337 = vld [vmem:[%s7 + $0x88] sm:$0xf]
  %v2338 = vld [vmem:[%s7 + $0x8c] sm:$0xf]
  %v2339 = vld [vmem:[%s7 + $0x90] sm:$0xf]
  %v2340 = vld [vmem:[%s7 + $0x94] sm:$0xf]
  %v2341 = vld [vmem:[%s7 + $0x98] sm:$0xf]
  %v2342 = vld [vmem:[%s7 + $0x9c] sm:$0xf]
  %v2343 = vld [vmem:[%s7 + $0xa0] sm:$0xf]
  %v2344 = vld [vmem:[%s7 + $0xa4] sm:$0xf]
  %v2345 = vld [vmem:[%s7 + $0xa8] sm:$0xf]
  %v2346 = vld [vmem:[%s7 + $0xac] sm:$0xf]
  %v2347 = vld [vmem:[%s7 + $0xb0] sm:$0xf]
  %v2348 = vld [vmem:[%s7 + $0xb4] sm:$0xf]
  %v2349 = vld [vmem:[%s7 + $0xb8] sm:$0xf]
  %v2350 = vld [vmem:[%s7 + $0xbc] sm:$0xf]
  %v2351 = vld [vmem:[%s7 + $0xc0] sm:$0xf]
  %v2352 = vld [vmem:[%s7 + $0xc4] sm:$0xf]
  %v2353 = vld [vmem:[%s7 + $0xc8] sm:$0xf]
  %v2354 = vld [vmem:[%s7 + $0xcc] sm:$0xf]
  %v2355 = vld [vmem:[%s7 + $0xd0] sm:$0xf]
  %v2356 = vld [vmem:[%s7 + $0xd4] sm:$0xf]
  %v2357 = vld [vmem:[%s7 + $0xd8] sm:$0xf]
  %v2358 = vld [vmem:[%s7 + $0xdc] sm:$0xf]
  %v2359 = vld [vmem:[%s7 + $0xe0] sm:$0xf]
  %v2360 = vld [vmem:[%s7 + $0xe4] sm:$0xf]
  %v2361 = vld [vmem:[%s7 + $0xe8] sm:$0xf]
  %v2362 = vld [vmem:[%s7 + $0xec] sm:$0xf]
  %v2363 = vld [vmem:[%s7 + $0xf0] sm:$0xf]
  %v2364 = vld [vmem:[%s7 + $0xf4] sm:$0xf]
  %v2365 = vld [vmem:[%s7 + $0xf8] sm:$0xf]
  %v2366 = vld [vmem:[%s7 + $0xfc] sm:$0xf]
  %v2367 = vld [vmem:[%s8 + $0x1] sm:$0x1]
  %v2369 = vlaneseq
  %v2370 = vshrl.u32 %v2369, 7
  %v2371 = vsub.s32 0, %v2370
  %v2372 = vrot.slane %v2367, %v2371
  %v2406 = vunpack.c.l.b16 %v2335
  %v2407 = vunpack.c.l.b16 %v2336
  %v2408 = vunpack.c.l.b16 %v2337
  %v2409 = vunpack.c.l.b16 %v2338
  %v2410 = vunpack.c.l.b16 %v2339
  %v2411 = vunpack.c.l.b16 %v2340
  %v2412 = vunpack.c.l.b16 %v2341
  %v2413 = vunpack.c.l.b16 %v2342
  %v2414 = vunpack.c.l.b16 %v2343
  %v2415 = vunpack.c.l.b16 %v2344
  %v2416 = vunpack.c.l.b16 %v2345
  %v2417 = vunpack.c.l.b16 %v2346
  %v2418 = vunpack.c.l.b16 %v2347
  %v2419 = vunpack.c.l.b16 %v2348
  %v2420 = vunpack.c.l.b16 %v2349
  %v2421 = vunpack.c.l.b16 %v2350
  %v2422 = vunpack.c.l.b16 %v2351
  %v2423 = vunpack.c.l.b16 %v2352
  %v2424 = vunpack.c.l.b16 %v2353
  %v2425 = vunpack.c.l.b16 %v2354
  %v2426 = vunpack.c.l.b16 %v2355
  %v2427 = vunpack.c.l.b16 %v2356
  %v2428 = vunpack.c.l.b16 %v2357
  %v2429 = vunpack.c.l.b16 %v2358
  %v2430 = vunpack.c.l.b16 %v2359
  %v2431 = vunpack.c.l.b16 %v2360
  %v2432 = vunpack.c.l.b16 %v2361
  %v2433 = vunpack.c.l.b16 %v2362
  %v2434 = vunpack.c.l.b16 %v2363
  %v2435 = vunpack.c.l.b16 %v2364
  %v2436 = vunpack.c.l.b16 %v2365
  %v2437 = vunpack.c.l.b16 %v2366
  %v2438 = vpack.c.b16 %v2407, %v2406
  %v2439 = vpack.c.b16 %v2409, %v2408
  %v2440 = vpack.c.b16 %v2411, %v2410
  %v2441 = vpack.c.b16 %v2413, %v2412
  %v2442 = vpack.c.b16 %v2415, %v2414
  %v2443 = vpack.c.b16 %v2417, %v2416
  %v2444 = vpack.c.b16 %v2419, %v2418
  %v2445 = vpack.c.b16 %v2421, %v2420
  %v2446 = vpack.c.b16 %v2423, %v2422
  %v2447 = vpack.c.b16 %v2425, %v2424
  %v2448 = vpack.c.b16 %v2427, %v2426
  %v2449 = vpack.c.b16 %v2429, %v2428
  %v2450 = vpack.c.b16 %v2431, %v2430
  %v2451 = vpack.c.b16 %v2433, %v2432
  %v2452 = vpack.c.b16 %v2435, %v2434
  %v2453 = vpack.c.b16 %v2437, %v2436
  %2470 = vmatprep.subr.bf16.mxu0 0
  %2471 = vmatpush1.bf16.msra.mxu0 %v2438
  %2472 = vmatprep.subr.bf16.mxu0 0
  %2473 = vmatpush1.bf16.msra.mxu0 %v2439
  %2474 = vmatprep.subr.bf16.mxu0 0
  %2475 = vmatpush1.bf16.msra.mxu0 %v2440
  %2476 = vmatprep.subr.bf16.mxu0 0
  %2477 = vmatpush1.bf16.msra.mxu0 %v2441
  %2478 = vmatprep.subr.bf16.mxu0 0
  %2479 = vmatpush1.bf16.msra.mxu0 %v2442
  %2480 = vmatprep.subr.bf16.mxu0 0
  %2481 = vmatpush1.bf16.msra.mxu0 %v2443
  %2482 = vmatprep.subr.bf16.mxu0 0
  %2483 = vmatpush1.bf16.msra.mxu0 %v2444
  %2484 = vmatprep.subr.bf16.mxu0 0
  %2485 = vmatpush1.bf16.msra.mxu0 %v2445
  %2486 = vmatprep.subr.bf16.mxu0 0
  %2487 = vmatpush1.bf16.msra.mxu0 %v2446
  %2488 = vmatprep.subr.bf16.mxu0 0
  %2489 = vmatpush1.bf16.msra.mxu0 %v2447
  %2490 = vmatprep.subr.bf16.mxu0 0
  %2491 = vmatpush1.bf16.msra.mxu0 %v2448
  %2492 = vmatprep.subr.bf16.mxu0 0
  %2493 = vmatpush1.bf16.msra.mxu0 %v2449
  %2494 = vmatprep.subr.bf16.mxu0 0
  %2495 = vmatpush1.bf16.msra.mxu0 %v2450
  %2496 = vmatprep.subr.bf16.mxu0 0
  %2497 = vmatpush1.bf16.msra.mxu0 %v2451
  %2498 = vmatprep.subr.bf16.mxu0 0
  %2499 = vmatpush1.bf16.msra.mxu0 %v2452
  %2500 = vmatprep.subr.bf16.mxu0 0
  %2501 = vmatpush1.bf16.msra.mxu0 %v2453
  %2502 = vmatprep.mubr.bf16.mxu0 %v2155
  %2503 = vmatmul.mubr.bf16.gmra.mrb[0].mxu0 %v2154
  %v2504 = vpop.f32.mrb[0].mxu0
  %v2505 = vadd.f32 %v2372, %v2504
  %v2506 = vpop.f32.mrb[0].mxu0
  %v2507 = vpop.f32.mrb[0].mxu0
  %v2508 = vpop.f32.mrb[0].mxu0
  %2509 = vdwg.mxu0
  %v2510 = vmax.f32 %v2505, 0.0
  %v2511 = vpack.c.bf16 %v2510, %v2510
  %v2512 = vld [vmem:[%s7 + $0x100] sm:$0xf]
  %v2513 = vld [vmem:[%s7 + $0x104] sm:$0xf]
  %v2514 = vld [vmem:[%s7 + $0x108] sm:$0xf]
  %v2515 = vld [vmem:[%s7 + $0x10c] sm:$0xf]
  %v2516 = vld [vmem:[%s7 + $0x110] sm:$0xf]
  %v2517 = vld [vmem:[%s7 + $0x114] sm:$0xf]
  %v2518 = vld [vmem:[%s7 + $0x118] sm:$0xf]
  %v2519 = vld [vmem:[%s7 + $0x11c] sm:$0xf]
  %v2520 = vld [vmem:[%s7 + $0x120] sm:$0xf]
  %v2521 = vld [vmem:[%s7 + $0x124] sm:$0xf]
  %v2522 = vld [vmem:[%s7 + $0x128] sm:$0xf]
  %v2523 = vld [vmem:[%s7 + $0x12c] sm:$0xf]
  %v2524 = vld [vmem:[%s7 + $0x130] sm:$0xf]
  %v2525 = vld [vmem:[%s7 + $0x134] sm:$0xf]
  %v2526 = vld [vmem:[%s7 + $0x138] sm:$0xf]
  %v2527 = vld [vmem:[%s7 + $0x13c] sm:$0xf]
  %v2528 = vld [vmem:[%s7 + $0x140] sm:$0xf]
  %v2529 = vld [vmem:[%s7 + $0x144] sm:$0xf]
  %v2530 = vld [vmem:[%s7 + $0x148] sm:$0xf]
  %v2531 = vld [vmem:[%s7 + $0x14c] sm:$0xf]
  %v2532 = vld [vmem:[%s7 + $0x150] sm:$0xf]
  %v2533 = vld [vmem:[%s7 + $0x154] sm:$0xf]
  %v2534 = vld [vmem:[%s7 + $0x158] sm:$0xf]
  %v2535 = vld [vmem:[%s7 + $0x15c] sm:$0xf]
  %v2536 = vld [vmem:[%s7 + $0x160] sm:$0xf]
  %v2537 = vld [vmem:[%s7 + $0x164] sm:$0xf]
  %v2538 = vld [vmem:[%s7 + $0x168] sm:$0xf]
  %v2539 = vld [vmem:[%s7 + $0x16c] sm:$0xf]
  %v2540 = vld [vmem:[%s7 + $0x170] sm:$0xf]
  %v2541 = vld [vmem:[%s7 + $0x174] sm:$0xf]
  %v2542 = vld [vmem:[%s7 + $0x178] sm:$0xf]
  %v2543 = vld [vmem:[%s7 + $0x17c] sm:$0xf]
  %v2544 = vld [vmem:[%s8 + $0x2] sm:$0x1]
  %v2546 = vlaneseq
  %v2547 = vshrl.u32 %v2546, 7
  %v2548 = vsub.s32 0, %v2547
  %v2549 = vrot.slane %v2544, %v2548
  %v2583 = vunpack.c.l.b16 %v2512
  %v2584 = vunpack.c.l.b16 %v2513
  %v2585 = vunpack.c.l.b16 %v2514
  %v2586 = vunpack.c.l.b16 %v2515
  %v2587 = vunpack.c.l.b16 %v2516
  %v2588 = vunpack.c.l.b16 %v2517
  %v2589 = vunpack.c.l.b16 %v2518
  %v2590 = vunpack.c.l.b16 %v2519
  %v2591 = vunpack.c.l.b16 %v2520
  %v2592 = vunpack.c.l.b16 %v2521
  %v2593 = vunpack.c.l.b16 %v2522
  %v2594 = vunpack.c.l.b16 %v2523
  %v2595 = vunpack.c.l.b16 %v2524
  %v2596 = vunpack.c.l.b16 %v2525
  %v2597 = vunpack.c.l.b16 %v2526
  %v2598 = vunpack.c.l.b16 %v2527
  %v2599 = vunpack.c.l.b16 %v2528
  %v2600 = vunpack.c.l.b16 %v2529
  %v2601 = vunpack.c.l.b16 %v2530
  %v2602 = vunpack.c.l.b16 %v2531
  %v2603 = vunpack.c.l.b16 %v2532
  %v2604 = vunpack.c.l.b16 %v2533
  %v2605 = vunpack.c.l.b16 %v2534
  %v2606 = vunpack.c.l.b16 %v2535
  %v2607 = vunpack.c.l.b16 %v2536
  %v2608 = vunpack.c.l.b16 %v2537
  %v2609 = vunpack.c.l.b16 %v2538
  %v2610 = vunpack.c.l.b16 %v2539
  %v2611 = vunpack.c.l.b16 %v2540
  %v2612 = vunpack.c.l.b16 %v2541
  %v2613 = vunpack.c.l.b16 %v2542
  %v2614 = vunpack.c.l.b16 %v2543
  %v2615 = vpack.c.b16 %v2584, %v2583
  %v2616 = vpack.c.b16 %v2586, %v2585
  %v2617 = vpack.c.b16 %v2588, %v2587
  %v2618 = vpack.c.b16 %v2590, %v2589
  %v2619 = vpack.c.b16 %v2592, %v2591
  %v2620 = vpack.c.b16 %v2594, %v2593
  %v2621 = vpack.c.b16 %v2596, %v2595
  %v2622 = vpack.c.b16 %v2598, %v2597
  %v2623 = vpack.c.b16 %v2600, %v2599
  %v2624 = vpack.c.b16 %v2602, %v2601
  %v2625 = vpack.c.b16 %v2604, %v2603
  %v2626 = vpack.c.b16 %v2606, %v2605
  %v2627 = vpack.c.b16 %v2608, %v2607
  %v2628 = vpack.c.b16 %v2610, %v2609
  %v2629 = vpack.c.b16 %v2612, %v2611
  %v2630 = vpack.c.b16 %v2614, %v2613
  %2647 = vmatprep.subr.bf16.mxu0 0
  %2648 = vmatpush1.bf16.msra.mxu0 %v2615
  %2649 = vmatprep.subr.bf16.mxu0 0
  %2650 = vmatpush1.bf16.msra.mxu0 %v2616
  %2651 = vmatprep.subr.bf16.mxu0 0
  %2652 = vmatpush1.bf16.msra.mxu0 %v2617
  %2653 = vmatprep.subr.bf16.mxu0 0
  %2654 = vmatpush1.bf16.msra.mxu0 %v2618
  %2655 = vmatprep.subr.bf16.mxu0 0
  %2656 = vmatpush1.bf16.msra.mxu0 %v2619
  %2657 = vmatprep.subr.bf16.mxu0 0
  %2658 = vmatpush1.bf16.msra.mxu0 %v2620
  %2659 = vmatprep.subr.bf16.mxu0 0
  %2660 = vmatpush1.bf16.msra.mxu0 %v2621
  %2661 = vmatprep.subr.bf16.mxu0 0
  %2662 = vmatpush1.bf16.msra.mxu0 %v2622
  %2663 = vmatprep.subr.bf16.mxu0 0
  %2664 = vmatpush1.bf16.msra.mxu0 %v2623
  %2665 = vmatprep.subr.bf16.mxu0 0
  %2666 = vmatpush1.bf16.msra.mxu0 %v2624
  %2667 = vmatprep.subr.bf16.mxu0 0
  %2668 = vmatpush1.bf16.msra.mxu0 %v2625
  %2669 = vmatprep.subr.bf16.mxu0 0
  %2670 = vmatpush1.bf16.msra.mxu0 %v2626
  %2671 = vmatprep.subr.bf16.mxu0 0
  %2672 = vmatpush1.bf16.msra.mxu0 %v2627
  %2673 = vmatprep.subr.bf16.mxu0 0
  %2674 = vmatpush1.bf16.msra.mxu0 %v2628
  %2675 = vmatprep.subr.bf16.mxu0 0
  %2676 = vmatpush1.bf16.msra.mxu0 %v2629
  %2677 = vmatprep.subr.bf16.mxu0 0
  %2678 = vmatpush1.bf16.msra.mxu0 %v2630
  %2679 = vmatprep.mubr.bf16.mxu0 %v2157
  %2680 = vmatmul.mubr.bf16.gmra.mrb[0].mxu0 %v2156
  %v2681 = vpop.f32.mrb[0].mxu0
  %v2682 = vadd.f32 %v2549, %v2681
  %v2683 = vpop.f32.mrb[0].mxu0
  %v2684 = vpop.f32.mrb[0].mxu0
  %v2685 = vpop.f32.mrb[0].mxu0
  %2686 = vdwg.mxu0
  %v2687 = vmax.f32 %v2682, 0.0
  %v2688 = vpack.c.bf16 %v2687, %v2687
  %v2689 = vld [vmem:[%s9] sm:$0xf]
  %v2690 = vld [vmem:[%s9 + $0x4] sm:$0xf]
  %v2691 = vld [vmem:[%s9 + $0x8] sm:$0xf]
  %v2692 = vld [vmem:[%s9 + $0xc] sm:$0xf]
  %v2693 = vld [vmem:[%s9 + $0x10] sm:$0xf]
  %v2694 = vld [vmem:[%s9 + $0x14] sm:$0xf]
  %v2695 = vld [vmem:[%s9 + $0x18] sm:$0xf]
  %v2696 = vld [vmem:[%s9 + $0x1c] sm:$0xf]
  %v2697 = vld [vmem:[%s9 + $0x20] sm:$0xf]
  %v2698 = vld [vmem:[%s9 + $0x24] sm:$0xf]
  %v2699 = vld [vmem:[%s9 + $0x28] sm:$0xf]
  %v2700 = vld [vmem:[%s9 + $0x2c] sm:$0xf]
  %v2701 = vld [vmem:[%s9 + $0x30] sm:$0xf]
  %v2702 = vld [vmem:[%s9 + $0x34] sm:$0xf]
  %v2703 = vld [vmem:[%s9 + $0x38] sm:$0xf]
  %v2704 = vld [vmem:[%s9 + $0x3c] sm:$0xf]
  %v2705 = vld [vmem:[%s9 + $0x40] sm:$0xf]
  %v2706 = vld [vmem:[%s9 + $0x44] sm:$0xf]
  %v2707 = vld [vmem:[%s9 + $0x48] sm:$0xf]
  %v2708 = vld [vmem:[%s9 + $0x4c] sm:$0xf]
  %v2709 = vld [vmem:[%s9 + $0x50] sm:$0xf]
  %v2710 = vld [vmem:[%s9 + $0x54] sm:$0xf]
  %v2711 = vld [vmem:[%s9 + $0x58] sm:$0xf]
  %v2712 = vld [vmem:[%s9 + $0x5c] sm:$0xf]
  %v2713 = vld [vmem:[%s9 + $0x60] sm:$0xf]
  %v2714 = vld [vmem:[%s9 + $0x64] sm:$0xf]
  %v2715 = vld [vmem:[%s9 + $0x68] sm:$0xf]
  %v2716 = vld [vmem:[%s9 + $0x6c] sm:$0xf]
  %v2717 = vld [vmem:[%s9 + $0x70] sm:$0xf]
  %v2718 = vld [vmem:[%s9 + $0x74] sm:$0xf]
  %v2719 = vld [vmem:[%s9 + $0x78] sm:$0xf]
  %v2720 = vld [vmem:[%s9 + $0x7c] sm:$0xf]
  %v2721 = vld [vmem:[%s9 + $0x80] sm:$0xf]
  %v2722 = vld [vmem:[%s9 + $0x84] sm:$0xf]
  %v2723 = vld [vmem:[%s9 + $0x88] sm:$0xf]
  %v2724 = vld [vmem:[%s9 + $0x8c] sm:$0xf]
  %v2725 = vld [vmem:[%s9 + $0x90] sm:$0xf]
  %v2726 = vld [vmem:[%s9 + $0x94] sm:$0xf]
  %v2727 = vld [vmem:[%s9 + $0x98] sm:$0xf]
  %v2728 = vld [vmem:[%s9 + $0x9c] sm:$0xf]
  %v2729 = vld [vmem:[%s9 + $0xa0] sm:$0xf]
  %v2730 = vld [vmem:[%s9 + $0xa4] sm:$0xf]
  %v2731 = vld [vmem:[%s9 + $0xa8] sm:$0xf]
  %v2732 = vld [vmem:[%s9 + $0xac] sm:$0xf]
  %v2733 = vld [vmem:[%s9 + $0xb0] sm:$0xf]
  %v2734 = vld [vmem:[%s9 + $0xb4] sm:$0xf]
  %v2735 = vld [vmem:[%s9 + $0xb8] sm:$0xf]
  %v2736 = vld [vmem:[%s9 + $0xbc] sm:$0xf]
  %v2737 = vld [vmem:[%s10] sm:$0x1]
  %v2739 = vlaneseq
  %v2740 = vshrl.u32 %v2739, 7
  %v2741 = vsub.s32 0, %v2740
  %v2742 = vrot.slane %v2737, %v2741
  %v2792 = vunpack.c.l.b16 %v2689
  %v2793 = vunpack.c.l.b16 %v2690
  %v2794 = vunpack.c.l.b16 %v2691
  %v2795 = vunpack.c.l.b16 %v2692
  %v2796 = vunpack.c.l.b16 %v2693
  %v2797 = vunpack.c.l.b16 %v2694
  %v2798 = vunpack.c.l.b16 %v2695
  %v2799 = vunpack.c.l.b16 %v2696
  %v2800 = vunpack.c.l.b16 %v2697
  %v2801 = vunpack.c.l.b16 %v2698
  %v2802 = vunpack.c.l.b16 %v2699
  %v2803 = vunpack.c.l.b16 %v2700
  %v2804 = vunpack.c.l.b16 %v2701
  %v2805 = vunpack.c.l.b16 %v2702
  %v2806 = vunpack.c.l.b16 %v2703
  %v2807 = vunpack.c.l.b16 %v2704
  %v2808 = vunpack.c.l.b16 %v2705
  %v2809 = vunpack.c.l.b16 %v2706
  %v2810 = vunpack.c.l.b16 %v2707
  %v2811 = vunpack.c.l.b16 %v2708
  %v2812 = vunpack.c.l.b16 %v2709
  %v2813 = vunpack.c.l.b16 %v2710
  %v2814 = vunpack.c.l.b16 %v2711
  %v2815 = vunpack.c.l.b16 %v2712
  %v2816 = vunpack.c.l.b16 %v2713
  %v2817 = vunpack.c.l.b16 %v2714
  %v2818 = vunpack.c.l.b16 %v2715
  %v2819 = vunpack.c.l.b16 %v2716
  %v2820 = vunpack.c.l.b16 %v2717
  %v2821 = vunpack.c.l.b16 %v2718
  %v2822 = vunpack.c.l.b16 %v2719
  %v2823 = vunpack.c.l.b16 %v2720
  %v2824 = vunpack.c.l.b16 %v2721
  %v2825 = vunpack.c.l.b16 %v2722
  %v2826 = vunpack.c.l.b16 %v2723
  %v2827 = vunpack.c.l.b16 %v2724
  %v2828 = vunpack.c.l.b16 %v2725
  %v2829 = vunpack.c.l.b16 %v2726
  %v2830 = vunpack.c.l.b16 %v2727
  %v2831 = vunpack.c.l.b16 %v2728
  %v2832 = vunpack.c.l.b16 %v2729
  %v2833 = vunpack.c.l.b16 %v2730
  %v2834 = vunpack.c.l.b16 %v2731
  %v2835 = vunpack.c.l.b16 %v2732
  %v2836 = vunpack.c.l.b16 %v2733
  %v2837 = vunpack.c.l.b16 %v2734
  %v2838 = vunpack.c.l.b16 %v2735
  %v2839 = vunpack.c.l.b16 %v2736
  %v2840 = vpack.c.b16 %v2793, %v2792
  %v2841 = vpack.c.b16 %v2795, %v2794
  %v2842 = vpack.c.b16 %v2797, %v2796
  %v2843 = vpack.c.b16 %v2799, %v2798
  %v2844 = vpack.c.b16 %v2801, %v2800
  %v2845 = vpack.c.b16 %v2803, %v2802
  %v2846 = vpack.c.b16 %v2805, %v2804
  %v2847 = vpack.c.b16 %v2807, %v2806
  %v2848 = vpack.c.b16 %v2809, %v2808
  %v2849 = vpack.c.b16 %v2811, %v2810
  %v2850 = vpack.c.b16 %v2813, %v2812
  %v2851 = vpack.c.b16 %v2815, %v2814
  %v2852 = vpack.c.b16 %v2817, %v2816
  %v2853 = vpack.c.b16 %v2819, %v2818
  %v2854 = vpack.c.b16 %v2821, %v2820
  %v2855 = vpack.c.b16 %v2823, %v2822
  %v2856 = vpack.c.b16 %v2825, %v2824
  %v2857 = vpack.c.b16 %v2827, %v2826
  %v2858 = vpack.c.b16 %v2829, %v2828
  %v2859 = vpack.c.b16 %v2831, %v2830
  %v2860 = vpack.c.b16 %v2833, %v2832
  %v2861 = vpack.c.b16 %v2835, %v2834
  %v2862 = vpack.c.b16 %v2837, %v2836
  %v2863 = vpack.c.b16 %v2839, %v2838
  %2888 = vmatprep.subr.bf16.mxu0 0
  %2889 = vmatpush1.bf16.msra.mxu0 %v2840
  %2890 = vmatprep.subr.bf16.mxu0 0
  %2891 = vmatpush1.bf16.msra.mxu0 %v2841
  %2892 = vmatprep.subr.bf16.mxu0 0
  %2893 = vmatpush1.bf16.msra.mxu0 %v2842
  %2894 = vmatprep.subr.bf16.mxu0 0
  %2895 = vmatpush1.bf16.msra.mxu0 %v2843
  %2896 = vmatprep.subr.bf16.mxu0 0
  %2897 = vmatpush1.bf16.msra.mxu0 %v2844
  %2898 = vmatprep.subr.bf16.mxu0 0
  %2899 = vmatpush1.bf16.msra.mxu0 %v2845
  %2900 = vmatprep.subr.bf16.mxu0 0
  %2901 = vmatpush1.bf16.msra.mxu0 %v2846
  %2902 = vmatprep.subr.bf16.mxu0 0
  %2903 = vmatpush1.bf16.msra.mxu0 %v2847
  %2904 = vmatprep.subr.bf16.mxu0 0
  %2905 = vmatpush1.bf16.msra.mxu0 %v2848
  %2906 = vmatprep.subr.bf16.mxu0 0
  %2907 = vmatpush1.bf16.msra.mxu0 %v2849
  %2908 = vmatprep.subr.bf16.mxu0 0
  %2909 = vmatpush1.bf16.msra.mxu0 %v2850
  %2910 = vmatprep.subr.bf16.mxu0 0
  %2911 = vmatpush1.bf16.msra.mxu0 %v2851
  %2912 = vmatprep.subr.bf16.mxu0 0
  %2913 = vmatpush1.bf16.msra.mxu0 %v2852
  %2914 = vmatprep.subr.bf16.mxu0 0
  %2915 = vmatpush1.bf16.msra.mxu0 %v2853
  %2916 = vmatprep.subr.bf16.mxu0 0
  %2917 = vmatpush1.bf16.msra.mxu0 %v2854
  %2918 = vmatprep.subr.bf16.mxu0 0
  %2919 = vmatpush1.bf16.msra.mxu0 %v2855
  %2920 = vmatprep.mubr.bf16.mxu0 %v2511
  %2921 = vmatmul.mubr.bf16.gmra.mrb[0].mxu0 %v2334
  %v2922 = vpop.f32.mrb[0].mxu0
  %v2923 = vadd.f32 %v2742, %v2922
  %v2924 = vpop.f32.mrb[0].mxu0
  %v2925 = vpop.f32.mrb[0].mxu0
  %v2926 = vpop.f32.mrb[0].mxu0
  %2927 = vdwg.mxu0
  %2928 = vmatprep.subr.bf16.mxu0 0
  %2929 = vmatpush1.bf16.msra.mxu0 %v2856
  %2930 = vmatprep.subr.bf16.mxu0 0
  %2931 = vmatpush1.bf16.msra.mxu0 %v2857
  %2932 = vmatprep.subr.bf16.mxu0 0
  %2933 = vmatpush1.bf16.msra.mxu0 %v2858
  %2934 = vmatprep.subr.bf16.mxu0 0
  %2935 = vmatpush1.bf16.msra.mxu0 %v2859
  %2936 = vmatprep.subr.bf16.mxu0 0
  %2937 = vmatpush1.bf16.msra.mxu0 %v2860
  %2938 = vmatprep.subr.bf16.mxu0 0
  %2939 = vmatpush1.bf16.msra.mxu0 %v2861
  %2940 = vmatprep.subr.bf16.mxu0 0
  %2941 = vmatpush1.bf16.msra.mxu0 %v2862
  %2942 = vmatprep.subr.bf16.mxu0 0
  %2943 = vmatpush1.bf16.msra.mxu0 %v2863
  %2944 = vmatprep.subr.bf16.mxu0 0
  %2945 = vmatpush1.bf16.msra.mxu0 0
  %2946 = vmatprep.subr.bf16.mxu0 0
  %2947 = vmatpush1.bf16.msra.mxu0 0
  %2948 = vmatprep.subr.bf16.mxu0 0
  %2949 = vmatpush1.bf16.msra.mxu0 0
  %2950 = vmatprep.subr.bf16.mxu0 0
  %2951 = vmatpush1.bf16.msra.mxu0 0
  %2952 = vmatprep.subr.bf16.mxu0 0
  %2953 = vmatpush1.bf16.msra.mxu0 0
  %2954 = vmatprep.subr.bf16.mxu0 0
  %2955 = vmatpush1.bf16.msra.mxu0 0
  %2956 = vmatprep.subr.bf16.mxu0 0
  %2957 = vmatpush1.bf16.msra.mxu0 0
  %2958 = vmatprep.subr.bf16.mxu0 0
  %2959 = vmatpush1.bf16.msra.mxu0 0
  %2960 = vmatprep.mubr.bf16.mxu0 0
  %2961 = vmatmul.mubr.bf16.gmra.mrb[0].mxu0 %v2688
  %v2962 = vpop.f32.mrb[0].mxu0
  %v2963 = vadd.f32 %v2923, %v2962
  %v2964 = vpop.f32.mrb[0].mxu0
  %v2965 = vpop.f32.mrb[0].mxu0
  %v2966 = vpop.f32.mrb[0].mxu0
  %2967 = vdwg.mxu0
  %2968 = vst [vmem:[%s11] sm:$0x3] %v2963
  // Predicated region
  $region46: #{acc_forward.7} parent=0 // pred_check
    _
  $region47: #{acc_forward.7} parent=0 // pred_check_branch
    %2970 = sbr.rel (0) target = $region49
  $region48: #{acc_forward.7} parent=0 // pred_region
    _
  $region49: #{acc_forward.7} parent=0 // pred_fallthru
    _
  // Predicated region
  $region50: #{acc_forward.7} parent=0 // pred_check
    _
  $region51: #{acc_forward.7} parent=0 // pred_check_branch
    %2972 = sbr.rel (0) target = $region53
  $region52: #{acc_forward.7} parent=0 // pred_region
    _
  $region53: #{acc_forward.7} parent=0 // pred_fallthru
    _

</llo_original>
